<compile_context>
chip_gen: v6e
topology: v6e:2x2x1
jax: 0.10.0
libtpu: 0.0.40
codegen_flags: <defaults>
</compile_context>

<pallas_src>
import jax
import jax.numpy as jnp
from jax import lax
from jax.experimental import pallas as pl
from jax.experimental.pallas import tpu as pltpu


def make_fused_gclstm_kernel(num_layers, T, N, H):
    """Build a kernel fusing all `num_layers` GCLSTM layers (empty-edge_index path).

    Kernel ref order:
      inputs : zx0 (T,N,4H), Wh0 (H,4H), then per layer l>=1: (Wx_l, Wh_l, b_l)
      outputs: h_seq (L*T, N, H), c_last (L, N, H)
      scratch: zx_sc (T, N, 4H)   -- hoisted input projection for layers l>=1
    """
    n_extra = 3 * (num_layers - 1)

    def kernel(*refs):
        zx0_ref = refs[0]
        wh0_ref = refs[1]
        extra = refs[2:2 + n_extra]
        h_seq_ref = refs[2 + n_extra]
        c_ref = refs[3 + n_extra]
        zx_sc = refs[4 + n_extra]

        def run_layer(layer_idx, zx_ref, wh):
            """Sequential LSTM recurrence; gate pre-activation (x part) from zx_ref."""
            base = layer_idx * T

            def step(t, carry):
                h, c = carry
                # Only the h-dependent matmul remains inside the recurrence.
                z = zx_ref[t] + jnp.dot(h, wh, preferred_element_type=jnp.float32)
                # One full-width (4H = 128 lane) sigmoid covers i/f/o; tanh on g only.
                sg = jax.nn.sigmoid(z)
                i = sg[:, 0 * H:1 * H]
                f = sg[:, 1 * H:2 * H]
                o = sg[:, 3 * H:4 * H]
                g = jnp.tanh(z[:, 2 * H:3 * H])
                c_new = f * c + i * g
                h_new = o * jnp.tanh(c_new)
                # Resident output: stays in VMEM, written back to HBM once at exit.
                h_seq_ref[base + t] = h_new
                return h_new, c_new

            zeros = jnp.zeros((N, H), jnp.float32)
            _, c_last = lax.fori_loop(0, T, step, (zeros, zeros), unroll=True)
            c_ref[layer_idx] = c_last

        # Layer 0: its x @ Wx + b projection was precomputed in the wrapper (zx0).
        run_layer(0, zx0_ref, wh0_ref[...])

        # Layers 1..L-1: hoist the input projection out of the recurrence, computed
        # directly from the previous layer's h_seq already resident in VMEM.
        for l in range(1, num_layers):
            wx_ref, wh_ref, b_ref = extra[3 * (l - 1):3 * l]
            h_prev = h_seq_ref[(l - 1) * T:l * T, :, :]        # (T, N, H) VMEM read
            zx_sc[...] = (jnp.dot(h_prev.reshape(T * N, H), wx_ref[...],
                                  preferred_element_type=jnp.float32)
                          + b_ref[...]).reshape(T, N, 4 * H)
            run_layer(l, zx_sc, wh_ref[...])

    return kernel


def gclstm_forward(x, params, hidden_dim):
    """x: (B, G, D, T) -> (layer_output_list, last_state_list) like GCLSTM.forward."""
    B, G, D, T = x.shape
    N = B * G
    H = hidden_dim
    L = len(params)

    # Time-major flatten; layer-0 input projection as a single wrapper-level matmul
    # (keeps the D=4-wide, 32x lane-padded raw x out of the kernel entirely).
    x_flat = jnp.transpose(x, (3, 0, 1, 2)).reshape(T * N, D)
    wx0, wh0, b0 = params[0]
    zx0 = (x_flat @ wx0 + b0).reshape(T, N, 4 * H)

    extra = []
    for (wx, wh, b) in params[1:]:
        extra.extend([wx, wh, b])

    n_in = 2 + 3 * (L - 1)
    kernel = make_fused_gclstm_kernel(L, T, N, H)
    h_seq_all, c_all = pl.pallas_call(
        kernel,
        out_shape=(jax.ShapeDtypeStruct((L * T, N, H), jnp.float32),
                   jax.ShapeDtypeStruct((L, N, H), jnp.float32)),
        # No grid: everything (weights, projections, outputs) lives whole in VMEM.
        in_specs=[pl.BlockSpec(memory_space=pltpu.MemorySpace.VMEM)] * n_in,
        out_specs=(pl.BlockSpec(memory_space=pltpu.MemorySpace.VMEM),
                   pl.BlockSpec(memory_space=pltpu.MemorySpace.VMEM)),
        scratch_shapes=[pltpu.VMEM((T, N, 4 * H), jnp.float32)],
    )(zx0, wh0, *extra)

    # Single (B, G, H, T) permute per layer only for the returned values.
    h_seq_all = h_seq_all.reshape(L, T, B, G, H)
    layer_output_list = []
    last_state_list = []
    for l in range(L):
        layer_out = jnp.transpose(h_seq_all[l], (1, 2, 3, 0))        # (B, G, H, T)
        layer_output_list.append(layer_out)
        last_state_list.append((h_seq_all[l, T - 1].reshape(1, B, G, H), c_all[l]))
    return layer_output_list, last_state_list


def init_params(key, input_dim, hidden_dim, num_layers):
    """Deterministic params. Per layer: fused (Wx_root, Wh_root, combined bias).

    Mirrors torch_geometric 'uniform' init: U(-1/sqrt(fan_in), 1/sqrt(fan_in)).
    Combined bias = bx + bh (each Spline adds its own bias in the PyTorch code)."""
    params = []
    for layer in range(num_layers):
        d = input_dim if layer == 0 else hidden_dim
        key, k1, k2, k3, k4 = jax.random.split(key, 5)
        sx = 1.0 / float(d) ** 0.5
        sh = 1.0 / float(hidden_dim) ** 0.5
        wx = jax.random.uniform(k1, (d, 4 * hidden_dim), jnp.float32, -sx, sx)
        wh = jax.random.uniform(k2, (hidden_dim, 4 * hidden_dim), jnp.float32, -sh, sh)
        bx = jax.random.uniform(k3, (1, 4 * hidden_dim), jnp.float32, -sx, sx)
        bh = jax.random.uniform(k4, (1, 4 * hidden_dim), jnp.float32, -sh, sh)
        params.append((wx, wh, bx + bh))
    return params


def gclstm_forward_ref(x, params, hidden_dim):
    """Pure-JAX reference mirroring the PyTorch module's loop structure."""
    B, G, D, T = x.shape
    N = B * G
    H = hidden_dim
    layer_output_list, last_state_list = [], []
    cur = x
    for (wx, wh, b) in params:
        h = jnp.zeros((N, H), jnp.float32)
        c = jnp.zeros((N, H), jnp.float32)
        outs = []
        for t in range(T):
            xt = cur[:, :, :, t].reshape(N, -1)
            z = xt @ wx + h @ wh + b
            i = jax.nn.sigmoid(z[:, 0 * H:1 * H])
            f = jax.nn.sigmoid(z[:, 1 * H:2 * H])
            g = jnp.tanh(z[:, 2 * H:3 * H])
            o = jax.nn.sigmoid(z[:, 3 * H:4 * H])
            c = f * c + i * g
            h = o * jnp.tanh(c)
            outs.append(h.reshape(1, B, G, H))
        layer_out = jnp.transpose(jnp.concatenate(outs, axis=0), (1, 2, 3, 0))
        cur = layer_out
        layer_output_list.append(layer_out)
        last_state_list.append((h.reshape(1, B, G, H), c))
    return layer_output_list, last_state_list


if __name__ == "__main__":
    B, G, D, T, H = 2, 16, 4, 8, 32
    NUM_LAYERS = 2

    key = jax.random.PRNGKey(0)
    kx, kp = jax.random.split(key)
    x = jax.random.normal(kx, (B, G, D, T), jnp.float32)   # (batch, graph, feat, seq)
    params = init_params(kp, D, H, NUM_LAYERS)

    fwd = jax.jit(lambda xx, pp: gclstm_forward(xx, pp, H))
    layer_outputs, last_states = fwd(x, params)
    jax.block_until_ready(layer_outputs)

    # Sanity check against pure-JAX reference.
    ref_outputs, ref_states = gclstm_forward_ref(x, params, H)
    for out, ref in zip(layer_outputs, ref_outputs):
        assert out.shape == (B, G, H, T)
        assert jnp.allclose(out, ref, atol=1e-4, rtol=1e-4), \
            float(jnp.max(jnp.abs(out - ref)))
    for (h_p, c_p), (h_r, c_r) in zip(last_states, ref_states):
        assert h_p.shape == (1, B, G, H) and c_p.shape == (B * G, H)
        assert jnp.allclose(h_p, h_r, atol=1e-4, rtol=1e-4)
        assert jnp.allclose(c_p, c_r, atol=1e-4, rtol=1e-4)

    print("KERNEL_OK")
</pallas_src>

<mosaic_0001>
module attributes {stable_mosaic.version = 11 : i64} {
  func.func @kernel(%arg0: memref<8x32x128xf32, #tpu.memory_space<vmem>>, %arg1: memref<32x128xf32, #tpu.memory_space<vmem>>, %arg2: memref<32x128xf32, #tpu.memory_space<vmem>>, %arg3: memref<32x128xf32, #tpu.memory_space<vmem>>, %arg4: memref<1x128xf32, #tpu.memory_space<vmem>>, %arg5: memref<16x32x32xf32, #tpu.memory_space<vmem>>, %arg6: memref<2x32x32xf32, #tpu.memory_space<vmem>>, %arg7: memref<8x32x128xf32, #tpu.memory_space<vmem>>) attributes {dimension_semantics = [], scalar_prefetch = 0 : i64, scratch_operands = 1 : i64, tpu.core_type = #tpu.core_type<tc>} {
    %c0 = arith.constant 0 : index
    %c0_0 = arith.constant 0 : index
    %0 = vector.load %arg1[%c0, %c0_0] : memref<32x128xf32, #tpu.memory_space<vmem>>, vector<32x128xf32>
    %cst = arith.constant 0.000000e+00 : f32
    %1 = vector.broadcast %cst : f32 to vector<32x32xf32>
    %c0_i32 = arith.constant 0 : i32
    %2 = arith.index_cast %c0_i32 : i32 to index
    %c0_1 = arith.constant 0 : index
    %c0_2 = arith.constant 0 : index
    %3 = vector.load %arg0[%2, %c0_1, %c0_2] : memref<8x32x128xf32, #tpu.memory_space<vmem>>, vector<1x32x128xf32>
    %4 = vector.shape_cast %3 : vector<1x32x128xf32> to vector<32x128xf32>
    %cst_3 = arith.constant dense<0.000000e+00> : vector<32x128xf32>
    %5 = tpu.matmul %1, %0, %cst_3 {dimension_numbers = #tpu.dot_dimension_numbers<[1], [0], [0], [1], [0, 0, 1, 1], [], []>} : vector<32x32xf32>, vector<32x128xf32>, vector<32x128xf32> -> vector<32x128xf32>
    %6 = arith.addf %4, %5 : vector<32x128xf32>
    %7 = arith.negf %6 : vector<32x128xf32>
    %8 = math.exp %7 : vector<32x128xf32>
    %cst_4 = arith.constant 1.000000e+00 : f32
    %9 = vector.broadcast %cst_4 : f32 to vector<32x128xf32>
    %10 = arith.addf %9, %8 : vector<32x128xf32>
    %11 = arith.divf %9, %10 : vector<32x128xf32>
    %12 = vector.extract_strided_slice %11 {offsets = [0, 0], sizes = [32, 32], strides = [1, 1]} : vector<32x128xf32> to vector<32x32xf32>
    %13 = vector.extract_strided_slice %11 {offsets = [0, 32], sizes = [32, 32], strides = [1, 1]} : vector<32x128xf32> to vector<32x32xf32>
    %14 = vector.extract_strided_slice %11 {offsets = [0, 96], sizes = [32, 32], strides = [1, 1]} : vector<32x128xf32> to vector<32x32xf32>
    %15 = vector.extract_strided_slice %6 {offsets = [0, 64], sizes = [32, 32], strides = [1, 1]} : vector<32x128xf32> to vector<32x32xf32>
    %16 = math.tanh %15 : vector<32x32xf32>
    %17 = arith.mulf %13, %1 : vector<32x32xf32>
    %18 = arith.mulf %12, %16 : vector<32x32xf32>
    %19 = arith.addf %17, %18 : vector<32x32xf32>
    %20 = math.tanh %19 : vector<32x32xf32>
    %21 = arith.mulf %14, %20 : vector<32x32xf32>
    %c0_i32_5 = arith.constant 0 : i32
    %22 = arith.addi %c0_i32_5, %c0_i32 : i32
    %23 = arith.index_cast %22 : i32 to index
    %c0_6 = arith.constant 0 : index
    %c0_7 = arith.constant 0 : index
    %24 = vector.load %arg5[%23, %c0_6, %c0_7] : memref<16x32x32xf32, #tpu.memory_space<vmem>>, vector<1x32x32xf32>
    %25 = vector.shape_cast %24 : vector<1x32x32xf32> to vector<32x32xf32>
    %26 = vector.shape_cast %21 : vector<32x32xf32> to vector<1x32x32xf32>
    tpu.vector_store %arg5[%23, %c0_6, %c0_7], %26 {strides = array<i32>} : memref<16x32x32xf32, #tpu.memory_space<vmem>>, vector<1x32x32xf32>,
    %c1_i32 = arith.constant 1 : i32
    %27 = arith.index_cast %c1_i32 : i32 to index
    %c0_8 = arith.constant 0 : index
    %c0_9 = arith.constant 0 : index
    %28 = vector.load %arg0[%27, %c0_8, %c0_9] : memref<8x32x128xf32, #tpu.memory_space<vmem>>, vector<1x32x128xf32>
    %29 = vector.shape_cast %28 : vector<1x32x128xf32> to vector<32x128xf32>
    %cst_10 = arith.constant dense<0.000000e+00> : vector<32x128xf32>
    %30 = tpu.matmul %21, %0, %cst_10 {dimension_numbers = #tpu.dot_dimension_numbers<[1], [0], [0], [1], [0, 0, 1, 1], [], []>} : vector<32x32xf32>, vector<32x128xf32>, vector<32x128xf32> -> vector<32x128xf32>
    %31 = arith.addf %29, %30 : vector<32x128xf32>
    %32 = arith.negf %31 : vector<32x128xf32>
    %33 = math.exp %32 : vector<32x128xf32>
    %cst_11 = arith.constant 1.000000e+00 : f32
    %34 = vector.broadcast %cst_11 : f32 to vector<32x128xf32>
    %35 = arith.addf %34, %33 : vector<32x128xf32>
    %36 = arith.divf %34, %35 : vector<32x128xf32>
    %37 = vector.extract_strided_slice %36 {offsets = [0, 0], sizes = [32, 32], strides = [1, 1]} : vector<32x128xf32> to vector<32x32xf32>
    %38 = vector.extract_strided_slice %36 {offsets = [0, 32], sizes = [32, 32], strides = [1, 1]} : vector<32x128xf32> to vector<32x32xf32>
    %39 = vector.extract_strided_slice %36 {offsets = [0, 96], sizes = [32, 32], strides = [1, 1]} : vector<32x128xf32> to vector<32x32xf32>
    %40 = vector.extract_strided_slice %31 {offsets = [0, 64], sizes = [32, 32], strides = [1, 1]} : vector<32x128xf32> to vector<32x32xf32>
    %41 = math.tanh %40 : vector<32x32xf32>
    %42 = arith.mulf %38, %19 : vector<32x32xf32>
    %43 = arith.mulf %37, %41 : vector<32x32xf32>
    %44 = arith.addf %42, %43 : vector<32x32xf32>
    %45 = math.tanh %44 : vector<32x32xf32>
    %46 = arith.mulf %39, %45 : vector<32x32xf32>
    %c0_i32_12 = arith.constant 0 : i32
    %47 = arith.addi %c0_i32_12, %c1_i32 : i32
    %48 = arith.index_cast %47 : i32 to index
    %c0_13 = arith.constant 0 : index
    %c0_14 = arith.constant 0 : index
    %49 = vector.load %arg5[%48, %c0_13, %c0_14] : memref<16x32x32xf32, #tpu.memory_space<vmem>>, vector<1x32x32xf32>
    %50 = vector.shape_cast %49 : vector<1x32x32xf32> to vector<32x32xf32>
    %51 = vector.shape_cast %46 : vector<32x32xf32> to vector<1x32x32xf32>
    tpu.vector_store %arg5[%48, %c0_13, %c0_14], %51 {strides = array<i32>} : memref<16x32x32xf32, #tpu.memory_space<vmem>>, vector<1x32x32xf32>,
    %c2_i32 = arith.constant 2 : i32
    %52 = arith.index_cast %c2_i32 : i32 to index
    %c0_15 = arith.constant 0 : index
    %c0_16 = arith.constant 0 : index
    %53 = vector.load %arg0[%52, %c0_15, %c0_16] : memref<8x32x128xf32, #tpu.memory_space<vmem>>, vector<1x32x128xf32>
    %54 = vector.shape_cast %53 : vector<1x32x128xf32> to vector<32x128xf32>
    %cst_17 = arith.constant dense<0.000000e+00> : vector<32x128xf32>
    %55 = tpu.matmul %46, %0, %cst_17 {dimension_numbers = #tpu.dot_dimension_numbers<[1], [0], [0], [1], [0, 0, 1, 1], [], []>} : vector<32x32xf32>, vector<32x128xf32>, vector<32x128xf32> -> vector<32x128xf32>
    %56 = arith.addf %54, %55 : vector<32x128xf32>
    %57 = arith.negf %56 : vector<32x128xf32>
    %58 = math.exp %57 : vector<32x128xf32>
    %cst_18 = arith.constant 1.000000e+00 : f32
    %59 = vector.broadcast %cst_18 : f32 to vector<32x128xf32>
    %60 = arith.addf %59, %58 : vector<32x128xf32>
    %61 = arith.divf %59, %60 : vector<32x128xf32>
    %62 = vector.extract_strided_slice %61 {offsets = [0, 0], sizes = [32, 32], strides = [1, 1]} : vector<32x128xf32> to vector<32x32xf32>
    %63 = vector.extract_strided_slice %61 {offsets = [0, 32], sizes = [32, 32], strides = [1, 1]} : vector<32x128xf32> to vector<32x32xf32>
    %64 = vector.extract_strided_slice %61 {offsets = [0, 96], sizes = [32, 32], strides = [1, 1]} : vector<32x128xf32> to vector<32x32xf32>
    %65 = vector.extract_strided_slice %56 {offsets = [0, 64], sizes = [32, 32], strides = [1, 1]} : vector<32x128xf32> to vector<32x32xf32>
    %66 = math.tanh %65 : vector<32x32xf32>
    %67 = arith.mulf %63, %44 : vector<32x32xf32>
    %68 = arith.mulf %62, %66 : vector<32x32xf32>
    %69 = arith.addf %67, %68 : vector<32x32xf32>
    %70 = math.tanh %69 : vector<32x32xf32>
    %71 = arith.mulf %64, %70 : vector<32x32xf32>
    %c0_i32_19 = arith.constant 0 : i32
    %72 = arith.addi %c0_i32_19, %c2_i32 : i32
    %73 = arith.index_cast %72 : i32 to index
    %c0_20 = arith.constant 0 : index
    %c0_21 = arith.constant 0 : index
    %74 = vector.load %arg5[%73, %c0_20, %c0_21] : memref<16x32x32xf32, #tpu.memory_space<vmem>>, vector<1x32x32xf32>
    %75 = vector.shape_cast %74 : vector<1x32x32xf32> to vector<32x32xf32>
    %76 = vector.shape_cast %71 : vector<32x32xf32> to vector<1x32x32xf32>
    tpu.vector_store %arg5[%73, %c0_20, %c0_21], %76 {strides = array<i32>} : memref<16x32x32xf32, #tpu.memory_space<vmem>>, vector<1x32x32xf32>,
    %c3_i32 = arith.constant 3 : i32
    %77 = arith.index_cast %c3_i32 : i32 to index
    %c0_22 = arith.constant 0 : index
    %c0_23 = arith.constant 0 : index
    %78 = vector.load %arg0[%77, %c0_22, %c0_23] : memref<8x32x128xf32, #tpu.memory_space<vmem>>, vector<1x32x128xf32>
    %79 = vector.shape_cast %78 : vector<1x32x128xf32> to vector<32x128xf32>
    %cst_24 = arith.constant dense<0.000000e+00> : vector<32x128xf32>
    %80 = tpu.matmul %71, %0, %cst_24 {dimension_numbers = #tpu.dot_dimension_numbers<[1], [0], [0], [1], [0, 0, 1, 1], [], []>} : vector<32x32xf32>, vector<32x128xf32>, vector<32x128xf32> -> vector<32x128xf32>
    %81 = arith.addf %79, %80 : vector<32x128xf32>
    %82 = arith.negf %81 : vector<32x128xf32>
    %83 = math.exp %82 : vector<32x128xf32>
    %cst_25 = arith.constant 1.000000e+00 : f32
    %84 = vector.broadcast %cst_25 : f32 to vector<32x128xf32>
    %85 = arith.addf %84, %83 : vector<32x128xf32>
    %86 = arith.divf %84, %85 : vector<32x128xf32>
    %87 = vector.extract_strided_slice %86 {offsets = [0, 0], sizes = [32, 32], strides = [1, 1]} : vector<32x128xf32> to vector<32x32xf32>
    %88 = vector.extract_strided_slice %86 {offsets = [0, 32], sizes = [32, 32], strides = [1, 1]} : vector<32x128xf32> to vector<32x32xf32>
    %89 = vector.extract_strided_slice %86 {offsets = [0, 96], sizes = [32, 32], strides = [1, 1]} : vector<32x128xf32> to vector<32x32xf32>
    %90 = vector.extract_strided_slice %81 {offsets = [0, 64], sizes = [32, 32], strides = [1, 1]} : vector<32x128xf32> to vector<32x32xf32>
    %91 = math.tanh %90 : vector<32x32xf32>
    %92 = arith.mulf %88, %69 : vector<32x32xf32>
    %93 = arith.mulf %87, %91 : vector<32x32xf32>
    %94 = arith.addf %92, %93 : vector<32x32xf32>
    %95 = math.tanh %94 : vector<32x32xf32>
    %96 = arith.mulf %89, %95 : vector<32x32xf32>
    %c0_i32_26 = arith.constant 0 : i32
    %97 = arith.addi %c0_i32_26, %c3_i32 : i32
    %98 = arith.index_cast %97 : i32 to index
    %c0_27 = arith.constant 0 : index
    %c0_28 = arith.constant 0 : index
    %99 = vector.load %arg5[%98, %c0_27, %c0_28] : memref<16x32x32xf32, #tpu.memory_space<vmem>>, vector<1x32x32xf32>
    %100 = vector.shape_cast %99 : vector<1x32x32xf32> to vector<32x32xf32>
    %101 = vector.shape_cast %96 : vector<32x32xf32> to vector<1x32x32xf32>
    tpu.vector_store %arg5[%98, %c0_27, %c0_28], %101 {strides = array<i32>} : memref<16x32x32xf32, #tpu.memory_space<vmem>>, vector<1x32x32xf32>,
    %c4_i32 = arith.constant 4 : i32
    %102 = arith.index_cast %c4_i32 : i32 to index
    %c0_29 = arith.constant 0 : index
    %c0_30 = arith.constant 0 : index
    %103 = vector.load %arg0[%102, %c0_29, %c0_30] : memref<8x32x128xf32, #tpu.memory_space<vmem>>, vector<1x32x128xf32>
    %104 = vector.shape_cast %103 : vector<1x32x128xf32> to vector<32x128xf32>
    %cst_31 = arith.constant dense<0.000000e+00> : vector<32x128xf32>
    %105 = tpu.matmul %96, %0, %cst_31 {dimension_numbers = #tpu.dot_dimension_numbers<[1], [0], [0], [1], [0, 0, 1, 1], [], []>} : vector<32x32xf32>, vector<32x128xf32>, vector<32x128xf32> -> vector<32x128xf32>
    %106 = arith.addf %104, %105 : vector<32x128xf32>
    %107 = arith.negf %106 : vector<32x128xf32>
    %108 = math.exp %107 : vector<32x128xf32>
    %cst_32 = arith.constant 1.000000e+00 : f32
    %109 = vector.broadcast %cst_32 : f32 to vector<32x128xf32>
    %110 = arith.addf %109, %108 : vector<32x128xf32>
    %111 = arith.divf %109, %110 : vector<32x128xf32>
    %112 = vector.extract_strided_slice %111 {offsets = [0, 0], sizes = [32, 32], strides = [1, 1]} : vector<32x128xf32> to vector<32x32xf32>
    %113 = vector.extract_strided_slice %111 {offsets = [0, 32], sizes = [32, 32], strides = [1, 1]} : vector<32x128xf32> to vector<32x32xf32>
    %114 = vector.extract_strided_slice %111 {offsets = [0, 96], sizes = [32, 32], strides = [1, 1]} : vector<32x128xf32> to vector<32x32xf32>
    %115 = vector.extract_strided_slice %106 {offsets = [0, 64], sizes = [32, 32], strides = [1, 1]} : vector<32x128xf32> to vector<32x32xf32>
    %116 = math.tanh %115 : vector<32x32xf32>
    %117 = arith.mulf %113, %94 : vector<32x32xf32>
    %118 = arith.mulf %112, %116 : vector<32x32xf32>
    %119 = arith.addf %117, %118 : vector<32x32xf32>
    %120 = math.tanh %119 : vector<32x32xf32>
    %121 = arith.mulf %114, %120 : vector<32x32xf32>
    %c0_i32_33 = arith.constant 0 : i32
    %122 = arith.addi %c0_i32_33, %c4_i32 : i32
    %123 = arith.index_cast %122 : i32 to index
    %c0_34 = arith.constant 0 : index
    %c0_35 = arith.constant 0 : index
    %124 = vector.load %arg5[%123, %c0_34, %c0_35] : memref<16x32x32xf32, #tpu.memory_space<vmem>>, vector<1x32x32xf32>
    %125 = vector.shape_cast %124 : vector<1x32x32xf32> to vector<32x32xf32>
    %126 = vector.shape_cast %121 : vector<32x32xf32> to vector<1x32x32xf32>
    tpu.vector_store %arg5[%123, %c0_34, %c0_35], %126 {strides = array<i32>} : memref<16x32x32xf32, #tpu.memory_space<vmem>>, vector<1x32x32xf32>,
    %c5_i32 = arith.constant 5 : i32
    %127 = arith.index_cast %c5_i32 : i32 to index
    %c0_36 = arith.constant 0 : index
    %c0_37 = arith.constant 0 : index
    %128 = vector.load %arg0[%127, %c0_36, %c0_37] : memref<8x32x128xf32, #tpu.memory_space<vmem>>, vector<1x32x128xf32>
    %129 = vector.shape_cast %128 : vector<1x32x128xf32> to vector<32x128xf32>
    %cst_38 = arith.constant dense<0.000000e+00> : vector<32x128xf32>
    %130 = tpu.matmul %121, %0, %cst_38 {dimension_numbers = #tpu.dot_dimension_numbers<[1], [0], [0], [1], [0, 0, 1, 1], [], []>} : vector<32x32xf32>, vector<32x128xf32>, vector<32x128xf32> -> vector<32x128xf32>
    %131 = arith.addf %129, %130 : vector<32x128xf32>
    %132 = arith.negf %131 : vector<32x128xf32>
    %133 = math.exp %132 : vector<32x128xf32>
    %cst_39 = arith.constant 1.000000e+00 : f32
    %134 = vector.broadcast %cst_39 : f32 to vector<32x128xf32>
    %135 = arith.addf %134, %133 : vector<32x128xf32>
    %136 = arith.divf %134, %135 : vector<32x128xf32>
    %137 = vector.extract_strided_slice %136 {offsets = [0, 0], sizes = [32, 32], strides = [1, 1]} : vector<32x128xf32> to vector<32x32xf32>
    %138 = vector.extract_strided_slice %136 {offsets = [0, 32], sizes = [32, 32], strides = [1, 1]} : vector<32x128xf32> to vector<32x32xf32>
    %139 = vector.extract_strided_slice %136 {offsets = [0, 96], sizes = [32, 32], strides = [1, 1]} : vector<32x128xf32> to vector<32x32xf32>
    %140 = vector.extract_strided_slice %131 {offsets = [0, 64], sizes = [32, 32], strides = [1, 1]} : vector<32x128xf32> to vector<32x32xf32>
    %141 = math.tanh %140 : vector<32x32xf32>
    %142 = arith.mulf %138, %119 : vector<32x32xf32>
    %143 = arith.mulf %137, %141 : vector<32x32xf32>
    %144 = arith.addf %142, %143 : vector<32x32xf32>
    %145 = math.tanh %144 : vector<32x32xf32>
    %146 = arith.mulf %139, %145 : vector<32x32xf32>
    %c0_i32_40 = arith.constant 0 : i32
    %147 = arith.addi %c0_i32_40, %c5_i32 : i32
    %148 = arith.index_cast %147 : i32 to index
    %c0_41 = arith.constant 0 : index
    %c0_42 = arith.constant 0 : index
    %149 = vector.load %arg5[%148, %c0_41, %c0_42] : memref<16x32x32xf32, #tpu.memory_space<vmem>>, vector<1x32x32xf32>
    %150 = vector.shape_cast %149 : vector<1x32x32xf32> to vector<32x32xf32>
    %151 = vector.shape_cast %146 : vector<32x32xf32> to vector<1x32x32xf32>
    tpu.vector_store %arg5[%148, %c0_41, %c0_42], %151 {strides = array<i32>} : memref<16x32x32xf32, #tpu.memory_space<vmem>>, vector<1x32x32xf32>,
    %c6_i32 = arith.constant 6 : i32
    %152 = arith.index_cast %c6_i32 : i32 to index
    %c0_43 = arith.constant 0 : index
    %c0_44 = arith.constant 0 : index
    %153 = vector.load %arg0[%152, %c0_43, %c0_44] : memref<8x32x128xf32, #tpu.memory_space<vmem>>, vector<1x32x128xf32>
    %154 = vector.shape_cast %153 : vector<1x32x128xf32> to vector<32x128xf32>
    %cst_45 = arith.constant dense<0.000000e+00> : vector<32x128xf32>
    %155 = tpu.matmul %146, %0, %cst_45 {dimension_numbers = #tpu.dot_dimension_numbers<[1], [0], [0], [1], [0, 0, 1, 1], [], []>} : vector<32x32xf32>, vector<32x128xf32>, vector<32x128xf32> -> vector<32x128xf32>
    %156 = arith.addf %154, %155 : vector<32x128xf32>
    %157 = arith.negf %156 : vector<32x128xf32>
    %158 = math.exp %157 : vector<32x128xf32>
    %cst_46 = arith.constant 1.000000e+00 : f32
    %159 = vector.broadcast %cst_46 : f32 to vector<32x128xf32>
    %160 = arith.addf %159, %158 : vector<32x128xf32>
    %161 = arith.divf %159, %160 : vector<32x128xf32>
    %162 = vector.extract_strided_slice %161 {offsets = [0, 0], sizes = [32, 32], strides = [1, 1]} : vector<32x128xf32> to vector<32x32xf32>
    %163 = vector.extract_strided_slice %161 {offsets = [0, 32], sizes = [32, 32], strides = [1, 1]} : vector<32x128xf32> to vector<32x32xf32>
    %164 = vector.extract_strided_slice %161 {offsets = [0, 96], sizes = [32, 32], strides = [1, 1]} : vector<32x128xf32> to vector<32x32xf32>
    %165 = vector.extract_strided_slice %156 {offsets = [0, 64], sizes = [32, 32], strides = [1, 1]} : vector<32x128xf32> to vector<32x32xf32>
    %166 = math.tanh %165 : vector<32x32xf32>
    %167 = arith.mulf %163, %144 : vector<32x32xf32>
    %168 = arith.mulf %162, %166 : vector<32x32xf32>
    %169 = arith.addf %167, %168 : vector<32x32xf32>
    %170 = math.tanh %169 : vector<32x32xf32>
    %171 = arith.mulf %164, %170 : vector<32x32xf32>
    %c0_i32_47 = arith.constant 0 : i32
    %172 = arith.addi %c0_i32_47, %c6_i32 : i32
    %173 = arith.index_cast %172 : i32 to index
    %c0_48 = arith.constant 0 : index
    %c0_49 = arith.constant 0 : index
    %174 = vector.load %arg5[%173, %c0_48, %c0_49] : memref<16x32x32xf32, #tpu.memory_space<vmem>>, vector<1x32x32xf32>
    %175 = vector.shape_cast %174 : vector<1x32x32xf32> to vector<32x32xf32>
    %176 = vector.shape_cast %171 : vector<32x32xf32> to vector<1x32x32xf32>
    tpu.vector_store %arg5[%173, %c0_48, %c0_49], %176 {strides = array<i32>} : memref<16x32x32xf32, #tpu.memory_space<vmem>>, vector<1x32x32xf32>,
    %c7_i32 = arith.constant 7 : i32
    %177 = arith.index_cast %c7_i32 : i32 to index
    %c0_50 = arith.constant 0 : index
    %c0_51 = arith.constant 0 : index
    %178 = vector.load %arg0[%177, %c0_50, %c0_51] : memref<8x32x128xf32, #tpu.memory_space<vmem>>, vector<1x32x128xf32>
    %179 = vector.shape_cast %178 : vector<1x32x128xf32> to vector<32x128xf32>
    %cst_52 = arith.constant dense<0.000000e+00> : vector<32x128xf32>
    %180 = tpu.matmul %171, %0, %cst_52 {dimension_numbers = #tpu.dot_dimension_numbers<[1], [0], [0], [1], [0, 0, 1, 1], [], []>} : vector<32x32xf32>, vector<32x128xf32>, vector<32x128xf32> -> vector<32x128xf32>
    %181 = arith.addf %179, %180 : vector<32x128xf32>
    %182 = arith.negf %181 : vector<32x128xf32>
    %183 = math.exp %182 : vector<32x128xf32>
    %cst_53 = arith.constant 1.000000e+00 : f32
    %184 = vector.broadcast %cst_53 : f32 to vector<32x128xf32>
    %185 = arith.addf %184, %183 : vector<32x128xf32>
    %186 = arith.divf %184, %185 : vector<32x128xf32>
    %187 = vector.extract_strided_slice %186 {offsets = [0, 0], sizes = [32, 32], strides = [1, 1]} : vector<32x128xf32> to vector<32x32xf32>
    %188 = vector.extract_strided_slice %186 {offsets = [0, 32], sizes = [32, 32], strides = [1, 1]} : vector<32x128xf32> to vector<32x32xf32>
    %189 = vector.extract_strided_slice %186 {offsets = [0, 96], sizes = [32, 32], strides = [1, 1]} : vector<32x128xf32> to vector<32x32xf32>
    %190 = vector.extract_strided_slice %181 {offsets = [0, 64], sizes = [32, 32], strides = [1, 1]} : vector<32x128xf32> to vector<32x32xf32>
    %191 = math.tanh %190 : vector<32x32xf32>
    %192 = arith.mulf %188, %169 : vector<32x32xf32>
    %193 = arith.mulf %187, %191 : vector<32x32xf32>
    %194 = arith.addf %192, %193 : vector<32x32xf32>
    %195 = math.tanh %194 : vector<32x32xf32>
    %196 = arith.mulf %189, %195 : vector<32x32xf32>
    %c0_i32_54 = arith.constant 0 : i32
    %197 = arith.addi %c0_i32_54, %c7_i32 : i32
    %198 = arith.index_cast %197 : i32 to index
    %c0_55 = arith.constant 0 : index
    %c0_56 = arith.constant 0 : index
    %199 = vector.load %arg5[%198, %c0_55, %c0_56] : memref<16x32x32xf32, #tpu.memory_space<vmem>>, vector<1x32x32xf32>
    %200 = vector.shape_cast %199 : vector<1x32x32xf32> to vector<32x32xf32>
    %201 = vector.shape_cast %196 : vector<32x32xf32> to vector<1x32x32xf32>
    tpu.vector_store %arg5[%198, %c0_55, %c0_56], %201 {strides = array<i32>} : memref<16x32x32xf32, #tpu.memory_space<vmem>>, vector<1x32x32xf32>,
    %c8_i32 = arith.constant 8 : i32
    %c0_57 = arith.constant 0 : index
    %c0_58 = arith.constant 0 : index
    %c0_59 = arith.constant 0 : index
    %202 = vector.load %arg6[%c0_57, %c0_58, %c0_59] : memref<2x32x32xf32, #tpu.memory_space<vmem>>, vector<1x32x32xf32>
    %203 = vector.shape_cast %202 : vector<1x32x32xf32> to vector<32x32xf32>
    %204 = vector.shape_cast %194 : vector<32x32xf32> to vector<1x32x32xf32>
    tpu.vector_store %arg6[%c0_57, %c0_58, %c0_59], %204 {strides = array<i32>} : memref<2x32x32xf32, #tpu.memory_space<vmem>>, vector<1x32x32xf32>,
    %c0_60 = arith.constant 0 : index
    %c0_61 = arith.constant 0 : index
    %c0_62 = arith.constant 0 : index
    %205 = vector.load %arg5[%c0_60, %c0_61, %c0_62] : memref<16x32x32xf32, #tpu.memory_space<vmem>>, vector<8x32x32xf32>
    %206 = vector.shape_cast %205 : vector<8x32x32xf32> to vector<256x32xf32>
    %c0_63 = arith.constant 0 : index
    %c0_64 = arith.constant 0 : index
    %207 = vector.load %arg2[%c0_63, %c0_64] : memref<32x128xf32, #tpu.memory_space<vmem>>, vector<32x128xf32>
    %cst_65 = arith.constant dense<0.000000e+00> : vector<256x128xf32>
    %208 = tpu.matmul %206, %207, %cst_65 {dimension_numbers = #tpu.dot_dimension_numbers<[1], [0], [0], [1], [0, 0, 1, 1], [], []>} : vector<256x32xf32>, vector<32x128xf32>, vector<256x128xf32> -> vector<256x128xf32>
    %c0_66 = arith.constant 0 : index
    %c0_67 = arith.constant 0 : index
    %209 = vector.load %arg4[%c0_66, %c0_67] : memref<1x128xf32, #tpu.memory_space<vmem>>, vector<1x128xf32>
    %210 = vector.broadcast %209 : vector<1x128xf32> to vector<256x128xf32>
    %211 = arith.addf %208, %210 : vector<256x128xf32>
    %212 = vector.shape_cast %211 : vector<256x128xf32> to vector<8x32x128xf32>
    %c0_68 = arith.constant 0 : index
    %c0_69 = arith.constant 0 : index
    %c0_70 = arith.constant 0 : index
    %213 = vector.load %arg7[%c0_68, %c0_69, %c0_70] : memref<8x32x128xf32, #tpu.memory_space<vmem>>, vector<8x32x128xf32>
    tpu.vector_store %arg7[%c0_68, %c0_69, %c0_70], %212 {strides = array<i32>} : memref<8x32x128xf32, #tpu.memory_space<vmem>>, vector<8x32x128xf32>,
    %c0_71 = arith.constant 0 : index
    %c0_72 = arith.constant 0 : index
    %214 = vector.load %arg3[%c0_71, %c0_72] : memref<32x128xf32, #tpu.memory_space<vmem>>, vector<32x128xf32>
    %cst_73 = arith.constant 0.000000e+00 : f32
    %215 = vector.broadcast %cst_73 : f32 to vector<32x32xf32>
    %c0_i32_74 = arith.constant 0 : i32
    %216 = arith.index_cast %c0_i32_74 : i32 to index
    %c0_75 = arith.constant 0 : index
    %c0_76 = arith.constant 0 : index
    %217 = vector.load %arg7[%216, %c0_75, %c0_76] : memref<8x32x128xf32, #tpu.memory_space<vmem>>, vector<1x32x128xf32>
    %218 = vector.shape_cast %217 : vector<1x32x128xf32> to vector<32x128xf32>
    %cst_77 = arith.constant dense<0.000000e+00> : vector<32x128xf32>
    %219 = tpu.matmul %215, %214, %cst_77 {dimension_numbers = #tpu.dot_dimension_numbers<[1], [0], [0], [1], [0, 0, 1, 1], [], []>} : vector<32x32xf32>, vector<32x128xf32>, vector<32x128xf32> -> vector<32x128xf32>
    %220 = arith.addf %218, %219 : vector<32x128xf32>
    %221 = arith.negf %220 : vector<32x128xf32>
    %222 = math.exp %221 : vector<32x128xf32>
    %cst_78 = arith.constant 1.000000e+00 : f32
    %223 = vector.broadcast %cst_78 : f32 to vector<32x128xf32>
    %224 = arith.addf %223, %222 : vector<32x128xf32>
    %225 = arith.divf %223, %224 : vector<32x128xf32>
    %226 = vector.extract_strided_slice %225 {offsets = [0, 0], sizes = [32, 32], strides = [1, 1]} : vector<32x128xf32> to vector<32x32xf32>
    %227 = vector.extract_strided_slice %225 {offsets = [0, 32], sizes = [32, 32], strides = [1, 1]} : vector<32x128xf32> to vector<32x32xf32>
    %228 = vector.extract_strided_slice %225 {offsets = [0, 96], sizes = [32, 32], strides = [1, 1]} : vector<32x128xf32> to vector<32x32xf32>
    %229 = vector.extract_strided_slice %220 {offsets = [0, 64], sizes = [32, 32], strides = [1, 1]} : vector<32x128xf32> to vector<32x32xf32>
    %230 = math.tanh %229 : vector<32x32xf32>
    %231 = arith.mulf %227, %215 : vector<32x32xf32>
    %232 = arith.mulf %226, %230 : vector<32x32xf32>
    %233 = arith.addf %231, %232 : vector<32x32xf32>
    %234 = math.tanh %233 : vector<32x32xf32>
    %235 = arith.mulf %228, %234 : vector<32x32xf32>
    %c8_i32_79 = arith.constant 8 : i32
    %236 = arith.addi %c8_i32_79, %c0_i32_74 : i32
    %237 = arith.index_cast %236 : i32 to index
    %c0_80 = arith.constant 0 : index
    %c0_81 = arith.constant 0 : index
    %238 = vector.load %arg5[%237, %c0_80, %c0_81] : memref<16x32x32xf32, #tpu.memory_space<vmem>>, vector<1x32x32xf32>
    %239 = vector.shape_cast %238 : vector<1x32x32xf32> to vector<32x32xf32>
    %240 = vector.shape_cast %235 : vector<32x32xf32> to vector<1x32x32xf32>
    tpu.vector_store %arg5[%237, %c0_80, %c0_81], %240 {strides = array<i32>} : memref<16x32x32xf32, #tpu.memory_space<vmem>>, vector<1x32x32xf32>,
    %c1_i32_82 = arith.constant 1 : i32
    %241 = arith.index_cast %c1_i32_82 : i32 to index
    %c0_83 = arith.constant 0 : index
    %c0_84 = arith.constant 0 : index
    %242 = vector.load %arg7[%241, %c0_83, %c0_84] : memref<8x32x128xf32, #tpu.memory_space<vmem>>, vector<1x32x128xf32>
    %243 = vector.shape_cast %242 : vector<1x32x128xf32> to vector<32x128xf32>
    %cst_85 = arith.constant dense<0.000000e+00> : vector<32x128xf32>
    %244 = tpu.matmul %235, %214, %cst_85 {dimension_numbers = #tpu.dot_dimension_numbers<[1], [0], [0], [1], [0, 0, 1, 1], [], []>} : vector<32x32xf32>, vector<32x128xf32>, vector<32x128xf32> -> vector<32x128xf32>
    %245 = arith.addf %243, %244 : vector<32x128xf32>
    %246 = arith.negf %245 : vector<32x128xf32>
    %247 = math.exp %246 : vector<32x128xf32>
    %cst_86 = arith.constant 1.000000e+00 : f32
    %248 = vector.broadcast %cst_86 : f32 to vector<32x128xf32>
    %249 = arith.addf %248, %247 : vector<32x128xf32>
    %250 = arith.divf %248, %249 : vector<32x128xf32>
    %251 = vector.extract_strided_slice %250 {offsets = [0, 0], sizes = [32, 32], strides = [1, 1]} : vector<32x128xf32> to vector<32x32xf32>
    %252 = vector.extract_strided_slice %250 {offsets = [0, 32], sizes = [32, 32], strides = [1, 1]} : vector<32x128xf32> to vector<32x32xf32>
    %253 = vector.extract_strided_slice %250 {offsets = [0, 96], sizes = [32, 32], strides = [1, 1]} : vector<32x128xf32> to vector<32x32xf32>
    %254 = vector.extract_strided_slice %245 {offsets = [0, 64], sizes = [32, 32], strides = [1, 1]} : vector<32x128xf32> to vector<32x32xf32>
    %255 = math.tanh %254 : vector<32x32xf32>
    %256 = arith.mulf %252, %233 : vector<32x32xf32>
    %257 = arith.mulf %251, %255 : vector<32x32xf32>
    %258 = arith.addf %256, %257 : vector<32x32xf32>
    %259 = math.tanh %258 : vector<32x32xf32>
    %260 = arith.mulf %253, %259 : vector<32x32xf32>
    %c8_i32_87 = arith.constant 8 : i32
    %261 = arith.addi %c8_i32_87, %c1_i32_82 : i32
    %262 = arith.index_cast %261 : i32 to index
    %c0_88 = arith.constant 0 : index
    %c0_89 = arith.constant 0 : index
    %263 = vector.load %arg5[%262, %c0_88, %c0_89] : memref<16x32x32xf32, #tpu.memory_space<vmem>>, vector<1x32x32xf32>
    %264 = vector.shape_cast %263 : vector<1x32x32xf32> to vector<32x32xf32>
    %265 = vector.shape_cast %260 : vector<32x32xf32> to vector<1x32x32xf32>
    tpu.vector_store %arg5[%262, %c0_88, %c0_89], %265 {strides = array<i32>} : memref<16x32x32xf32, #tpu.memory_space<vmem>>, vector<1x32x32xf32>,
    %c2_i32_90 = arith.constant 2 : i32
    %266 = arith.index_cast %c2_i32_90 : i32 to index
    %c0_91 = arith.constant 0 : index
    %c0_92 = arith.constant 0 : index
    %267 = vector.load %arg7[%266, %c0_91, %c0_92] : memref<8x32x128xf32, #tpu.memory_space<vmem>>, vector<1x32x128xf32>
    %268 = vector.shape_cast %267 : vector<1x32x128xf32> to vector<32x128xf32>
    %cst_93 = arith.constant dense<0.000000e+00> : vector<32x128xf32>
    %269 = tpu.matmul %260, %214, %cst_93 {dimension_numbers = #tpu.dot_dimension_numbers<[1], [0], [0], [1], [0, 0, 1, 1], [], []>} : vector<32x32xf32>, vector<32x128xf32>, vector<32x128xf32> -> vector<32x128xf32>
    %270 = arith.addf %268, %269 : vector<32x128xf32>
    %271 = arith.negf %270 : vector<32x128xf32>
    %272 = math.exp %271 : vector<32x128xf32>
    %cst_94 = arith.constant 1.000000e+00 : f32
    %273 = vector.broadcast %cst_94 : f32 to vector<32x128xf32>
    %274 = arith.addf %273, %272 : vector<32x128xf32>
    %275 = arith.divf %273, %274 : vector<32x128xf32>
    %276 = vector.extract_strided_slice %275 {offsets = [0, 0], sizes = [32, 32], strides = [1, 1]} : vector<32x128xf32> to vector<32x32xf32>
    %277 = vector.extract_strided_slice %275 {offsets = [0, 32], sizes = [32, 32], strides = [1, 1]} : vector<32x128xf32> to vector<32x32xf32>
    %278 = vector.extract_strided_slice %275 {offsets = [0, 96], sizes = [32, 32], strides = [1, 1]} : vector<32x128xf32> to vector<32x32xf32>
    %279 = vector.extract_strided_slice %270 {offsets = [0, 64], sizes = [32, 32], strides = [1, 1]} : vector<32x128xf32> to vector<32x32xf32>
    %280 = math.tanh %279 : vector<32x32xf32>
    %281 = arith.mulf %277, %258 : vector<32x32xf32>
    %282 = arith.mulf %276, %280 : vector<32x32xf32>
    %283 = arith.addf %281, %282 : vector<32x32xf32>
    %284 = math.tanh %283 : vector<32x32xf32>
    %285 = arith.mulf %278, %284 : vector<32x32xf32>
    %c8_i32_95 = arith.constant 8 : i32
    %286 = arith.addi %c8_i32_95, %c2_i32_90 : i32
    %287 = arith.index_cast %286 : i32 to index
    %c0_96 = arith.constant 0 : index
    %c0_97 = arith.constant 0 : index
    %288 = vector.load %arg5[%287, %c0_96, %c0_97] : memref<16x32x32xf32, #tpu.memory_space<vmem>>, vector<1x32x32xf32>
    %289 = vector.shape_cast %288 : vector<1x32x32xf32> to vector<32x32xf32>
    %290 = vector.shape_cast %285 : vector<32x32xf32> to vector<1x32x32xf32>
    tpu.vector_store %arg5[%287, %c0_96, %c0_97], %290 {strides = array<i32>} : memref<16x32x32xf32, #tpu.memory_space<vmem>>, vector<1x32x32xf32>,
    %c3_i32_98 = arith.constant 3 : i32
    %291 = arith.index_cast %c3_i32_98 : i32 to index
    %c0_99 = arith.constant 0 : index
    %c0_100 = arith.constant 0 : index
    %292 = vector.load %arg7[%291, %c0_99, %c0_100] : memref<8x32x128xf32, #tpu.memory_space<vmem>>, vector<1x32x128xf32>
    %293 = vector.shape_cast %292 : vector<1x32x128xf32> to vector<32x128xf32>
    %cst_101 = arith.constant dense<0.000000e+00> : vector<32x128xf32>
    %294 = tpu.matmul %285, %214, %cst_101 {dimension_numbers = #tpu.dot_dimension_numbers<[1], [0], [0], [1], [0, 0, 1, 1], [], []>} : vector<32x32xf32>, vector<32x128xf32>, vector<32x128xf32> -> vector<32x128xf32>
    %295 = arith.addf %293, %294 : vector<32x128xf32>
    %296 = arith.negf %295 : vector<32x128xf32>
    %297 = math.exp %296 : vector<32x128xf32>
    %cst_102 = arith.constant 1.000000e+00 : f32
    %298 = vector.broadcast %cst_102 : f32 to vector<32x128xf32>
    %299 = arith.addf %298, %297 : vector<32x128xf32>
    %300 = arith.divf %298, %299 : vector<32x128xf32>
    %301 = vector.extract_strided_slice %300 {offsets = [0, 0], sizes = [32, 32], strides = [1, 1]} : vector<32x128xf32> to vector<32x32xf32>
    %302 = vector.extract_strided_slice %300 {offsets = [0, 32], sizes = [32, 32], strides = [1, 1]} : vector<32x128xf32> to vector<32x32xf32>
    %303 = vector.extract_strided_slice %300 {offsets = [0, 96], sizes = [32, 32], strides = [1, 1]} : vector<32x128xf32> to vector<32x32xf32>
    %304 = vector.extract_strided_slice %295 {offsets = [0, 64], sizes = [32, 32], strides = [1, 1]} : vector<32x128xf32> to vector<32x32xf32>
    %305 = math.tanh %304 : vector<32x32xf32>
    %306 = arith.mulf %302, %283 : vector<32x32xf32>
    %307 = arith.mulf %301, %305 : vector<32x32xf32>
    %308 = arith.addf %306, %307 : vector<32x32xf32>
    %309 = math.tanh %308 : vector<32x32xf32>
    %310 = arith.mulf %303, %309 : vector<32x32xf32>
    %c8_i32_103 = arith.constant 8 : i32
    %311 = arith.addi %c8_i32_103, %c3_i32_98 : i32
    %312 = arith.index_cast %311 : i32 to index
    %c0_104 = arith.constant 0 : index
    %c0_105 = arith.constant 0 : index
    %313 = vector.load %arg5[%312, %c0_104, %c0_105] : memref<16x32x32xf32, #tpu.memory_space<vmem>>, vector<1x32x32xf32>
    %314 = vector.shape_cast %313 : vector<1x32x32xf32> to vector<32x32xf32>
    %315 = vector.shape_cast %310 : vector<32x32xf32> to vector<1x32x32xf32>
    tpu.vector_store %arg5[%312, %c0_104, %c0_105], %315 {strides = array<i32>} : memref<16x32x32xf32, #tpu.memory_space<vmem>>, vector<1x32x32xf32>,
    %c4_i32_106 = arith.constant 4 : i32
    %316 = arith.index_cast %c4_i32_106 : i32 to index
    %c0_107 = arith.constant 0 : index
    %c0_108 = arith.constant 0 : index
    %317 = vector.load %arg7[%316, %c0_107, %c0_108] : memref<8x32x128xf32, #tpu.memory_space<vmem>>, vector<1x32x128xf32>
    %318 = vector.shape_cast %317 : vector<1x32x128xf32> to vector<32x128xf32>
    %cst_109 = arith.constant dense<0.000000e+00> : vector<32x128xf32>
    %319 = tpu.matmul %310, %214, %cst_109 {dimension_numbers = #tpu.dot_dimension_numbers<[1], [0], [0], [1], [0, 0, 1, 1], [], []>} : vector<32x32xf32>, vector<32x128xf32>, vector<32x128xf32> -> vector<32x128xf32>
    %320 = arith.addf %318, %319 : vector<32x128xf32>
    %321 = arith.negf %320 : vector<32x128xf32>
    %322 = math.exp %321 : vector<32x128xf32>
    %cst_110 = arith.constant 1.000000e+00 : f32
    %323 = vector.broadcast %cst_110 : f32 to vector<32x128xf32>
    %324 = arith.addf %323, %322 : vector<32x128xf32>
    %325 = arith.divf %323, %324 : vector<32x128xf32>
    %326 = vector.extract_strided_slice %325 {offsets = [0, 0], sizes = [32, 32], strides = [1, 1]} : vector<32x128xf32> to vector<32x32xf32>
    %327 = vector.extract_strided_slice %325 {offsets = [0, 32], sizes = [32, 32], strides = [1, 1]} : vector<32x128xf32> to vector<32x32xf32>
    %328 = vector.extract_strided_slice %325 {offsets = [0, 96], sizes = [32, 32], strides = [1, 1]} : vector<32x128xf32> to vector<32x32xf32>
    %329 = vector.extract_strided_slice %320 {offsets = [0, 64], sizes = [32, 32], strides = [1, 1]} : vector<32x128xf32> to vector<32x32xf32>
    %330 = math.tanh %329 : vector<32x32xf32>
    %331 = arith.mulf %327, %308 : vector<32x32xf32>
    %332 = arith.mulf %326, %330 : vector<32x32xf32>
    %333 = arith.addf %331, %332 : vector<32x32xf32>
    %334 = math.tanh %333 : vector<32x32xf32>
    %335 = arith.mulf %328, %334 : vector<32x32xf32>
    %c8_i32_111 = arith.constant 8 : i32
    %336 = arith.addi %c8_i32_111, %c4_i32_106 : i32
    %337 = arith.index_cast %336 : i32 to index
    %c0_112 = arith.constant 0 : index
    %c0_113 = arith.constant 0 : index
    %338 = vector.load %arg5[%337, %c0_112, %c0_113] : memref<16x32x32xf32, #tpu.memory_space<vmem>>, vector<1x32x32xf32>
    %339 = vector.shape_cast %338 : vector<1x32x32xf32> to vector<32x32xf32>
    %340 = vector.shape_cast %335 : vector<32x32xf32> to vector<1x32x32xf32>
    tpu.vector_store %arg5[%337, %c0_112, %c0_113], %340 {strides = array<i32>} : memref<16x32x32xf32, #tpu.memory_space<vmem>>, vector<1x32x32xf32>,
    %c5_i32_114 = arith.constant 5 : i32
    %341 = arith.index_cast %c5_i32_114 : i32 to index
    %c0_115 = arith.constant 0 : index
    %c0_116 = arith.constant 0 : index
    %342 = vector.load %arg7[%341, %c0_115, %c0_116] : memref<8x32x128xf32, #tpu.memory_space<vmem>>, vector<1x32x128xf32>
    %343 = vector.shape_cast %342 : vector<1x32x128xf32> to vector<32x128xf32>
    %cst_117 = arith.constant dense<0.000000e+00> : vector<32x128xf32>
    %344 = tpu.matmul %335, %214, %cst_117 {dimension_numbers = #tpu.dot_dimension_numbers<[1], [0], [0], [1], [0, 0, 1, 1], [], []>} : vector<32x32xf32>, vector<32x128xf32>, vector<32x128xf32> -> vector<32x128xf32>
    %345 = arith.addf %343, %344 : vector<32x128xf32>
    %346 = arith.negf %345 : vector<32x128xf32>
    %347 = math.exp %346 : vector<32x128xf32>
    %cst_118 = arith.constant 1.000000e+00 : f32
    %348 = vector.broadcast %cst_118 : f32 to vector<32x128xf32>
    %349 = arith.addf %348, %347 : vector<32x128xf32>
    %350 = arith.divf %348, %349 : vector<32x128xf32>
    %351 = vector.extract_strided_slice %350 {offsets = [0, 0], sizes = [32, 32], strides = [1, 1]} : vector<32x128xf32> to vector<32x32xf32>
    %352 = vector.extract_strided_slice %350 {offsets = [0, 32], sizes = [32, 32], strides = [1, 1]} : vector<32x128xf32> to vector<32x32xf32>
    %353 = vector.extract_strided_slice %350 {offsets = [0, 96], sizes = [32, 32], strides = [1, 1]} : vector<32x128xf32> to vector<32x32xf32>
    %354 = vector.extract_strided_slice %345 {offsets = [0, 64], sizes = [32, 32], strides = [1, 1]} : vector<32x128xf32> to vector<32x32xf32>
    %355 = math.tanh %354 : vector<32x32xf32>
    %356 = arith.mulf %352, %333 : vector<32x32xf32>
    %357 = arith.mulf %351, %355 : vector<32x32xf32>
    %358 = arith.addf %356, %357 : vector<32x32xf32>
    %359 = math.tanh %358 : vector<32x32xf32>
    %360 = arith.mulf %353, %359 : vector<32x32xf32>
    %c8_i32_119 = arith.constant 8 : i32
    %361 = arith.addi %c8_i32_119, %c5_i32_114 : i32
    %362 = arith.index_cast %361 : i32 to index
    %c0_120 = arith.constant 0 : index
    %c0_121 = arith.constant 0 : index
    %363 = vector.load %arg5[%362, %c0_120, %c0_121] : memref<16x32x32xf32, #tpu.memory_space<vmem>>, vector<1x32x32xf32>
    %364 = vector.shape_cast %363 : vector<1x32x32xf32> to vector<32x32xf32>
    %365 = vector.shape_cast %360 : vector<32x32xf32> to vector<1x32x32xf32>
    tpu.vector_store %arg5[%362, %c0_120, %c0_121], %365 {strides = array<i32>} : memref<16x32x32xf32, #tpu.memory_space<vmem>>, vector<1x32x32xf32>,
    %c6_i32_122 = arith.constant 6 : i32
    %366 = arith.index_cast %c6_i32_122 : i32 to index
    %c0_123 = arith.constant 0 : index
    %c0_124 = arith.constant 0 : index
    %367 = vector.load %arg7[%366, %c0_123, %c0_124] : memref<8x32x128xf32, #tpu.memory_space<vmem>>, vector<1x32x128xf32>
    %368 = vector.shape_cast %367 : vector<1x32x128xf32> to vector<32x128xf32>
    %cst_125 = arith.constant dense<0.000000e+00> : vector<32x128xf32>
    %369 = tpu.matmul %360, %214, %cst_125 {dimension_numbers = #tpu.dot_dimension_numbers<[1], [0], [0], [1], [0, 0, 1, 1], [], []>} : vector<32x32xf32>, vector<32x128xf32>, vector<32x128xf32> -> vector<32x128xf32>
    %370 = arith.addf %368, %369 : vector<32x128xf32>
    %371 = arith.negf %370 : vector<32x128xf32>
    %372 = math.exp %371 : vector<32x128xf32>
    %cst_126 = arith.constant 1.000000e+00 : f32
    %373 = vector.broadcast %cst_126 : f32 to vector<32x128xf32>
    %374 = arith.addf %373, %372 : vector<32x128xf32>
    %375 = arith.divf %373, %374 : vector<32x128xf32>
    %376 = vector.extract_strided_slice %375 {offsets = [0, 0], sizes = [32, 32], strides = [1, 1]} : vector<32x128xf32> to vector<32x32xf32>
    %377 = vector.extract_strided_slice %375 {offsets = [0, 32], sizes = [32, 32], strides = [1, 1]} : vector<32x128xf32> to vector<32x32xf32>
    %378 = vector.extract_strided_slice %375 {offsets = [0, 96], sizes = [32, 32], strides = [1, 1]} : vector<32x128xf32> to vector<32x32xf32>
    %379 = vector.extract_strided_slice %370 {offsets = [0, 64], sizes = [32, 32], strides = [1, 1]} : vector<32x128xf32> to vector<32x32xf32>
    %380 = math.tanh %379 : vector<32x32xf32>
    %381 = arith.mulf %377, %358 : vector<32x32xf32>
    %382 = arith.mulf %376, %380 : vector<32x32xf32>
    %383 = arith.addf %381, %382 : vector<32x32xf32>
    %384 = math.tanh %383 : vector<32x32xf32>
    %385 = arith.mulf %378, %384 : vector<32x32xf32>
    %c8_i32_127 = arith.constant 8 : i32
    %386 = arith.addi %c8_i32_127, %c6_i32_122 : i32
    %387 = arith.index_cast %386 : i32 to index
    %c0_128 = arith.constant 0 : index
    %c0_129 = arith.constant 0 : index
    %388 = vector.load %arg5[%387, %c0_128, %c0_129] : memref<16x32x32xf32, #tpu.memory_space<vmem>>, vector<1x32x32xf32>
    %389 = vector.shape_cast %388 : vector<1x32x32xf32> to vector<32x32xf32>
    %390 = vector.shape_cast %385 : vector<32x32xf32> to vector<1x32x32xf32>
    tpu.vector_store %arg5[%387, %c0_128, %c0_129], %390 {strides = array<i32>} : memref<16x32x32xf32, #tpu.memory_space<vmem>>, vector<1x32x32xf32>,
    %c7_i32_130 = arith.constant 7 : i32
    %391 = arith.index_cast %c7_i32_130 : i32 to index
    %c0_131 = arith.constant 0 : index
    %c0_132 = arith.constant 0 : index
    %392 = vector.load %arg7[%391, %c0_131, %c0_132] : memref<8x32x128xf32, #tpu.memory_space<vmem>>, vector<1x32x128xf32>
    %393 = vector.shape_cast %392 : vector<1x32x128xf32> to vector<32x128xf32>
    %cst_133 = arith.constant dense<0.000000e+00> : vector<32x128xf32>
    %394 = tpu.matmul %385, %214, %cst_133 {dimension_numbers = #tpu.dot_dimension_numbers<[1], [0], [0], [1], [0, 0, 1, 1], [], []>} : vector<32x32xf32>, vector<32x128xf32>, vector<32x128xf32> -> vector<32x128xf32>
    %395 = arith.addf %393, %394 : vector<32x128xf32>
    %396 = arith.negf %395 : vector<32x128xf32>
    %397 = math.exp %396 : vector<32x128xf32>
    %cst_134 = arith.constant 1.000000e+00 : f32
    %398 = vector.broadcast %cst_134 : f32 to vector<32x128xf32>
    %399 = arith.addf %398, %397 : vector<32x128xf32>
    %400 = arith.divf %398, %399 : vector<32x128xf32>
    %401 = vector.extract_strided_slice %400 {offsets = [0, 0], sizes = [32, 32], strides = [1, 1]} : vector<32x128xf32> to vector<32x32xf32>
    %402 = vector.extract_strided_slice %400 {offsets = [0, 32], sizes = [32, 32], strides = [1, 1]} : vector<32x128xf32> to vector<32x32xf32>
    %403 = vector.extract_strided_slice %400 {offsets = [0, 96], sizes = [32, 32], strides = [1, 1]} : vector<32x128xf32> to vector<32x32xf32>
    %404 = vector.extract_strided_slice %395 {offsets = [0, 64], sizes = [32, 32], strides = [1, 1]} : vector<32x128xf32> to vector<32x32xf32>
    %405 = math.tanh %404 : vector<32x32xf32>
    %406 = arith.mulf %402, %383 : vector<32x32xf32>
    %407 = arith.mulf %401, %405 : vector<32x32xf32>
    %408 = arith.addf %406, %407 : vector<32x32xf32>
    %409 = math.tanh %408 : vector<32x32xf32>
    %410 = arith.mulf %403, %409 : vector<32x32xf32>
    %c8_i32_135 = arith.constant 8 : i32
    %411 = arith.addi %c8_i32_135, %c7_i32_130 : i32
    %412 = arith.index_cast %411 : i32 to index
    %c0_136 = arith.constant 0 : index
    %c0_137 = arith.constant 0 : index
    %413 = vector.load %arg5[%412, %c0_136, %c0_137] : memref<16x32x32xf32, #tpu.memory_space<vmem>>, vector<1x32x32xf32>
    %414 = vector.shape_cast %413 : vector<1x32x32xf32> to vector<32x32xf32>
    %415 = vector.shape_cast %410 : vector<32x32xf32> to vector<1x32x32xf32>
    tpu.vector_store %arg5[%412, %c0_136, %c0_137], %415 {strides = array<i32>} : memref<16x32x32xf32, #tpu.memory_space<vmem>>, vector<1x32x32xf32>,
    %c8_i32_138 = arith.constant 8 : i32
    %c1 = arith.constant 1 : index
    %c0_139 = arith.constant 0 : index
    %c0_140 = arith.constant 0 : index
    %416 = vector.load %arg6[%c1, %c0_139, %c0_140] : memref<2x32x32xf32, #tpu.memory_space<vmem>>, vector<1x32x32xf32>
    %417 = vector.shape_cast %416 : vector<1x32x32xf32> to vector<32x32xf32>
    %418 = vector.shape_cast %408 : vector<32x32xf32> to vector<1x32x32xf32>
    tpu.vector_store %arg6[%c1, %c0_139, %c0_140], %418 {strides = array<i32>} : memref<2x32x32xf32, #tpu.memory_space<vmem>>, vector<1x32x32xf32>,
    return
  }
}

</mosaic_0001>

<llo_original>
// kernel: _lambda_.1
$region0: #{_lambda_.1}
  #allocation0 [shape = 'u32[]', space=smem, size = 0x4, offset = 0x4, fixed_abs, tag = 'smem constant byte address 0x4 - core index']
  #allocation1 [shape = 'u32[144,128]{1,0:T(1,128)}', space=vmem, size = 0x12000, scoped, tag = 'internal scratch']
  #allocation2 [shape = 'f32[8,32,128]{2,1,0:T(8,128)}', space=vmem, size = 0x20000, scoped, tag = 'scratch operand']
  %s0 = inlined_call_operand.vmem [shape: f32[8,32,128], index: 0, kind: input, shape index: {}]
  %s1 = inlined_call_operand.vmem [shape: f32[32,128], index: 1, kind: input, shape index: {}]
  %s2 = inlined_call_operand.vmem [shape: f32[32,128], index: 2, kind: input, shape index: {}]
  %s3 = inlined_call_operand.vmem [shape: f32[32,128], index: 3, kind: input, shape index: {}]
  %s4 = inlined_call_operand.vmem [shape: f32[1,128], index: 4, kind: input, shape index: {}]
  %s5 = inlined_call_operand.vmem [shape: f32[16,32,32], index: 5, kind: output, shape index: {0}]
  %s6 = inlined_call_operand.vmem [shape: f32[2,32,32], index: 6, kind: output, shape index: {1}]
  %7 = xla_tuple %s5, %s6
  %s8 = sld [smem:[#allocation0]]
  $region38: #{_lambda_.1} parent=0
    _
  %s10 = ssub.s32 1, %s8
  %s11 = scalar_select 0, %s10, %s8
  // Predicated region
  $region2: #{_lambda_.1} parent=0 // pred_check
    _
  $region3: #{_lambda_.1} parent=0 // pred_check_branch
    %13 = sbr.rel (0) target = $region5
  $region4: #{_lambda_.1} parent=0 // pred_region
    _
  $region5: #{_lambda_.1} parent=0 // pred_fallthru
    _
  // Predicated region
  $region6: #{_lambda_.1} parent=0 // pred_check
    _
  $region7: #{_lambda_.1} parent=0 // pred_check_branch
    %15 = sbr.rel (0) target = $region9
  $region8: #{_lambda_.1} parent=0 // pred_region
    _
  $region9: #{_lambda_.1} parent=0 // pred_fallthru
    _
  // Predicated region
  $region10: #{_lambda_.1} parent=0 // pred_check
    _
  $region11: #{_lambda_.1} parent=0 // pred_check_branch
    %17 = sbr.rel (0) target = $region13
  $region12: #{_lambda_.1} parent=0 // pred_region
    _
  $region13: #{_lambda_.1} parent=0 // pred_fallthru
    _
  // Predicated region
  $region14: #{_lambda_.1} parent=0 // pred_check
    _
  $region15: #{_lambda_.1} parent=0 // pred_check_branch
    %19 = sbr.rel (0) target = $region17
  $region16: #{_lambda_.1} parent=0 // pred_region
    _
  $region17: #{_lambda_.1} parent=0 // pred_fallthru
    _
  // Predicated region
  $region18: #{_lambda_.1} parent=0 // pred_check
    _
  $region19: #{_lambda_.1} parent=0 // pred_check_branch
    %21 = sbr.rel (0) target = $region21
  $region20: #{_lambda_.1} parent=0 // pred_region
    _
  $region21: #{_lambda_.1} parent=0 // pred_fallthru
    _
  %v22 = vld [vmem:[%s1] sm:$0xff]
  %v23 = vld [vmem:[%s1 + $0x8] sm:$0xff]
  %v24 = vld [vmem:[%s1 + $0x10] sm:$0xff]
  %v25 = vld [vmem:[%s1 + $0x18] sm:$0xff]
  %v26 = vld [vmem:[%s0] sm:$0xff]
  %v27 = vld [vmem:[%s0 + $0x8] sm:$0xff]
  %v28 = vld [vmem:[%s0 + $0x10] sm:$0xff]
  %v29 = vld [vmem:[%s0 + $0x18] sm:$0xff]
  %vm30 = vcmask 261120
  %v32 = vsel %vm30, 0.0, 0
  %34 = vmatprep.subr.mxu0 0.0
  %35 = vmatpush1.msra.mxu0 0.0
  %36 = vmatprep.subr.mxu0 0.0
  %37 = vmatpush1.msra.mxu0 0.0
  %38 = vmatprep.subr.mxu0 0.0
  %39 = vmatpush1.msra.mxu0 0.0
  %40 = vmatprep.subr.mxu0 0.0
  %41 = vmatpush1.msra.mxu0 0.0
  %42 = vmatprep.subr.mxu0 0.0
  %43 = vmatpush1.msra.mxu0 0.0
  %44 = vmatprep.subr.mxu0 0.0
  %45 = vmatpush1.msra.mxu0 0.0
  %46 = vmatprep.subr.mxu0 0.0
  %47 = vmatpush1.msra.mxu0 0.0
  %48 = vmatprep.subr.mxu0 0.0
  %49 = vmatpush1.msra.mxu0 0.0
  %50 = vmatprep.subr.mxu0 0.0
  %51 = vmatpush1.msra.mxu0 0.0
  %52 = vmatprep.subr.mxu0 0.0
  %53 = vmatpush1.msra.mxu0 0.0
  %54 = vmatprep.subr.mxu0 0.0
  %55 = vmatpush1.msra.mxu0 0.0
  %56 = vmatprep.subr.mxu0 0.0
  %57 = vmatpush1.msra.mxu0 0.0
  %58 = vmatprep.subr.mxu0 0.0
  %59 = vmatpush1.msra.mxu0 %v25
  %60 = vmatprep.subr.mxu0 0.0
  %61 = vmatpush1.msra.mxu0 %v24
  %62 = vmatprep.subr.mxu0 0.0
  %63 = vmatpush1.msra.mxu0 %v23
  %64 = vmatprep.subr.mxu0 0.0
  %65 = vmatpush1.msra.mxu0 %v22
  %66 = vmatprep.subr.mxu0 0.0
  %67 = vmatpush2.msra.mxu0 0.0
  %68 = vmatprep.subr.mxu0 0.0
  %69 = vmatpush2.msra.mxu0 0.0
  %70 = vmatprep.subr.mxu0 0.0
  %71 = vmatpush2.msra.mxu0 0.0
  %72 = vmatprep.subr.mxu0 0.0
  %73 = vmatpush2.msra.mxu0 0.0
  %74 = vmatprep.subr.mxu0 0.0
  %75 = vmatpush2.msra.mxu0 0.0
  %76 = vmatprep.subr.mxu0 0.0
  %77 = vmatpush2.msra.mxu0 0.0
  %78 = vmatprep.subr.mxu0 0.0
  %79 = vmatpush2.msra.mxu0 0.0
  %80 = vmatprep.subr.mxu0 0.0
  %81 = vmatpush2.msra.mxu0 0.0
  %82 = vmatprep.subr.mxu0 0.0
  %83 = vmatpush2.msra.mxu0 0.0
  %84 = vmatprep.subr.mxu0 0.0
  %85 = vmatpush2.msra.mxu0 0.0
  %86 = vmatprep.subr.mxu0 0.0
  %87 = vmatpush2.msra.mxu0 0.0
  %88 = vmatprep.subr.mxu0 0.0
  %89 = vmatpush2.msra.mxu0 0.0
  %90 = vmatprep.subr.mxu0 0.0
  %91 = vmatpush2.msra.mxu0 0.0
  %92 = vmatprep.subr.mxu0 0.0
  %93 = vmatpush2.msra.mxu0 0.0
  %94 = vmatprep.subr.mxu0 0.0
  %95 = vmatpush2.msra.mxu0 0.0
  %96 = vmatprep.subr.mxu0 0.0
  %97 = vmatpush2.msra.mxu0 0.0
  %98 = vmatprep.mubr.f32.mxu0 0.0
  %99 = vmatmul.mubr.f32.gmra.mxu0 %v32
  %v100 = vpop.f32.mrf.mxu0
  %v101 = vadd.f32 0.0, %v100
  %v102 = vpop.f32.mrf.mxu0
  %103 = vmatprep.mubr.f32.mxu0 0.0
  %104 = vmatmul.mubr.f32.gmra.mxu0 %v32
  %v105 = vpop.f32.mrf.mxu0
  %v106 = vadd.f32 0.0, %v105
  %v107 = vpop.f32.mrf.mxu0
  %108 = vmatprep.mubr.f32.mxu0 0.0
  %109 = vmatmul.mubr.f32.gmra.mxu0 %v32
  %v110 = vpop.f32.mrf.mxu0
  %v111 = vadd.f32 0.0, %v110
  %v112 = vpop.f32.mrf.mxu0
  %113 = vmatprep.mubr.f32.mxu0 0.0
  %114 = vmatmul.mubr.f32.gmra.mxu0 %v32
  %v115 = vpop.f32.mrf.mxu0
  %v116 = vadd.f32 0.0, %v115
  %v117 = vpop.f32.mrf.mxu0
  %118 = vdwg.mxu0
  %v119 = vadd.f32 %v26, %v101
  %v120 = vadd.f32 %v27, %v106
  %v121 = vadd.f32 %v28, %v111
  %v122 = vadd.f32 %v29, %v116
  %v123 = vxor.u32 %v119, 2147483648
  %v124 = vxor.u32 %v120, 2147483648
  %v125 = vxor.u32 %v121, 2147483648
  %v126 = vxor.u32 %v122, 2147483648
  %v127 = vmul.f32 %v123, 1.442695
  %v128 = vpow.pop %v127
  %v129 = vmul.f32 %v124, 1.442695
  %v130 = vpow.pop %v129
  %v131 = vmul.f32 %v125, 1.442695
  %v132 = vpow.pop %v131
  %v133 = vmul.f32 %v126, 1.442695
  %v134 = vpow.pop %v133
  %v135 = vadd.f32 %v128, 1.0
  %v136 = vadd.f32 %v130, 1.0
  %v137 = vadd.f32 %v132, 1.0
  %v138 = vadd.f32 %v134, 1.0
  %v139 = vrcp.pop %v135
  %v140 = vmul.f32 1.0, %v139
  %v141 = vrcp.pop %v136
  %v142 = vmul.f32 1.0, %v141
  %v143 = vrcp.pop %v137
  %v144 = vmul.f32 1.0, %v143
  %v145 = vrcp.pop %v138
  %v146 = vmul.f32 1.0, %v145
  %v147 = vtanh.pop %v119
  %v148 = vtanh.pop %v120
  %v149 = vtanh.pop %v121
  %v150 = vtanh.pop %v122
  %v151 = vmul.f32 %v140, 0.0
  %v152 = vmul.f32 %v142, 0.0
  %v153 = vmul.f32 %v144, 0.0
  %v154 = vmul.f32 %v146, 0.0
  %159 = vrot.lane.b32.xlu0 %v147, 64
  %v160 = vpop.permute.xlu0 %159
  %161 = vrot.lane.b32.xlu0 %v148, 64
  %v162 = vpop.permute.xlu0 %161
  %163 = vrot.lane.b32.xlu0 %v149, 64
  %v164 = vpop.permute.xlu0 %163
  %165 = vrot.lane.b32.xlu0 %v150, 64
  %v166 = vpop.permute.xlu0 %165
  %v171 = vmul.f32 %v140, %v160
  %v172 = vmul.f32 %v142, %v162
  %v173 = vmul.f32 %v144, %v164
  %v174 = vmul.f32 %v146, %v166
  %179 = vrot.lane.b32.xlu0 %v171, 32
  %v180 = vpop.permute.xlu0 %179
  %181 = vrot.lane.b32.xlu0 %v172, 32
  %v182 = vpop.permute.xlu0 %181
  %183 = vrot.lane.b32.xlu0 %v173, 32
  %v184 = vpop.permute.xlu0 %183
  %185 = vrot.lane.b32.xlu0 %v174, 32
  %v186 = vpop.permute.xlu0 %185
  %v191 = vadd.f32 %v151, %v180
  %v192 = vadd.f32 %v152, %v182
  %v193 = vadd.f32 %v153, %v184
  %v194 = vadd.f32 %v154, %v186
  %v195 = vtanh.pop %v191
  %v196 = vtanh.pop %v192
  %v197 = vtanh.pop %v193
  %v198 = vtanh.pop %v194
  %203 = vrot.lane.b32.xlu0 %v195, 64
  %v204 = vpop.permute.xlu0 %203
  %205 = vrot.lane.b32.xlu0 %v196, 64
  %v206 = vpop.permute.xlu0 %205
  %207 = vrot.lane.b32.xlu0 %v197, 64
  %v208 = vpop.permute.xlu0 %207
  %209 = vrot.lane.b32.xlu0 %v198, 64
  %v210 = vpop.permute.xlu0 %209
  %v215 = vmul.f32 %v140, %v204
  %v216 = vmul.f32 %v142, %v206
  %v217 = vmul.f32 %v144, %v208
  %v218 = vmul.f32 %v146, %v210
  %223 = vrot.lane.b32.xlu0 %v215, 32
  %v224 = vpop.permute.xlu0 %223
  %225 = vrot.lane.b32.xlu0 %v216, 32
  %v226 = vpop.permute.xlu0 %225
  %227 = vrot.lane.b32.xlu0 %v217, 32
  %v228 = vpop.permute.xlu0 %227
  %229 = vrot.lane.b32.xlu0 %v218, 32
  %v230 = vpop.permute.xlu0 %229
  %235 = vst.msk [vmem:[%s5] sm:$0xff] %vm30, %v224
  %236 = vst.msk [vmem:[%s5 + $0x8] sm:$0xff] %vm30, %v226
  %237 = vst.msk [vmem:[%s5 + $0x10] sm:$0xff] %vm30, %v228
  %238 = vst.msk [vmem:[%s5 + $0x18] sm:$0xff] %vm30, %v230
  %s239 = scalar_lea.vmem %s0, 32
  %v240 = vld [vmem:[%s239] sm:$0xff]
  %v241 = vld [vmem:[%s239 + $0x8] sm:$0xff]
  %v242 = vld [vmem:[%s239 + $0x10] sm:$0xff]
  %v243 = vld [vmem:[%s239 + $0x18] sm:$0xff]
  %v244 = vsel %vm30, %v224, 0
  %v246 = vsel %vm30, %v226, 0
  %v248 = vsel %vm30, %v228, 0
  %v250 = vsel %vm30, %v230, 0
  %252 = vmatprep.subr.mxu0 0.0
  %253 = vmatpush1.msra.mxu0 0.0
  %254 = vmatprep.subr.mxu0 0.0
  %255 = vmatpush1.msra.mxu0 0.0
  %256 = vmatprep.subr.mxu0 0.0
  %257 = vmatpush1.msra.mxu0 0.0
  %258 = vmatprep.subr.mxu0 0.0
  %259 = vmatpush1.msra.mxu0 0.0
  %260 = vmatprep.subr.mxu0 0.0
  %261 = vmatpush1.msra.mxu0 0.0
  %262 = vmatprep.subr.mxu0 0.0
  %263 = vmatpush1.msra.mxu0 0.0
  %264 = vmatprep.subr.mxu0 0.0
  %265 = vmatpush1.msra.mxu0 0.0
  %266 = vmatprep.subr.mxu0 0.0
  %267 = vmatpush1.msra.mxu0 0.0
  %268 = vmatprep.subr.mxu0 0.0
  %269 = vmatpush1.msra.mxu0 0.0
  %270 = vmatprep.subr.mxu0 0.0
  %271 = vmatpush1.msra.mxu0 0.0
  %272 = vmatprep.subr.mxu0 0.0
  %273 = vmatpush1.msra.mxu0 0.0
  %274 = vmatprep.subr.mxu0 0.0
  %275 = vmatpush1.msra.mxu0 0.0
  %276 = vmatprep.subr.mxu0 0.0
  %277 = vmatpush1.msra.mxu0 %v25
  %278 = vmatprep.subr.mxu0 0.0
  %279 = vmatpush1.msra.mxu0 %v24
  %280 = vmatprep.subr.mxu0 0.0
  %281 = vmatpush1.msra.mxu0 %v23
  %282 = vmatprep.subr.mxu0 0.0
  %283 = vmatpush1.msra.mxu0 %v22
  %284 = vmatprep.subr.mxu0 0.0
  %285 = vmatpush2.msra.mxu0 0.0
  %286 = vmatprep.subr.mxu0 0.0
  %287 = vmatpush2.msra.mxu0 0.0
  %288 = vmatprep.subr.mxu0 0.0
  %289 = vmatpush2.msra.mxu0 0.0
  %290 = vmatprep.subr.mxu0 0.0
  %291 = vmatpush2.msra.mxu0 0.0
  %292 = vmatprep.subr.mxu0 0.0
  %293 = vmatpush2.msra.mxu0 0.0
  %294 = vmatprep.subr.mxu0 0.0
  %295 = vmatpush2.msra.mxu0 0.0
  %296 = vmatprep.subr.mxu0 0.0
  %297 = vmatpush2.msra.mxu0 0.0
  %298 = vmatprep.subr.mxu0 0.0
  %299 = vmatpush2.msra.mxu0 0.0
  %300 = vmatprep.subr.mxu0 0.0
  %301 = vmatpush2.msra.mxu0 0.0
  %302 = vmatprep.subr.mxu0 0.0
  %303 = vmatpush2.msra.mxu0 0.0
  %304 = vmatprep.subr.mxu0 0.0
  %305 = vmatpush2.msra.mxu0 0.0
  %306 = vmatprep.subr.mxu0 0.0
  %307 = vmatpush2.msra.mxu0 0.0
  %308 = vmatprep.subr.mxu0 0.0
  %309 = vmatpush2.msra.mxu0 0.0
  %310 = vmatprep.subr.mxu0 0.0
  %311 = vmatpush2.msra.mxu0 0.0
  %312 = vmatprep.subr.mxu0 0.0
  %313 = vmatpush2.msra.mxu0 0.0
  %314 = vmatprep.subr.mxu0 0.0
  %315 = vmatpush2.msra.mxu0 0.0
  %316 = vmatprep.mubr.f32.mxu0 0.0
  %317 = vmatmul.mubr.f32.gmra.mxu0 %v244
  %v318 = vpop.f32.mrf.mxu0
  %v319 = vadd.f32 0.0, %v318
  %v320 = vpop.f32.mrf.mxu0
  %321 = vmatprep.mubr.f32.mxu0 0.0
  %322 = vmatmul.mubr.f32.gmra.mxu0 %v246
  %v323 = vpop.f32.mrf.mxu0
  %v324 = vadd.f32 0.0, %v323
  %v325 = vpop.f32.mrf.mxu0
  %326 = vmatprep.mubr.f32.mxu0 0.0
  %327 = vmatmul.mubr.f32.gmra.mxu0 %v248
  %v328 = vpop.f32.mrf.mxu0
  %v329 = vadd.f32 0.0, %v328
  %v330 = vpop.f32.mrf.mxu0
  %331 = vmatprep.mubr.f32.mxu0 0.0
  %332 = vmatmul.mubr.f32.gmra.mxu0 %v250
  %v333 = vpop.f32.mrf.mxu0
  %v334 = vadd.f32 0.0, %v333
  %v335 = vpop.f32.mrf.mxu0
  %336 = vdwg.mxu0
  %v337 = vadd.f32 %v240, %v319
  %v338 = vadd.f32 %v241, %v324
  %v339 = vadd.f32 %v242, %v329
  %v340 = vadd.f32 %v243, %v334
  %v341 = vxor.u32 %v337, 2147483648
  %v342 = vxor.u32 %v338, 2147483648
  %v343 = vxor.u32 %v339, 2147483648
  %v344 = vxor.u32 %v340, 2147483648
  %v345 = vmul.f32 %v341, 1.442695
  %v346 = vpow.pop %v345
  %v347 = vmul.f32 %v342, 1.442695
  %v348 = vpow.pop %v347
  %v349 = vmul.f32 %v343, 1.442695
  %v350 = vpow.pop %v349
  %v351 = vmul.f32 %v344, 1.442695
  %v352 = vpow.pop %v351
  %v353 = vadd.f32 %v346, 1.0
  %v354 = vadd.f32 %v348, 1.0
  %v355 = vadd.f32 %v350, 1.0
  %v356 = vadd.f32 %v352, 1.0
  %v357 = vrcp.pop %v353
  %v358 = vmul.f32 1.0, %v357
  %v359 = vrcp.pop %v354
  %v360 = vmul.f32 1.0, %v359
  %v361 = vrcp.pop %v355
  %v362 = vmul.f32 1.0, %v361
  %v363 = vrcp.pop %v356
  %v364 = vmul.f32 1.0, %v363
  %v365 = vtanh.pop %v337
  %v366 = vtanh.pop %v338
  %v367 = vtanh.pop %v339
  %v368 = vtanh.pop %v340
  %v369 = vmul.f32 %v358, %v191
  %v370 = vmul.f32 %v360, %v192
  %v371 = vmul.f32 %v362, %v193
  %v372 = vmul.f32 %v364, %v194
  %377 = vrot.lane.b32.xlu0 %v365, 64
  %v378 = vpop.permute.xlu0 %377
  %379 = vrot.lane.b32.xlu0 %v366, 64
  %v380 = vpop.permute.xlu0 %379
  %381 = vrot.lane.b32.xlu0 %v367, 64
  %v382 = vpop.permute.xlu0 %381
  %383 = vrot.lane.b32.xlu0 %v368, 64
  %v384 = vpop.permute.xlu0 %383
  %v389 = vmul.f32 %v358, %v378
  %v390 = vmul.f32 %v360, %v380
  %v391 = vmul.f32 %v362, %v382
  %v392 = vmul.f32 %v364, %v384
  %397 = vrot.lane.b32.xlu0 %v389, 32
  %v398 = vpop.permute.xlu0 %397
  %399 = vrot.lane.b32.xlu0 %v390, 32
  %v400 = vpop.permute.xlu0 %399
  %401 = vrot.lane.b32.xlu0 %v391, 32
  %v402 = vpop.permute.xlu0 %401
  %403 = vrot.lane.b32.xlu0 %v392, 32
  %v404 = vpop.permute.xlu0 %403
  %v409 = vadd.f32 %v369, %v398
  %v410 = vadd.f32 %v370, %v400
  %v411 = vadd.f32 %v371, %v402
  %v412 = vadd.f32 %v372, %v404
  %v413 = vtanh.pop %v409
  %v414 = vtanh.pop %v410
  %v415 = vtanh.pop %v411
  %v416 = vtanh.pop %v412
  %421 = vrot.lane.b32.xlu0 %v413, 64
  %v422 = vpop.permute.xlu0 %421
  %423 = vrot.lane.b32.xlu0 %v414, 64
  %v424 = vpop.permute.xlu0 %423
  %425 = vrot.lane.b32.xlu0 %v415, 64
  %v426 = vpop.permute.xlu0 %425
  %427 = vrot.lane.b32.xlu0 %v416, 64
  %v428 = vpop.permute.xlu0 %427
  %v433 = vmul.f32 %v358, %v422
  %v434 = vmul.f32 %v360, %v424
  %v435 = vmul.f32 %v362, %v426
  %v436 = vmul.f32 %v364, %v428
  %441 = vrot.lane.b32.xlu0 %v433, 32
  %v442 = vpop.permute.xlu0 %441
  %443 = vrot.lane.b32.xlu0 %v434, 32
  %v444 = vpop.permute.xlu0 %443
  %445 = vrot.lane.b32.xlu0 %v435, 32
  %v446 = vpop.permute.xlu0 %445
  %447 = vrot.lane.b32.xlu0 %v436, 32
  %v448 = vpop.permute.xlu0 %447
  %s453 = scalar_lea.vmem %s5, 32
  %454 = vst.msk [vmem:[%s453] sm:$0xff] %vm30, %v442
  %455 = vst.msk [vmem:[%s453 + $0x8] sm:$0xff] %vm30, %v444
  %456 = vst.msk [vmem:[%s453 + $0x10] sm:$0xff] %vm30, %v446
  %457 = vst.msk [vmem:[%s453 + $0x18] sm:$0xff] %vm30, %v448
  %s458 = scalar_lea.vmem %s0, 64
  %v459 = vld [vmem:[%s458] sm:$0xff]
  %v460 = vld [vmem:[%s458 + $0x8] sm:$0xff]
  %v461 = vld [vmem:[%s458 + $0x10] sm:$0xff]
  %v462 = vld [vmem:[%s458 + $0x18] sm:$0xff]
  %v463 = vsel %vm30, %v442, 0
  %v465 = vsel %vm30, %v444, 0
  %v467 = vsel %vm30, %v446, 0
  %v469 = vsel %vm30, %v448, 0
  %471 = vmatprep.subr.mxu0 0.0
  %472 = vmatpush1.msra.mxu0 0.0
  %473 = vmatprep.subr.mxu0 0.0
  %474 = vmatpush1.msra.mxu0 0.0
  %475 = vmatprep.subr.mxu0 0.0
  %476 = vmatpush1.msra.mxu0 0.0
  %477 = vmatprep.subr.mxu0 0.0
  %478 = vmatpush1.msra.mxu0 0.0
  %479 = vmatprep.subr.mxu0 0.0
  %480 = vmatpush1.msra.mxu0 0.0
  %481 = vmatprep.subr.mxu0 0.0
  %482 = vmatpush1.msra.mxu0 0.0
  %483 = vmatprep.subr.mxu0 0.0
  %484 = vmatpush1.msra.mxu0 0.0
  %485 = vmatprep.subr.mxu0 0.0
  %486 = vmatpush1.msra.mxu0 0.0
  %487 = vmatprep.subr.mxu0 0.0
  %488 = vmatpush1.msra.mxu0 0.0
  %489 = vmatprep.subr.mxu0 0.0
  %490 = vmatpush1.msra.mxu0 0.0
  %491 = vmatprep.subr.mxu0 0.0
  %492 = vmatpush1.msra.mxu0 0.0
  %493 = vmatprep.subr.mxu0 0.0
  %494 = vmatpush1.msra.mxu0 0.0
  %495 = vmatprep.subr.mxu0 0.0
  %496 = vmatpush1.msra.mxu0 %v25
  %497 = vmatprep.subr.mxu0 0.0
  %498 = vmatpush1.msra.mxu0 %v24
  %499 = vmatprep.subr.mxu0 0.0
  %500 = vmatpush1.msra.mxu0 %v23
  %501 = vmatprep.subr.mxu0 0.0
  %502 = vmatpush1.msra.mxu0 %v22
  %503 = vmatprep.subr.mxu0 0.0
  %504 = vmatpush2.msra.mxu0 0.0
  %505 = vmatprep.subr.mxu0 0.0
  %506 = vmatpush2.msra.mxu0 0.0
  %507 = vmatprep.subr.mxu0 0.0
  %508 = vmatpush2.msra.mxu0 0.0
  %509 = vmatprep.subr.mxu0 0.0
  %510 = vmatpush2.msra.mxu0 0.0
  %511 = vmatprep.subr.mxu0 0.0
  %512 = vmatpush2.msra.mxu0 0.0
  %513 = vmatprep.subr.mxu0 0.0
  %514 = vmatpush2.msra.mxu0 0.0
  %515 = vmatprep.subr.mxu0 0.0
  %516 = vmatpush2.msra.mxu0 0.0
  %517 = vmatprep.subr.mxu0 0.0
  %518 = vmatpush2.msra.mxu0 0.0
  %519 = vmatprep.subr.mxu0 0.0
  %520 = vmatpush2.msra.mxu0 0.0
  %521 = vmatprep.subr.mxu0 0.0
  %522 = vmatpush2.msra.mxu0 0.0
  %523 = vmatprep.subr.mxu0 0.0
  %524 = vmatpush2.msra.mxu0 0.0
  %525 = vmatprep.subr.mxu0 0.0
  %526 = vmatpush2.msra.mxu0 0.0
  %527 = vmatprep.subr.mxu0 0.0
  %528 = vmatpush2.msra.mxu0 0.0
  %529 = vmatprep.subr.mxu0 0.0
  %530 = vmatpush2.msra.mxu0 0.0
  %531 = vmatprep.subr.mxu0 0.0
  %532 = vmatpush2.msra.mxu0 0.0
  %533 = vmatprep.subr.mxu0 0.0
  %534 = vmatpush2.msra.mxu0 0.0
  %535 = vmatprep.mubr.f32.mxu0 0.0
  %536 = vmatmul.mubr.f32.gmra.mxu0 %v463
  %v537 = vpop.f32.mrf.mxu0
  %v538 = vadd.f32 0.0, %v537
  %v539 = vpop.f32.mrf.mxu0
  %540 = vmatprep.mubr.f32.mxu0 0.0
  %541 = vmatmul.mubr.f32.gmra.mxu0 %v465
  %v542 = vpop.f32.mrf.mxu0
  %v543 = vadd.f32 0.0, %v542
  %v544 = vpop.f32.mrf.mxu0
  %545 = vmatprep.mubr.f32.mxu0 0.0
  %546 = vmatmul.mubr.f32.gmra.mxu0 %v467
  %v547 = vpop.f32.mrf.mxu0
  %v548 = vadd.f32 0.0, %v547
  %v549 = vpop.f32.mrf.mxu0
  %550 = vmatprep.mubr.f32.mxu0 0.0
  %551 = vmatmul.mubr.f32.gmra.mxu0 %v469
  %v552 = vpop.f32.mrf.mxu0
  %v553 = vadd.f32 0.0, %v552
  %v554 = vpop.f32.mrf.mxu0
  %555 = vdwg.mxu0
  %v556 = vadd.f32 %v459, %v538
  %v557 = vadd.f32 %v460, %v543
  %v558 = vadd.f32 %v461, %v548
  %v559 = vadd.f32 %v462, %v553
  %v560 = vxor.u32 %v556, 2147483648
  %v561 = vxor.u32 %v557, 2147483648
  %v562 = vxor.u32 %v558, 2147483648
  %v563 = vxor.u32 %v559, 2147483648
  %v564 = vmul.f32 %v560, 1.442695
  %v565 = vpow.pop %v564
  %v566 = vmul.f32 %v561, 1.442695
  %v567 = vpow.pop %v566
  %v568 = vmul.f32 %v562, 1.442695
  %v569 = vpow.pop %v568
  %v570 = vmul.f32 %v563, 1.442695
  %v571 = vpow.pop %v570
  %v572 = vadd.f32 %v565, 1.0
  %v573 = vadd.f32 %v567, 1.0
  %v574 = vadd.f32 %v569, 1.0
  %v575 = vadd.f32 %v571, 1.0
  %v576 = vrcp.pop %v572
  %v577 = vmul.f32 1.0, %v576
  %v578 = vrcp.pop %v573
  %v579 = vmul.f32 1.0, %v578
  %v580 = vrcp.pop %v574
  %v581 = vmul.f32 1.0, %v580
  %v582 = vrcp.pop %v575
  %v583 = vmul.f32 1.0, %v582
  %v584 = vtanh.pop %v556
  %v585 = vtanh.pop %v557
  %v586 = vtanh.pop %v558
  %v587 = vtanh.pop %v559
  %v588 = vmul.f32 %v577, %v409
  %v589 = vmul.f32 %v579, %v410
  %v590 = vmul.f32 %v581, %v411
  %v591 = vmul.f32 %v583, %v412
  %596 = vrot.lane.b32.xlu0 %v584, 64
  %v597 = vpop.permute.xlu0 %596
  %598 = vrot.lane.b32.xlu0 %v585, 64
  %v599 = vpop.permute.xlu0 %598
  %600 = vrot.lane.b32.xlu0 %v586, 64
  %v601 = vpop.permute.xlu0 %600
  %602 = vrot.lane.b32.xlu0 %v587, 64
  %v603 = vpop.permute.xlu0 %602
  %v608 = vmul.f32 %v577, %v597
  %v609 = vmul.f32 %v579, %v599
  %v610 = vmul.f32 %v581, %v601
  %v611 = vmul.f32 %v583, %v603
  %616 = vrot.lane.b32.xlu0 %v608, 32
  %v617 = vpop.permute.xlu0 %616
  %618 = vrot.lane.b32.xlu0 %v609, 32
  %v619 = vpop.permute.xlu0 %618
  %620 = vrot.lane.b32.xlu0 %v610, 32
  %v621 = vpop.permute.xlu0 %620
  %622 = vrot.lane.b32.xlu0 %v611, 32
  %v623 = vpop.permute.xlu0 %622
  %v628 = vadd.f32 %v588, %v617
  %v629 = vadd.f32 %v589, %v619
  %v630 = vadd.f32 %v590, %v621
  %v631 = vadd.f32 %v591, %v623
  %v632 = vtanh.pop %v628
  %v633 = vtanh.pop %v629
  %v634 = vtanh.pop %v630
  %v635 = vtanh.pop %v631
  %640 = vrot.lane.b32.xlu0 %v632, 64
  %v641 = vpop.permute.xlu0 %640
  %642 = vrot.lane.b32.xlu0 %v633, 64
  %v643 = vpop.permute.xlu0 %642
  %644 = vrot.lane.b32.xlu0 %v634, 64
  %v645 = vpop.permute.xlu0 %644
  %646 = vrot.lane.b32.xlu0 %v635, 64
  %v647 = vpop.permute.xlu0 %646
  %v652 = vmul.f32 %v577, %v641
  %v653 = vmul.f32 %v579, %v643
  %v654 = vmul.f32 %v581, %v645
  %v655 = vmul.f32 %v583, %v647
  %660 = vrot.lane.b32.xlu0 %v652, 32
  %v661 = vpop.permute.xlu0 %660
  %662 = vrot.lane.b32.xlu0 %v653, 32
  %v663 = vpop.permute.xlu0 %662
  %664 = vrot.lane.b32.xlu0 %v654, 32
  %v665 = vpop.permute.xlu0 %664
  %666 = vrot.lane.b32.xlu0 %v655, 32
  %v667 = vpop.permute.xlu0 %666
  %s672 = scalar_lea.vmem %s5, 64
  %673 = vst.msk [vmem:[%s672] sm:$0xff] %vm30, %v661
  %674 = vst.msk [vmem:[%s672 + $0x8] sm:$0xff] %vm30, %v663
  %675 = vst.msk [vmem:[%s672 + $0x10] sm:$0xff] %vm30, %v665
  %676 = vst.msk [vmem:[%s672 + $0x18] sm:$0xff] %vm30, %v667
  %s677 = scalar_lea.vmem %s0, 96
  %v678 = vld [vmem:[%s677] sm:$0xff]
  %v679 = vld [vmem:[%s677 + $0x8] sm:$0xff]
  %v680 = vld [vmem:[%s677 + $0x10] sm:$0xff]
  %v681 = vld [vmem:[%s677 + $0x18] sm:$0xff]
  %v682 = vsel %vm30, %v661, 0
  %v684 = vsel %vm30, %v663, 0
  %v686 = vsel %vm30, %v665, 0
  %v688 = vsel %vm30, %v667, 0
  %690 = vmatprep.subr.mxu0 0.0
  %691 = vmatpush1.msra.mxu0 0.0
  %692 = vmatprep.subr.mxu0 0.0
  %693 = vmatpush1.msra.mxu0 0.0
  %694 = vmatprep.subr.mxu0 0.0
  %695 = vmatpush1.msra.mxu0 0.0
  %696 = vmatprep.subr.mxu0 0.0
  %697 = vmatpush1.msra.mxu0 0.0
  %698 = vmatprep.subr.mxu0 0.0
  %699 = vmatpush1.msra.mxu0 0.0
  %700 = vmatprep.subr.mxu0 0.0
  %701 = vmatpush1.msra.mxu0 0.0
  %702 = vmatprep.subr.mxu0 0.0
  %703 = vmatpush1.msra.mxu0 0.0
  %704 = vmatprep.subr.mxu0 0.0
  %705 = vmatpush1.msra.mxu0 0.0
  %706 = vmatprep.subr.mxu0 0.0
  %707 = vmatpush1.msra.mxu0 0.0
  %708 = vmatprep.subr.mxu0 0.0
  %709 = vmatpush1.msra.mxu0 0.0
  %710 = vmatprep.subr.mxu0 0.0
  %711 = vmatpush1.msra.mxu0 0.0
  %712 = vmatprep.subr.mxu0 0.0
  %713 = vmatpush1.msra.mxu0 0.0
  %714 = vmatprep.subr.mxu0 0.0
  %715 = vmatpush1.msra.mxu0 %v25
  %716 = vmatprep.subr.mxu0 0.0
  %717 = vmatpush1.msra.mxu0 %v24
  %718 = vmatprep.subr.mxu0 0.0
  %719 = vmatpush1.msra.mxu0 %v23
  %720 = vmatprep.subr.mxu0 0.0
  %721 = vmatpush1.msra.mxu0 %v22
  %722 = vmatprep.subr.mxu0 0.0
  %723 = vmatpush2.msra.mxu0 0.0
  %724 = vmatprep.subr.mxu0 0.0
  %725 = vmatpush2.msra.mxu0 0.0
  %726 = vmatprep.subr.mxu0 0.0
  %727 = vmatpush2.msra.mxu0 0.0
  %728 = vmatprep.subr.mxu0 0.0
  %729 = vmatpush2.msra.mxu0 0.0
  %730 = vmatprep.subr.mxu0 0.0
  %731 = vmatpush2.msra.mxu0 0.0
  %732 = vmatprep.subr.mxu0 0.0
  %733 = vmatpush2.msra.mxu0 0.0
  %734 = vmatprep.subr.mxu0 0.0
  %735 = vmatpush2.msra.mxu0 0.0
  %736 = vmatprep.subr.mxu0 0.0
  %737 = vmatpush2.msra.mxu0 0.0
  %738 = vmatprep.subr.mxu0 0.0
  %739 = vmatpush2.msra.mxu0 0.0
  %740 = vmatprep.subr.mxu0 0.0
  %741 = vmatpush2.msra.mxu0 0.0
  %742 = vmatprep.subr.mxu0 0.0
  %743 = vmatpush2.msra.mxu0 0.0
  %744 = vmatprep.subr.mxu0 0.0
  %745 = vmatpush2.msra.mxu0 0.0
  %746 = vmatprep.subr.mxu0 0.0
  %747 = vmatpush2.msra.mxu0 0.0
  %748 = vmatprep.subr.mxu0 0.0
  %749 = vmatpush2.msra.mxu0 0.0
  %750 = vmatprep.subr.mxu0 0.0
  %751 = vmatpush2.msra.mxu0 0.0
  %752 = vmatprep.subr.mxu0 0.0
  %753 = vmatpush2.msra.mxu0 0.0
  %754 = vmatprep.mubr.f32.mxu0 0.0
  %755 = vmatmul.mubr.f32.gmra.mxu0 %v682
  %v756 = vpop.f32.mrf.mxu0
  %v757 = vadd.f32 0.0, %v756
  %v758 = vpop.f32.mrf.mxu0
  %759 = vmatprep.mubr.f32.mxu0 0.0
  %760 = vmatmul.mubr.f32.gmra.mxu0 %v684
  %v761 = vpop.f32.mrf.mxu0
  %v762 = vadd.f32 0.0, %v761
  %v763 = vpop.f32.mrf.mxu0
  %764 = vmatprep.mubr.f32.mxu0 0.0
  %765 = vmatmul.mubr.f32.gmra.mxu0 %v686
  %v766 = vpop.f32.mrf.mxu0
  %v767 = vadd.f32 0.0, %v766
  %v768 = vpop.f32.mrf.mxu0
  %769 = vmatprep.mubr.f32.mxu0 0.0
  %770 = vmatmul.mubr.f32.gmra.mxu0 %v688
  %v771 = vpop.f32.mrf.mxu0
  %v772 = vadd.f32 0.0, %v771
  %v773 = vpop.f32.mrf.mxu0
  %774 = vdwg.mxu0
  %v775 = vadd.f32 %v678, %v757
  %v776 = vadd.f32 %v679, %v762
  %v777 = vadd.f32 %v680, %v767
  %v778 = vadd.f32 %v681, %v772
  %v779 = vxor.u32 %v775, 2147483648
  %v780 = vxor.u32 %v776, 2147483648
  %v781 = vxor.u32 %v777, 2147483648
  %v782 = vxor.u32 %v778, 2147483648
  %v783 = vmul.f32 %v779, 1.442695
  %v784 = vpow.pop %v783
  %v785 = vmul.f32 %v780, 1.442695
  %v786 = vpow.pop %v785
  %v787 = vmul.f32 %v781, 1.442695
  %v788 = vpow.pop %v787
  %v789 = vmul.f32 %v782, 1.442695
  %v790 = vpow.pop %v789
  %v791 = vadd.f32 %v784, 1.0
  %v792 = vadd.f32 %v786, 1.0
  %v793 = vadd.f32 %v788, 1.0
  %v794 = vadd.f32 %v790, 1.0
  %v795 = vrcp.pop %v791
  %v796 = vmul.f32 1.0, %v795
  %v797 = vrcp.pop %v792
  %v798 = vmul.f32 1.0, %v797
  %v799 = vrcp.pop %v793
  %v800 = vmul.f32 1.0, %v799
  %v801 = vrcp.pop %v794
  %v802 = vmul.f32 1.0, %v801
  %v803 = vtanh.pop %v775
  %v804 = vtanh.pop %v776
  %v805 = vtanh.pop %v777
  %v806 = vtanh.pop %v778
  %v807 = vmul.f32 %v796, %v628
  %v808 = vmul.f32 %v798, %v629
  %v809 = vmul.f32 %v800, %v630
  %v810 = vmul.f32 %v802, %v631
  %815 = vrot.lane.b32.xlu0 %v803, 64
  %v816 = vpop.permute.xlu0 %815
  %817 = vrot.lane.b32.xlu0 %v804, 64
  %v818 = vpop.permute.xlu0 %817
  %819 = vrot.lane.b32.xlu0 %v805, 64
  %v820 = vpop.permute.xlu0 %819
  %821 = vrot.lane.b32.xlu0 %v806, 64
  %v822 = vpop.permute.xlu0 %821
  %v827 = vmul.f32 %v796, %v816
  %v828 = vmul.f32 %v798, %v818
  %v829 = vmul.f32 %v800, %v820
  %v830 = vmul.f32 %v802, %v822
  %835 = vrot.lane.b32.xlu0 %v827, 32
  %v836 = vpop.permute.xlu0 %835
  %837 = vrot.lane.b32.xlu0 %v828, 32
  %v838 = vpop.permute.xlu0 %837
  %839 = vrot.lane.b32.xlu0 %v829, 32
  %v840 = vpop.permute.xlu0 %839
  %841 = vrot.lane.b32.xlu0 %v830, 32
  %v842 = vpop.permute.xlu0 %841
  %v847 = vadd.f32 %v807, %v836
  %v848 = vadd.f32 %v808, %v838
  %v849 = vadd.f32 %v809, %v840
  %v850 = vadd.f32 %v810, %v842
  %v851 = vtanh.pop %v847
  %v852 = vtanh.pop %v848
  %v853 = vtanh.pop %v849
  %v854 = vtanh.pop %v850
  %859 = vrot.lane.b32.xlu0 %v851, 64
  %v860 = vpop.permute.xlu0 %859
  %861 = vrot.lane.b32.xlu0 %v852, 64
  %v862 = vpop.permute.xlu0 %861
  %863 = vrot.lane.b32.xlu0 %v853, 64
  %v864 = vpop.permute.xlu0 %863
  %865 = vrot.lane.b32.xlu0 %v854, 64
  %v866 = vpop.permute.xlu0 %865
  %v871 = vmul.f32 %v796, %v860
  %v872 = vmul.f32 %v798, %v862
  %v873 = vmul.f32 %v800, %v864
  %v874 = vmul.f32 %v802, %v866
  %879 = vrot.lane.b32.xlu0 %v871, 32
  %v880 = vpop.permute.xlu0 %879
  %881 = vrot.lane.b32.xlu0 %v872, 32
  %v882 = vpop.permute.xlu0 %881
  %883 = vrot.lane.b32.xlu0 %v873, 32
  %v884 = vpop.permute.xlu0 %883
  %885 = vrot.lane.b32.xlu0 %v874, 32
  %v886 = vpop.permute.xlu0 %885
  %s891 = scalar_lea.vmem %s5, 96
  %892 = vst.msk [vmem:[%s891] sm:$0xff] %vm30, %v880
  %893 = vst.msk [vmem:[%s891 + $0x8] sm:$0xff] %vm30, %v882
  %894 = vst.msk [vmem:[%s891 + $0x10] sm:$0xff] %vm30, %v884
  %895 = vst.msk [vmem:[%s891 + $0x18] sm:$0xff] %vm30, %v886
  %s896 = scalar_lea.vmem %s0, 128
  %v897 = vld [vmem:[%s896] sm:$0xff]
  %v898 = vld [vmem:[%s896 + $0x8] sm:$0xff]
  %v899 = vld [vmem:[%s896 + $0x10] sm:$0xff]
  %v900 = vld [vmem:[%s896 + $0x18] sm:$0xff]
  %v901 = vsel %vm30, %v880, 0
  %v903 = vsel %vm30, %v882, 0
  %v905 = vsel %vm30, %v884, 0
  %v907 = vsel %vm30, %v886, 0
  %909 = vmatprep.subr.mxu0 0.0
  %910 = vmatpush1.msra.mxu0 0.0
  %911 = vmatprep.subr.mxu0 0.0
  %912 = vmatpush1.msra.mxu0 0.0
  %913 = vmatprep.subr.mxu0 0.0
  %914 = vmatpush1.msra.mxu0 0.0
  %915 = vmatprep.subr.mxu0 0.0
  %916 = vmatpush1.msra.mxu0 0.0
  %917 = vmatprep.subr.mxu0 0.0
  %918 = vmatpush1.msra.mxu0 0.0
  %919 = vmatprep.subr.mxu0 0.0
  %920 = vmatpush1.msra.mxu0 0.0
  %921 = vmatprep.subr.mxu0 0.0
  %922 = vmatpush1.msra.mxu0 0.0
  %923 = vmatprep.subr.mxu0 0.0
  %924 = vmatpush1.msra.mxu0 0.0
  %925 = vmatprep.subr.mxu0 0.0
  %926 = vmatpush1.msra.mxu0 0.0
  %927 = vmatprep.subr.mxu0 0.0
  %928 = vmatpush1.msra.mxu0 0.0
  %929 = vmatprep.subr.mxu0 0.0
  %930 = vmatpush1.msra.mxu0 0.0
  %931 = vmatprep.subr.mxu0 0.0
  %932 = vmatpush1.msra.mxu0 0.0
  %933 = vmatprep.subr.mxu0 0.0
  %934 = vmatpush1.msra.mxu0 %v25
  %935 = vmatprep.subr.mxu0 0.0
  %936 = vmatpush1.msra.mxu0 %v24
  %937 = vmatprep.subr.mxu0 0.0
  %938 = vmatpush1.msra.mxu0 %v23
  %939 = vmatprep.subr.mxu0 0.0
  %940 = vmatpush1.msra.mxu0 %v22
  %941 = vmatprep.subr.mxu0 0.0
  %942 = vmatpush2.msra.mxu0 0.0
  %943 = vmatprep.subr.mxu0 0.0
  %944 = vmatpush2.msra.mxu0 0.0
  %945 = vmatprep.subr.mxu0 0.0
  %946 = vmatpush2.msra.mxu0 0.0
  %947 = vmatprep.subr.mxu0 0.0
  %948 = vmatpush2.msra.mxu0 0.0
  %949 = vmatprep.subr.mxu0 0.0
  %950 = vmatpush2.msra.mxu0 0.0
  %951 = vmatprep.subr.mxu0 0.0
  %952 = vmatpush2.msra.mxu0 0.0
  %953 = vmatprep.subr.mxu0 0.0
  %954 = vmatpush2.msra.mxu0 0.0
  %955 = vmatprep.subr.mxu0 0.0
  %956 = vmatpush2.msra.mxu0 0.0
  %957 = vmatprep.subr.mxu0 0.0
  %958 = vmatpush2.msra.mxu0 0.0
  %959 = vmatprep.subr.mxu0 0.0
  %960 = vmatpush2.msra.mxu0 0.0
  %961 = vmatprep.subr.mxu0 0.0
  %962 = vmatpush2.msra.mxu0 0.0
  %963 = vmatprep.subr.mxu0 0.0
  %964 = vmatpush2.msra.mxu0 0.0
  %965 = vmatprep.subr.mxu0 0.0
  %966 = vmatpush2.msra.mxu0 0.0
  %967 = vmatprep.subr.mxu0 0.0
  %968 = vmatpush2.msra.mxu0 0.0
  %969 = vmatprep.subr.mxu0 0.0
  %970 = vmatpush2.msra.mxu0 0.0
  %971 = vmatprep.subr.mxu0 0.0
  %972 = vmatpush2.msra.mxu0 0.0
  %973 = vmatprep.mubr.f32.mxu0 0.0
  %974 = vmatmul.mubr.f32.gmra.mxu0 %v901
  %v975 = vpop.f32.mrf.mxu0
  %v976 = vadd.f32 0.0, %v975
  %v977 = vpop.f32.mrf.mxu0
  %978 = vmatprep.mubr.f32.mxu0 0.0
  %979 = vmatmul.mubr.f32.gmra.mxu0 %v903
  %v980 = vpop.f32.mrf.mxu0
  %v981 = vadd.f32 0.0, %v980
  %v982 = vpop.f32.mrf.mxu0
  %983 = vmatprep.mubr.f32.mxu0 0.0
  %984 = vmatmul.mubr.f32.gmra.mxu0 %v905
  %v985 = vpop.f32.mrf.mxu0
  %v986 = vadd.f32 0.0, %v985
  %v987 = vpop.f32.mrf.mxu0
  %988 = vmatprep.mubr.f32.mxu0 0.0
  %989 = vmatmul.mubr.f32.gmra.mxu0 %v907
  %v990 = vpop.f32.mrf.mxu0
  %v991 = vadd.f32 0.0, %v990
  %v992 = vpop.f32.mrf.mxu0
  %993 = vdwg.mxu0
  %v994 = vadd.f32 %v897, %v976
  %v995 = vadd.f32 %v898, %v981
  %v996 = vadd.f32 %v899, %v986
  %v997 = vadd.f32 %v900, %v991
  %v998 = vxor.u32 %v994, 2147483648
  %v999 = vxor.u32 %v995, 2147483648
  %v1000 = vxor.u32 %v996, 2147483648
  %v1001 = vxor.u32 %v997, 2147483648
  %v1002 = vmul.f32 %v998, 1.442695
  %v1003 = vpow.pop %v1002
  %v1004 = vmul.f32 %v999, 1.442695
  %v1005 = vpow.pop %v1004
  %v1006 = vmul.f32 %v1000, 1.442695
  %v1007 = vpow.pop %v1006
  %v1008 = vmul.f32 %v1001, 1.442695
  %v1009 = vpow.pop %v1008
  %v1010 = vadd.f32 %v1003, 1.0
  %v1011 = vadd.f32 %v1005, 1.0
  %v1012 = vadd.f32 %v1007, 1.0
  %v1013 = vadd.f32 %v1009, 1.0
  %v1014 = vrcp.pop %v1010
  %v1015 = vmul.f32 1.0, %v1014
  %v1016 = vrcp.pop %v1011
  %v1017 = vmul.f32 1.0, %v1016
  %v1018 = vrcp.pop %v1012
  %v1019 = vmul.f32 1.0, %v1018
  %v1020 = vrcp.pop %v1013
  %v1021 = vmul.f32 1.0, %v1020
  %v1022 = vtanh.pop %v994
  %v1023 = vtanh.pop %v995
  %v1024 = vtanh.pop %v996
  %v1025 = vtanh.pop %v997
  %v1026 = vmul.f32 %v1015, %v847
  %v1027 = vmul.f32 %v1017, %v848
  %v1028 = vmul.f32 %v1019, %v849
  %v1029 = vmul.f32 %v1021, %v850
  %1034 = vrot.lane.b32.xlu0 %v1022, 64
  %v1035 = vpop.permute.xlu0 %1034
  %1036 = vrot.lane.b32.xlu0 %v1023, 64
  %v1037 = vpop.permute.xlu0 %1036
  %1038 = vrot.lane.b32.xlu0 %v1024, 64
  %v1039 = vpop.permute.xlu0 %1038
  %1040 = vrot.lane.b32.xlu0 %v1025, 64
  %v1041 = vpop.permute.xlu0 %1040
  %v1046 = vmul.f32 %v1015, %v1035
  %v1047 = vmul.f32 %v1017, %v1037
  %v1048 = vmul.f32 %v1019, %v1039
  %v1049 = vmul.f32 %v1021, %v1041
  %1054 = vrot.lane.b32.xlu0 %v1046, 32
  %v1055 = vpop.permute.xlu0 %1054
  %1056 = vrot.lane.b32.xlu0 %v1047, 32
  %v1057 = vpop.permute.xlu0 %1056
  %1058 = vrot.lane.b32.xlu0 %v1048, 32
  %v1059 = vpop.permute.xlu0 %1058
  %1060 = vrot.lane.b32.xlu0 %v1049, 32
  %v1061 = vpop.permute.xlu0 %1060
  %v1066 = vadd.f32 %v1026, %v1055
  %v1067 = vadd.f32 %v1027, %v1057
  %v1068 = vadd.f32 %v1028, %v1059
  %v1069 = vadd.f32 %v1029, %v1061
  %v1070 = vtanh.pop %v1066
  %v1071 = vtanh.pop %v1067
  %v1072 = vtanh.pop %v1068
  %v1073 = vtanh.pop %v1069
  %1078 = vrot.lane.b32.xlu0 %v1070, 64
  %v1079 = vpop.permute.xlu0 %1078
  %1080 = vrot.lane.b32.xlu0 %v1071, 64
  %v1081 = vpop.permute.xlu0 %1080
  %1082 = vrot.lane.b32.xlu0 %v1072, 64
  %v1083 = vpop.permute.xlu0 %1082
  %1084 = vrot.lane.b32.xlu0 %v1073, 64
  %v1085 = vpop.permute.xlu0 %1084
  %v1090 = vmul.f32 %v1015, %v1079
  %v1091 = vmul.f32 %v1017, %v1081
  %v1092 = vmul.f32 %v1019, %v1083
  %v1093 = vmul.f32 %v1021, %v1085
  %1098 = vrot.lane.b32.xlu0 %v1090, 32
  %v1099 = vpop.permute.xlu0 %1098
  %1100 = vrot.lane.b32.xlu0 %v1091, 32
  %v1101 = vpop.permute.xlu0 %1100
  %1102 = vrot.lane.b32.xlu0 %v1092, 32
  %v1103 = vpop.permute.xlu0 %1102
  %1104 = vrot.lane.b32.xlu0 %v1093, 32
  %v1105 = vpop.permute.xlu0 %1104
  %s1110 = scalar_lea.vmem %s5, 128
  %1111 = vst.msk [vmem:[%s1110] sm:$0xff] %vm30, %v1099
  %1112 = vst.msk [vmem:[%s1110 + $0x8] sm:$0xff] %vm30, %v1101
  %1113 = vst.msk [vmem:[%s1110 + $0x10] sm:$0xff] %vm30, %v1103
  %1114 = vst.msk [vmem:[%s1110 + $0x18] sm:$0xff] %vm30, %v1105
  %s1115 = scalar_lea.vmem %s0, 160
  %v1116 = vld [vmem:[%s1115] sm:$0xff]
  %v1117 = vld [vmem:[%s1115 + $0x8] sm:$0xff]
  %v1118 = vld [vmem:[%s1115 + $0x10] sm:$0xff]
  %v1119 = vld [vmem:[%s1115 + $0x18] sm:$0xff]
  %v1120 = vsel %vm30, %v1099, 0
  %v1122 = vsel %vm30, %v1101, 0
  %v1124 = vsel %vm30, %v1103, 0
  %v1126 = vsel %vm30, %v1105, 0
  %1128 = vmatprep.subr.mxu0 0.0
  %1129 = vmatpush1.msra.mxu0 0.0
  %1130 = vmatprep.subr.mxu0 0.0
  %1131 = vmatpush1.msra.mxu0 0.0
  %1132 = vmatprep.subr.mxu0 0.0
  %1133 = vmatpush1.msra.mxu0 0.0
  %1134 = vmatprep.subr.mxu0 0.0
  %1135 = vmatpush1.msra.mxu0 0.0
  %1136 = vmatprep.subr.mxu0 0.0
  %1137 = vmatpush1.msra.mxu0 0.0
  %1138 = vmatprep.subr.mxu0 0.0
  %1139 = vmatpush1.msra.mxu0 0.0
  %1140 = vmatprep.subr.mxu0 0.0
  %1141 = vmatpush1.msra.mxu0 0.0
  %1142 = vmatprep.subr.mxu0 0.0
  %1143 = vmatpush1.msra.mxu0 0.0
  %1144 = vmatprep.subr.mxu0 0.0
  %1145 = vmatpush1.msra.mxu0 0.0
  %1146 = vmatprep.subr.mxu0 0.0
  %1147 = vmatpush1.msra.mxu0 0.0
  %1148 = vmatprep.subr.mxu0 0.0
  %1149 = vmatpush1.msra.mxu0 0.0
  %1150 = vmatprep.subr.mxu0 0.0
  %1151 = vmatpush1.msra.mxu0 0.0
  %1152 = vmatprep.subr.mxu0 0.0
  %1153 = vmatpush1.msra.mxu0 %v25
  %1154 = vmatprep.subr.mxu0 0.0
  %1155 = vmatpush1.msra.mxu0 %v24
  %1156 = vmatprep.subr.mxu0 0.0
  %1157 = vmatpush1.msra.mxu0 %v23
  %1158 = vmatprep.subr.mxu0 0.0
  %1159 = vmatpush1.msra.mxu0 %v22
  %1160 = vmatprep.subr.mxu0 0.0
  %1161 = vmatpush2.msra.mxu0 0.0
  %1162 = vmatprep.subr.mxu0 0.0
  %1163 = vmatpush2.msra.mxu0 0.0
  %1164 = vmatprep.subr.mxu0 0.0
  %1165 = vmatpush2.msra.mxu0 0.0
  %1166 = vmatprep.subr.mxu0 0.0
  %1167 = vmatpush2.msra.mxu0 0.0
  %1168 = vmatprep.subr.mxu0 0.0
  %1169 = vmatpush2.msra.mxu0 0.0
  %1170 = vmatprep.subr.mxu0 0.0
  %1171 = vmatpush2.msra.mxu0 0.0
  %1172 = vmatprep.subr.mxu0 0.0
  %1173 = vmatpush2.msra.mxu0 0.0
  %1174 = vmatprep.subr.mxu0 0.0
  %1175 = vmatpush2.msra.mxu0 0.0
  %1176 = vmatprep.subr.mxu0 0.0
  %1177 = vmatpush2.msra.mxu0 0.0
  %1178 = vmatprep.subr.mxu0 0.0
  %1179 = vmatpush2.msra.mxu0 0.0
  %1180 = vmatprep.subr.mxu0 0.0
  %1181 = vmatpush2.msra.mxu0 0.0
  %1182 = vmatprep.subr.mxu0 0.0
  %1183 = vmatpush2.msra.mxu0 0.0
  %1184 = vmatprep.subr.mxu0 0.0
  %1185 = vmatpush2.msra.mxu0 0.0
  %1186 = vmatprep.subr.mxu0 0.0
  %1187 = vmatpush2.msra.mxu0 0.0
  %1188 = vmatprep.subr.mxu0 0.0
  %1189 = vmatpush2.msra.mxu0 0.0
  %1190 = vmatprep.subr.mxu0 0.0
  %1191 = vmatpush2.msra.mxu0 0.0
  %1192 = vmatprep.mubr.f32.mxu0 0.0
  %1193 = vmatmul.mubr.f32.gmra.mxu0 %v1120
  %v1194 = vpop.f32.mrf.mxu0
  %v1195 = vadd.f32 0.0, %v1194
  %v1196 = vpop.f32.mrf.mxu0
  %1197 = vmatprep.mubr.f32.mxu0 0.0
  %1198 = vmatmul.mubr.f32.gmra.mxu0 %v1122
  %v1199 = vpop.f32.mrf.mxu0
  %v1200 = vadd.f32 0.0, %v1199
  %v1201 = vpop.f32.mrf.mxu0
  %1202 = vmatprep.mubr.f32.mxu0 0.0
  %1203 = vmatmul.mubr.f32.gmra.mxu0 %v1124
  %v1204 = vpop.f32.mrf.mxu0
  %v1205 = vadd.f32 0.0, %v1204
  %v1206 = vpop.f32.mrf.mxu0
  %1207 = vmatprep.mubr.f32.mxu0 0.0
  %1208 = vmatmul.mubr.f32.gmra.mxu0 %v1126
  %v1209 = vpop.f32.mrf.mxu0
  %v1210 = vadd.f32 0.0, %v1209
  %v1211 = vpop.f32.mrf.mxu0
  %1212 = vdwg.mxu0
  %v1213 = vadd.f32 %v1116, %v1195
  %v1214 = vadd.f32 %v1117, %v1200
  %v1215 = vadd.f32 %v1118, %v1205
  %v1216 = vadd.f32 %v1119, %v1210
  %v1217 = vxor.u32 %v1213, 2147483648
  %v1218 = vxor.u32 %v1214, 2147483648
  %v1219 = vxor.u32 %v1215, 2147483648
  %v1220 = vxor.u32 %v1216, 2147483648
  %v1221 = vmul.f32 %v1217, 1.442695
  %v1222 = vpow.pop %v1221
  %v1223 = vmul.f32 %v1218, 1.442695
  %v1224 = vpow.pop %v1223
  %v1225 = vmul.f32 %v1219, 1.442695
  %v1226 = vpow.pop %v1225
  %v1227 = vmul.f32 %v1220, 1.442695
  %v1228 = vpow.pop %v1227
  %v1229 = vadd.f32 %v1222, 1.0
  %v1230 = vadd.f32 %v1224, 1.0
  %v1231 = vadd.f32 %v1226, 1.0
  %v1232 = vadd.f32 %v1228, 1.0
  %v1233 = vrcp.pop %v1229
  %v1234 = vmul.f32 1.0, %v1233
  %v1235 = vrcp.pop %v1230
  %v1236 = vmul.f32 1.0, %v1235
  %v1237 = vrcp.pop %v1231
  %v1238 = vmul.f32 1.0, %v1237
  %v1239 = vrcp.pop %v1232
  %v1240 = vmul.f32 1.0, %v1239
  %v1241 = vtanh.pop %v1213
  %v1242 = vtanh.pop %v1214
  %v1243 = vtanh.pop %v1215
  %v1244 = vtanh.pop %v1216
  %v1245 = vmul.f32 %v1234, %v1066
  %v1246 = vmul.f32 %v1236, %v1067
  %v1247 = vmul.f32 %v1238, %v1068
  %v1248 = vmul.f32 %v1240, %v1069
  %1253 = vrot.lane.b32.xlu0 %v1241, 64
  %v1254 = vpop.permute.xlu0 %1253
  %1255 = vrot.lane.b32.xlu0 %v1242, 64
  %v1256 = vpop.permute.xlu0 %1255
  %1257 = vrot.lane.b32.xlu0 %v1243, 64
  %v1258 = vpop.permute.xlu0 %1257
  %1259 = vrot.lane.b32.xlu0 %v1244, 64
  %v1260 = vpop.permute.xlu0 %1259
  %v1265 = vmul.f32 %v1234, %v1254
  %v1266 = vmul.f32 %v1236, %v1256
  %v1267 = vmul.f32 %v1238, %v1258
  %v1268 = vmul.f32 %v1240, %v1260
  %1273 = vrot.lane.b32.xlu0 %v1265, 32
  %v1274 = vpop.permute.xlu0 %1273
  %1275 = vrot.lane.b32.xlu0 %v1266, 32
  %v1276 = vpop.permute.xlu0 %1275
  %1277 = vrot.lane.b32.xlu0 %v1267, 32
  %v1278 = vpop.permute.xlu0 %1277
  %1279 = vrot.lane.b32.xlu0 %v1268, 32
  %v1280 = vpop.permute.xlu0 %1279
  %v1285 = vadd.f32 %v1245, %v1274
  %v1286 = vadd.f32 %v1246, %v1276
  %v1287 = vadd.f32 %v1247, %v1278
  %v1288 = vadd.f32 %v1248, %v1280
  %v1289 = vtanh.pop %v1285
  %v1290 = vtanh.pop %v1286
  %v1291 = vtanh.pop %v1287
  %v1292 = vtanh.pop %v1288
  %1297 = vrot.lane.b32.xlu0 %v1289, 64
  %v1298 = vpop.permute.xlu0 %1297
  %1299 = vrot.lane.b32.xlu0 %v1290, 64
  %v1300 = vpop.permute.xlu0 %1299
  %1301 = vrot.lane.b32.xlu0 %v1291, 64
  %v1302 = vpop.permute.xlu0 %1301
  %1303 = vrot.lane.b32.xlu0 %v1292, 64
  %v1304 = vpop.permute.xlu0 %1303
  %v1309 = vmul.f32 %v1234, %v1298
  %v1310 = vmul.f32 %v1236, %v1300
  %v1311 = vmul.f32 %v1238, %v1302
  %v1312 = vmul.f32 %v1240, %v1304
  %1317 = vrot.lane.b32.xlu0 %v1309, 32
  %v1318 = vpop.permute.xlu0 %1317
  %1319 = vrot.lane.b32.xlu0 %v1310, 32
  %v1320 = vpop.permute.xlu0 %1319
  %1321 = vrot.lane.b32.xlu0 %v1311, 32
  %v1322 = vpop.permute.xlu0 %1321
  %1323 = vrot.lane.b32.xlu0 %v1312, 32
  %v1324 = vpop.permute.xlu0 %1323
  %s1329 = scalar_lea.vmem %s5, 160
  %1330 = vst.msk [vmem:[%s1329] sm:$0xff] %vm30, %v1318
  %1331 = vst.msk [vmem:[%s1329 + $0x8] sm:$0xff] %vm30, %v1320
  %1332 = vst.msk [vmem:[%s1329 + $0x10] sm:$0xff] %vm30, %v1322
  %1333 = vst.msk [vmem:[%s1329 + $0x18] sm:$0xff] %vm30, %v1324
  %s1334 = scalar_lea.vmem %s0, 192
  %v1335 = vld [vmem:[%s1334] sm:$0xff]
  %v1336 = vld [vmem:[%s1334 + $0x8] sm:$0xff]
  %v1337 = vld [vmem:[%s1334 + $0x10] sm:$0xff]
  %v1338 = vld [vmem:[%s1334 + $0x18] sm:$0xff]
  %v1339 = vsel %vm30, %v1318, 0
  %v1341 = vsel %vm30, %v1320, 0
  %v1343 = vsel %vm30, %v1322, 0
  %v1345 = vsel %vm30, %v1324, 0
  %1347 = vmatprep.subr.mxu0 0.0
  %1348 = vmatpush1.msra.mxu0 0.0
  %1349 = vmatprep.subr.mxu0 0.0
  %1350 = vmatpush1.msra.mxu0 0.0
  %1351 = vmatprep.subr.mxu0 0.0
  %1352 = vmatpush1.msra.mxu0 0.0
  %1353 = vmatprep.subr.mxu0 0.0
  %1354 = vmatpush1.msra.mxu0 0.0
  %1355 = vmatprep.subr.mxu0 0.0
  %1356 = vmatpush1.msra.mxu0 0.0
  %1357 = vmatprep.subr.mxu0 0.0
  %1358 = vmatpush1.msra.mxu0 0.0
  %1359 = vmatprep.subr.mxu0 0.0
  %1360 = vmatpush1.msra.mxu0 0.0
  %1361 = vmatprep.subr.mxu0 0.0
  %1362 = vmatpush1.msra.mxu0 0.0
  %1363 = vmatprep.subr.mxu0 0.0
  %1364 = vmatpush1.msra.mxu0 0.0
  %1365 = vmatprep.subr.mxu0 0.0
  %1366 = vmatpush1.msra.mxu0 0.0
  %1367 = vmatprep.subr.mxu0 0.0
  %1368 = vmatpush1.msra.mxu0 0.0
  %1369 = vmatprep.subr.mxu0 0.0
  %1370 = vmatpush1.msra.mxu0 0.0
  %1371 = vmatprep.subr.mxu0 0.0
  %1372 = vmatpush1.msra.mxu0 %v25
  %1373 = vmatprep.subr.mxu0 0.0
  %1374 = vmatpush1.msra.mxu0 %v24
  %1375 = vmatprep.subr.mxu0 0.0
  %1376 = vmatpush1.msra.mxu0 %v23
  %1377 = vmatprep.subr.mxu0 0.0
  %1378 = vmatpush1.msra.mxu0 %v22
  %1379 = vmatprep.subr.mxu0 0.0
  %1380 = vmatpush2.msra.mxu0 0.0
  %1381 = vmatprep.subr.mxu0 0.0
  %1382 = vmatpush2.msra.mxu0 0.0
  %1383 = vmatprep.subr.mxu0 0.0
  %1384 = vmatpush2.msra.mxu0 0.0
  %1385 = vmatprep.subr.mxu0 0.0
  %1386 = vmatpush2.msra.mxu0 0.0
  %1387 = vmatprep.subr.mxu0 0.0
  %1388 = vmatpush2.msra.mxu0 0.0
  %1389 = vmatprep.subr.mxu0 0.0
  %1390 = vmatpush2.msra.mxu0 0.0
  %1391 = vmatprep.subr.mxu0 0.0
  %1392 = vmatpush2.msra.mxu0 0.0
  %1393 = vmatprep.subr.mxu0 0.0
  %1394 = vmatpush2.msra.mxu0 0.0
  %1395 = vmatprep.subr.mxu0 0.0
  %1396 = vmatpush2.msra.mxu0 0.0
  %1397 = vmatprep.subr.mxu0 0.0
  %1398 = vmatpush2.msra.mxu0 0.0
  %1399 = vmatprep.subr.mxu0 0.0
  %1400 = vmatpush2.msra.mxu0 0.0
  %1401 = vmatprep.subr.mxu0 0.0
  %1402 = vmatpush2.msra.mxu0 0.0
  %1403 = vmatprep.subr.mxu0 0.0
  %1404 = vmatpush2.msra.mxu0 0.0
  %1405 = vmatprep.subr.mxu0 0.0
  %1406 = vmatpush2.msra.mxu0 0.0
  %1407 = vmatprep.subr.mxu0 0.0
  %1408 = vmatpush2.msra.mxu0 0.0
  %1409 = vmatprep.subr.mxu0 0.0
  %1410 = vmatpush2.msra.mxu0 0.0
  %1411 = vmatprep.mubr.f32.mxu0 0.0
  %1412 = vmatmul.mubr.f32.gmra.mxu0 %v1339
  %v1413 = vpop.f32.mrf.mxu0
  %v1414 = vadd.f32 0.0, %v1413
  %v1415 = vpop.f32.mrf.mxu0
  %1416 = vmatprep.mubr.f32.mxu0 0.0
  %1417 = vmatmul.mubr.f32.gmra.mxu0 %v1341
  %v1418 = vpop.f32.mrf.mxu0
  %v1419 = vadd.f32 0.0, %v1418
  %v1420 = vpop.f32.mrf.mxu0
  %1421 = vmatprep.mubr.f32.mxu0 0.0
  %1422 = vmatmul.mubr.f32.gmra.mxu0 %v1343
  %v1423 = vpop.f32.mrf.mxu0
  %v1424 = vadd.f32 0.0, %v1423
  %v1425 = vpop.f32.mrf.mxu0
  %1426 = vmatprep.mubr.f32.mxu0 0.0
  %1427 = vmatmul.mubr.f32.gmra.mxu0 %v1345
  %v1428 = vpop.f32.mrf.mxu0
  %v1429 = vadd.f32 0.0, %v1428
  %v1430 = vpop.f32.mrf.mxu0
  %1431 = vdwg.mxu0
  %v1432 = vadd.f32 %v1335, %v1414
  %v1433 = vadd.f32 %v1336, %v1419
  %v1434 = vadd.f32 %v1337, %v1424
  %v1435 = vadd.f32 %v1338, %v1429
  %v1436 = vxor.u32 %v1432, 2147483648
  %v1437 = vxor.u32 %v1433, 2147483648
  %v1438 = vxor.u32 %v1434, 2147483648
  %v1439 = vxor.u32 %v1435, 2147483648
  %v1440 = vmul.f32 %v1436, 1.442695
  %v1441 = vpow.pop %v1440
  %v1442 = vmul.f32 %v1437, 1.442695
  %v1443 = vpow.pop %v1442
  %v1444 = vmul.f32 %v1438, 1.442695
  %v1445 = vpow.pop %v1444
  %v1446 = vmul.f32 %v1439, 1.442695
  %v1447 = vpow.pop %v1446
  %v1448 = vadd.f32 %v1441, 1.0
  %v1449 = vadd.f32 %v1443, 1.0
  %v1450 = vadd.f32 %v1445, 1.0
  %v1451 = vadd.f32 %v1447, 1.0
  %v1452 = vrcp.pop %v1448
  %v1453 = vmul.f32 1.0, %v1452
  %v1454 = vrcp.pop %v1449
  %v1455 = vmul.f32 1.0, %v1454
  %v1456 = vrcp.pop %v1450
  %v1457 = vmul.f32 1.0, %v1456
  %v1458 = vrcp.pop %v1451
  %v1459 = vmul.f32 1.0, %v1458
  %v1460 = vtanh.pop %v1432
  %v1461 = vtanh.pop %v1433
  %v1462 = vtanh.pop %v1434
  %v1463 = vtanh.pop %v1435
  %v1464 = vmul.f32 %v1453, %v1285
  %v1465 = vmul.f32 %v1455, %v1286
  %v1466 = vmul.f32 %v1457, %v1287
  %v1467 = vmul.f32 %v1459, %v1288
  %1472 = vrot.lane.b32.xlu0 %v1460, 64
  %v1473 = vpop.permute.xlu0 %1472
  %1474 = vrot.lane.b32.xlu0 %v1461, 64
  %v1475 = vpop.permute.xlu0 %1474
  %1476 = vrot.lane.b32.xlu0 %v1462, 64
  %v1477 = vpop.permute.xlu0 %1476
  %1478 = vrot.lane.b32.xlu0 %v1463, 64
  %v1479 = vpop.permute.xlu0 %1478
  %v1484 = vmul.f32 %v1453, %v1473
  %v1485 = vmul.f32 %v1455, %v1475
  %v1486 = vmul.f32 %v1457, %v1477
  %v1487 = vmul.f32 %v1459, %v1479
  %1492 = vrot.lane.b32.xlu0 %v1484, 32
  %v1493 = vpop.permute.xlu0 %1492
  %1494 = vrot.lane.b32.xlu0 %v1485, 32
  %v1495 = vpop.permute.xlu0 %1494
  %1496 = vrot.lane.b32.xlu0 %v1486, 32
  %v1497 = vpop.permute.xlu0 %1496
  %1498 = vrot.lane.b32.xlu0 %v1487, 32
  %v1499 = vpop.permute.xlu0 %1498
  %v1504 = vadd.f32 %v1464, %v1493
  %v1505 = vadd.f32 %v1465, %v1495
  %v1506 = vadd.f32 %v1466, %v1497
  %v1507 = vadd.f32 %v1467, %v1499
  %v1508 = vtanh.pop %v1504
  %v1509 = vtanh.pop %v1505
  %v1510 = vtanh.pop %v1506
  %v1511 = vtanh.pop %v1507
  %1516 = vrot.lane.b32.xlu0 %v1508, 64
  %v1517 = vpop.permute.xlu0 %1516
  %1518 = vrot.lane.b32.xlu0 %v1509, 64
  %v1519 = vpop.permute.xlu0 %1518
  %1520 = vrot.lane.b32.xlu0 %v1510, 64
  %v1521 = vpop.permute.xlu0 %1520
  %1522 = vrot.lane.b32.xlu0 %v1511, 64
  %v1523 = vpop.permute.xlu0 %1522
  %v1528 = vmul.f32 %v1453, %v1517
  %v1529 = vmul.f32 %v1455, %v1519
  %v1530 = vmul.f32 %v1457, %v1521
  %v1531 = vmul.f32 %v1459, %v1523
  %1536 = vrot.lane.b32.xlu0 %v1528, 32
  %v1537 = vpop.permute.xlu0 %1536
  %1538 = vrot.lane.b32.xlu0 %v1529, 32
  %v1539 = vpop.permute.xlu0 %1538
  %1540 = vrot.lane.b32.xlu0 %v1530, 32
  %v1541 = vpop.permute.xlu0 %1540
  %1542 = vrot.lane.b32.xlu0 %v1531, 32
  %v1543 = vpop.permute.xlu0 %1542
  %s1548 = scalar_lea.vmem %s5, 192
  %1549 = vst.msk [vmem:[%s1548] sm:$0xff] %vm30, %v1537
  %1550 = vst.msk [vmem:[%s1548 + $0x8] sm:$0xff] %vm30, %v1539
  %1551 = vst.msk [vmem:[%s1548 + $0x10] sm:$0xff] %vm30, %v1541
  %1552 = vst.msk [vmem:[%s1548 + $0x18] sm:$0xff] %vm30, %v1543
  %s1553 = scalar_lea.vmem %s0, 224
  %v1554 = vld [vmem:[%s1553] sm:$0xff]
  %v1555 = vld [vmem:[%s1553 + $0x8] sm:$0xff]
  %v1556 = vld [vmem:[%s1553 + $0x10] sm:$0xff]
  %v1557 = vld [vmem:[%s1553 + $0x18] sm:$0xff]
  %v1558 = vsel %vm30, %v1537, 0
  %v1560 = vsel %vm30, %v1539, 0
  %v1562 = vsel %vm30, %v1541, 0
  %v1564 = vsel %vm30, %v1543, 0
  %1566 = vmatprep.subr.mxu0 0.0
  %1567 = vmatpush1.msra.mxu0 0.0
  %1568 = vmatprep.subr.mxu0 0.0
  %1569 = vmatpush1.msra.mxu0 0.0
  %1570 = vmatprep.subr.mxu0 0.0
  %1571 = vmatpush1.msra.mxu0 0.0
  %1572 = vmatprep.subr.mxu0 0.0
  %1573 = vmatpush1.msra.mxu0 0.0
  %1574 = vmatprep.subr.mxu0 0.0
  %1575 = vmatpush1.msra.mxu0 0.0
  %1576 = vmatprep.subr.mxu0 0.0
  %1577 = vmatpush1.msra.mxu0 0.0
  %1578 = vmatprep.subr.mxu0 0.0
  %1579 = vmatpush1.msra.mxu0 0.0
  %1580 = vmatprep.subr.mxu0 0.0
  %1581 = vmatpush1.msra.mxu0 0.0
  %1582 = vmatprep.subr.mxu0 0.0
  %1583 = vmatpush1.msra.mxu0 0.0
  %1584 = vmatprep.subr.mxu0 0.0
  %1585 = vmatpush1.msra.mxu0 0.0
  %1586 = vmatprep.subr.mxu0 0.0
  %1587 = vmatpush1.msra.mxu0 0.0
  %1588 = vmatprep.subr.mxu0 0.0
  %1589 = vmatpush1.msra.mxu0 0.0
  %1590 = vmatprep.subr.mxu0 0.0
  %1591 = vmatpush1.msra.mxu0 %v25
  %1592 = vmatprep.subr.mxu0 0.0
  %1593 = vmatpush1.msra.mxu0 %v24
  %1594 = vmatprep.subr.mxu0 0.0
  %1595 = vmatpush1.msra.mxu0 %v23
  %1596 = vmatprep.subr.mxu0 0.0
  %1597 = vmatpush1.msra.mxu0 %v22
  %1598 = vmatprep.subr.mxu0 0.0
  %1599 = vmatpush2.msra.mxu0 0.0
  %1600 = vmatprep.subr.mxu0 0.0
  %1601 = vmatpush2.msra.mxu0 0.0
  %1602 = vmatprep.subr.mxu0 0.0
  %1603 = vmatpush2.msra.mxu0 0.0
  %1604 = vmatprep.subr.mxu0 0.0
  %1605 = vmatpush2.msra.mxu0 0.0
  %1606 = vmatprep.subr.mxu0 0.0
  %1607 = vmatpush2.msra.mxu0 0.0
  %1608 = vmatprep.subr.mxu0 0.0
  %1609 = vmatpush2.msra.mxu0 0.0
  %1610 = vmatprep.subr.mxu0 0.0
  %1611 = vmatpush2.msra.mxu0 0.0
  %1612 = vmatprep.subr.mxu0 0.0
  %1613 = vmatpush2.msra.mxu0 0.0
  %1614 = vmatprep.subr.mxu0 0.0
  %1615 = vmatpush2.msra.mxu0 0.0
  %1616 = vmatprep.subr.mxu0 0.0
  %1617 = vmatpush2.msra.mxu0 0.0
  %1618 = vmatprep.subr.mxu0 0.0
  %1619 = vmatpush2.msra.mxu0 0.0
  %1620 = vmatprep.subr.mxu0 0.0
  %1621 = vmatpush2.msra.mxu0 0.0
  %1622 = vmatprep.subr.mxu0 0.0
  %1623 = vmatpush2.msra.mxu0 0.0
  %1624 = vmatprep.subr.mxu0 0.0
  %1625 = vmatpush2.msra.mxu0 0.0
  %1626 = vmatprep.subr.mxu0 0.0
  %1627 = vmatpush2.msra.mxu0 0.0
  %1628 = vmatprep.subr.mxu0 0.0
  %1629 = vmatpush2.msra.mxu0 0.0
  %1630 = vmatprep.mubr.f32.mxu0 0.0
  %1631 = vmatmul.mubr.f32.gmra.mxu0 %v1558
  %v1632 = vpop.f32.mrf.mxu0
  %v1633 = vadd.f32 0.0, %v1632
  %v1634 = vpop.f32.mrf.mxu0
  %1635 = vmatprep.mubr.f32.mxu0 0.0
  %1636 = vmatmul.mubr.f32.gmra.mxu0 %v1560
  %v1637 = vpop.f32.mrf.mxu0
  %v1638 = vadd.f32 0.0, %v1637
  %v1639 = vpop.f32.mrf.mxu0
  %1640 = vmatprep.mubr.f32.mxu0 0.0
  %1641 = vmatmul.mubr.f32.gmra.mxu0 %v1562
  %v1642 = vpop.f32.mrf.mxu0
  %v1643 = vadd.f32 0.0, %v1642
  %v1644 = vpop.f32.mrf.mxu0
  %1645 = vmatprep.mubr.f32.mxu0 0.0
  %1646 = vmatmul.mubr.f32.gmra.mxu0 %v1564
  %v1647 = vpop.f32.mrf.mxu0
  %v1648 = vadd.f32 0.0, %v1647
  %v1649 = vpop.f32.mrf.mxu0
  %1650 = vdwg.mxu0
  %v1651 = vadd.f32 %v1554, %v1633
  %v1652 = vadd.f32 %v1555, %v1638
  %v1653 = vadd.f32 %v1556, %v1643
  %v1654 = vadd.f32 %v1557, %v1648
  %v1655 = vxor.u32 %v1651, 2147483648
  %v1656 = vxor.u32 %v1652, 2147483648
  %v1657 = vxor.u32 %v1653, 2147483648
  %v1658 = vxor.u32 %v1654, 2147483648
  %v1659 = vmul.f32 %v1655, 1.442695
  %v1660 = vpow.pop %v1659
  %v1661 = vmul.f32 %v1656, 1.442695
  %v1662 = vpow.pop %v1661
  %v1663 = vmul.f32 %v1657, 1.442695
  %v1664 = vpow.pop %v1663
  %v1665 = vmul.f32 %v1658, 1.442695
  %v1666 = vpow.pop %v1665
  %v1667 = vadd.f32 %v1660, 1.0
  %v1668 = vadd.f32 %v1662, 1.0
  %v1669 = vadd.f32 %v1664, 1.0
  %v1670 = vadd.f32 %v1666, 1.0
  %v1671 = vrcp.pop %v1667
  %v1672 = vmul.f32 1.0, %v1671
  %v1673 = vrcp.pop %v1668
  %v1674 = vmul.f32 1.0, %v1673
  %v1675 = vrcp.pop %v1669
  %v1676 = vmul.f32 1.0, %v1675
  %v1677 = vrcp.pop %v1670
  %v1678 = vmul.f32 1.0, %v1677
  %v1679 = vtanh.pop %v1651
  %v1680 = vtanh.pop %v1652
  %v1681 = vtanh.pop %v1653
  %v1682 = vtanh.pop %v1654
  %v1683 = vmul.f32 %v1672, %v1504
  %v1684 = vmul.f32 %v1674, %v1505
  %v1685 = vmul.f32 %v1676, %v1506
  %v1686 = vmul.f32 %v1678, %v1507
  %1691 = vrot.lane.b32.xlu0 %v1679, 64
  %v1692 = vpop.permute.xlu0 %1691
  %1693 = vrot.lane.b32.xlu0 %v1680, 64
  %v1694 = vpop.permute.xlu0 %1693
  %1695 = vrot.lane.b32.xlu0 %v1681, 64
  %v1696 = vpop.permute.xlu0 %1695
  %1697 = vrot.lane.b32.xlu0 %v1682, 64
  %v1698 = vpop.permute.xlu0 %1697
  %v1703 = vmul.f32 %v1672, %v1692
  %v1704 = vmul.f32 %v1674, %v1694
  %v1705 = vmul.f32 %v1676, %v1696
  %v1706 = vmul.f32 %v1678, %v1698
  %1711 = vrot.lane.b32.xlu0 %v1703, 32
  %v1712 = vpop.permute.xlu0 %1711
  %1713 = vrot.lane.b32.xlu0 %v1704, 32
  %v1714 = vpop.permute.xlu0 %1713
  %1715 = vrot.lane.b32.xlu0 %v1705, 32
  %v1716 = vpop.permute.xlu0 %1715
  %1717 = vrot.lane.b32.xlu0 %v1706, 32
  %v1718 = vpop.permute.xlu0 %1717
  %v1723 = vadd.f32 %v1683, %v1712
  %v1724 = vadd.f32 %v1684, %v1714
  %v1725 = vadd.f32 %v1685, %v1716
  %v1726 = vadd.f32 %v1686, %v1718
  %v1727 = vtanh.pop %v1723
  %v1728 = vtanh.pop %v1724
  %v1729 = vtanh.pop %v1725
  %v1730 = vtanh.pop %v1726
  %1735 = vrot.lane.b32.xlu0 %v1727, 64
  %v1736 = vpop.permute.xlu0 %1735
  %1737 = vrot.lane.b32.xlu0 %v1728, 64
  %v1738 = vpop.permute.xlu0 %1737
  %1739 = vrot.lane.b32.xlu0 %v1729, 64
  %v1740 = vpop.permute.xlu0 %1739
  %1741 = vrot.lane.b32.xlu0 %v1730, 64
  %v1742 = vpop.permute.xlu0 %1741
  %v1747 = vmul.f32 %v1672, %v1736
  %v1748 = vmul.f32 %v1674, %v1738
  %v1749 = vmul.f32 %v1676, %v1740
  %v1750 = vmul.f32 %v1678, %v1742
  %1755 = vrot.lane.b32.xlu0 %v1747, 32
  %v1756 = vpop.permute.xlu0 %1755
  %1757 = vrot.lane.b32.xlu0 %v1748, 32
  %v1758 = vpop.permute.xlu0 %1757
  %1759 = vrot.lane.b32.xlu0 %v1749, 32
  %v1760 = vpop.permute.xlu0 %1759
  %1761 = vrot.lane.b32.xlu0 %v1750, 32
  %v1762 = vpop.permute.xlu0 %1761
  %s1767 = scalar_lea.vmem %s5, 224
  %1768 = vst.msk [vmem:[%s1767] sm:$0xff] %vm30, %v1756
  %1769 = vst.msk [vmem:[%s1767 + $0x8] sm:$0xff] %vm30, %v1758
  %1770 = vst.msk [vmem:[%s1767 + $0x10] sm:$0xff] %vm30, %v1760
  %1771 = vst.msk [vmem:[%s1767 + $0x18] sm:$0xff] %vm30, %v1762
  %1776 = vrot.lane.b32.xlu0 %v1723, 96
  %v1777 = vpop.permute.xlu0 %1776
  %1778 = vrot.lane.b32.xlu0 %v1724, 96
  %v1779 = vpop.permute.xlu0 %1778
  %1780 = vrot.lane.b32.xlu0 %v1725, 96
  %v1781 = vpop.permute.xlu0 %1780
  %1782 = vrot.lane.b32.xlu0 %v1726, 96
  %v1783 = vpop.permute.xlu0 %1782
  %1788 = vst.msk [vmem:[%s6] sm:$0xff] %vm30, %v1777
  %1789 = vst.msk [vmem:[%s6 + $0x8] sm:$0xff] %vm30, %v1779
  %1790 = vst.msk [vmem:[%s6 + $0x10] sm:$0xff] %vm30, %v1781
  %1791 = vst.msk [vmem:[%s6 + $0x18] sm:$0xff] %vm30, %v1783
  %v1792 = vld [vmem:[%s5] sm:$0xff]
  %v1793 = vld [vmem:[%s5 + $0x8] sm:$0xff]
  %v1794 = vld [vmem:[%s5 + $0x10] sm:$0xff]
  %v1795 = vld [vmem:[%s5 + $0x18] sm:$0xff]
  %v1796 = vld [vmem:[%s5 + $0x20] sm:$0xff]
  %v1797 = vld [vmem:[%s5 + $0x28] sm:$0xff]
  %v1798 = vld [vmem:[%s5 + $0x30] sm:$0xff]
  %v1799 = vld [vmem:[%s5 + $0x38] sm:$0xff]
  %v1800 = vld [vmem:[%s5 + $0x40] sm:$0xff]
  %v1801 = vld [vmem:[%s5 + $0x48] sm:$0xff]
  %v1802 = vld [vmem:[%s5 + $0x50] sm:$0xff]
  %v1803 = vld [vmem:[%s5 + $0x58] sm:$0xff]
  %v1804 = vld [vmem:[%s5 + $0x60] sm:$0xff]
  %v1805 = vld [vmem:[%s5 + $0x68] sm:$0xff]
  %v1806 = vld [vmem:[%s5 + $0x70] sm:$0xff]
  %v1807 = vld [vmem:[%s5 + $0x78] sm:$0xff]
  %v1808 = vld [vmem:[%s5 + $0x80] sm:$0xff]
  %v1809 = vld [vmem:[%s5 + $0x88] sm:$0xff]
  %v1810 = vld [vmem:[%s5 + $0x90] sm:$0xff]
  %v1811 = vld [vmem:[%s5 + $0x98] sm:$0xff]
  %v1812 = vld [vmem:[%s5 + $0xa0] sm:$0xff]
  %v1813 = vld [vmem:[%s5 + $0xa8] sm:$0xff]
  %v1814 = vld [vmem:[%s5 + $0xb0] sm:$0xff]
  %v1815 = vld [vmem:[%s5 + $0xb8] sm:$0xff]
  %v1816 = vld [vmem:[%s5 + $0xc0] sm:$0xff]
  %v1817 = vld [vmem:[%s5 + $0xc8] sm:$0xff]
  %v1818 = vld [vmem:[%s5 + $0xd0] sm:$0xff]
  %v1819 = vld [vmem:[%s5 + $0xd8] sm:$0xff]
  %v1820 = vld [vmem:[%s5 + $0xe0] sm:$0xff]
  %v1821 = vld [vmem:[%s5 + $0xe8] sm:$0xff]
  %v1822 = vld [vmem:[%s5 + $0xf0] sm:$0xff]
  %v1823 = vld [vmem:[%s5 + $0xf8] sm:$0xff]
  %v1824 = vld [vmem:[%s2] sm:$0xff]
  %v1825 = vld [vmem:[%s2 + $0x8] sm:$0xff]
  %v1826 = vld [vmem:[%s2 + $0x10] sm:$0xff]
  %v1827 = vld [vmem:[%s2 + $0x18] sm:$0xff]
  %v1828 = vld [vmem:[%s4] sm:$0x1]
  %v1830 = vlaneseq
  %v1831 = vshrl.u32 %v1830, 7
  %v1832 = vsub.s32 0, %v1831
  %v1833 = vrot.slane %v1828, %v1832
  %v1836 = vsel %vm30, %v1792, 0
  %v1839 = vsel %vm30, %v1793, 0
  %v1842 = vsel %vm30, %v1794, 0
  %v1845 = vsel %vm30, %v1795, 0
  %v1848 = vsel %vm30, %v1796, 0
  %v1851 = vsel %vm30, %v1797, 0
  %v1854 = vsel %vm30, %v1798, 0
  %v1857 = vsel %vm30, %v1799, 0
  %v1860 = vsel %vm30, %v1800, 0
  %v1863 = vsel %vm30, %v1801, 0
  %v1866 = vsel %vm30, %v1802, 0
  %v1869 = vsel %vm30, %v1803, 0
  %v1872 = vsel %vm30, %v1804, 0
  %v1875 = vsel %vm30, %v1805, 0
  %v1878 = vsel %vm30, %v1806, 0
  %v1881 = vsel %vm30, %v1807, 0
  %v1884 = vsel %vm30, %v1808, 0
  %v1887 = vsel %vm30, %v1809, 0
  %v1890 = vsel %vm30, %v1810, 0
  %v1893 = vsel %vm30, %v1811, 0
  %v1896 = vsel %vm30, %v1812, 0
  %v1899 = vsel %vm30, %v1813, 0
  %v1902 = vsel %vm30, %v1814, 0
  %v1905 = vsel %vm30, %v1815, 0
  %v1908 = vsel %vm30, %v1816, 0
  %v1911 = vsel %vm30, %v1817, 0
  %v1914 = vsel %vm30, %v1818, 0
  %v1917 = vsel %vm30, %v1819, 0
  %v1920 = vsel %vm30, %v1820, 0
  %v1923 = vsel %vm30, %v1821, 0
  %v1926 = vsel %vm30, %v1822, 0
  %v1929 = vsel %vm30, %v1823, 0
  %1931 = vmatprep.subr.mxu0 0.0
  %1932 = vmatpush1.msra.mxu0 0.0
  %1933 = vmatprep.subr.mxu0 0.0
  %1934 = vmatpush1.msra.mxu0 0.0
  %1935 = vmatprep.subr.mxu0 0.0
  %1936 = vmatpush1.msra.mxu0 0.0
  %1937 = vmatprep.subr.mxu0 0.0
  %1938 = vmatpush1.msra.mxu0 0.0
  %1939 = vmatprep.subr.mxu0 0.0
  %1940 = vmatpush1.msra.mxu0 0.0
  %1941 = vmatprep.subr.mxu0 0.0
  %1942 = vmatpush1.msra.mxu0 0.0
  %1943 = vmatprep.subr.mxu0 0.0
  %1944 = vmatpush1.msra.mxu0 0.0
  %1945 = vmatprep.subr.mxu0 0.0
  %1946 = vmatpush1.msra.mxu0 0.0
  %1947 = vmatprep.subr.mxu0 0.0
  %1948 = vmatpush1.msra.mxu0 0.0
  %1949 = vmatprep.subr.mxu0 0.0
  %1950 = vmatpush1.msra.mxu0 0.0
  %1951 = vmatprep.subr.mxu0 0.0
  %1952 = vmatpush1.msra.mxu0 0.0
  %1953 = vmatprep.subr.mxu0 0.0
  %1954 = vmatpush1.msra.mxu0 0.0
  %1955 = vmatprep.subr.mxu0 0.0
  %1956 = vmatpush1.msra.mxu0 %v1827
  %1957 = vmatprep.subr.mxu0 0.0
  %1958 = vmatpush1.msra.mxu0 %v1826
  %1959 = vmatprep.subr.mxu0 0.0
  %1960 = vmatpush1.msra.mxu0 %v1825
  %1961 = vmatprep.subr.mxu0 0.0
  %1962 = vmatpush1.msra.mxu0 %v1824
  %1963 = vmatprep.subr.mxu0 0.0
  %1964 = vmatpush2.msra.mxu0 0.0
  %1965 = vmatprep.subr.mxu0 0.0
  %1966 = vmatpush2.msra.mxu0 0.0
  %1967 = vmatprep.subr.mxu0 0.0
  %1968 = vmatpush2.msra.mxu0 0.0
  %1969 = vmatprep.subr.mxu0 0.0
  %1970 = vmatpush2.msra.mxu0 0.0
  %1971 = vmatprep.subr.mxu0 0.0
  %1972 = vmatpush2.msra.mxu0 0.0
  %1973 = vmatprep.subr.mxu0 0.0
  %1974 = vmatpush2.msra.mxu0 0.0
  %1975 = vmatprep.subr.mxu0 0.0
  %1976 = vmatpush2.msra.mxu0 0.0
  %1977 = vmatprep.subr.mxu0 0.0
  %1978 = vmatpush2.msra.mxu0 0.0
  %1979 = vmatprep.subr.mxu0 0.0
  %1980 = vmatpush2.msra.mxu0 0.0
  %1981 = vmatprep.subr.mxu0 0.0
  %1982 = vmatpush2.msra.mxu0 0.0
  %1983 = vmatprep.subr.mxu0 0.0
  %1984 = vmatpush2.msra.mxu0 0.0
  %1985 = vmatprep.subr.mxu0 0.0
  %1986 = vmatpush2.msra.mxu0 0.0
  %1987 = vmatprep.subr.mxu0 0.0
  %1988 = vmatpush2.msra.mxu0 0.0
  %1989 = vmatprep.subr.mxu0 0.0
  %1990 = vmatpush2.msra.mxu0 0.0
  %1991 = vmatprep.subr.mxu0 0.0
  %1992 = vmatpush2.msra.mxu0 0.0
  %1993 = vmatprep.subr.mxu0 0.0
  %1994 = vmatpush2.msra.mxu0 0.0
  %1995 = vmatprep.mubr.f32.mxu0 0.0
  %1996 = vmatmul.mubr.f32.gmra.mxu0 %v1836
  %v1997 = vpop.f32.mrf.mxu0
  %v1998 = vadd.f32 %v1833, %v1997
  %v1999 = vpop.f32.mrf.mxu0
  %2000 = vmatprep.mubr.f32.mxu0 0.0
  %2001 = vmatmul.mubr.f32.gmra.mxu0 %v1839
  %v2002 = vpop.f32.mrf.mxu0
  %v2003 = vadd.f32 %v1833, %v2002
  %v2004 = vpop.f32.mrf.mxu0
  %2005 = vmatprep.mubr.f32.mxu0 0.0
  %2006 = vmatmul.mubr.f32.gmra.mxu0 %v1842
  %v2007 = vpop.f32.mrf.mxu0
  %v2008 = vadd.f32 %v1833, %v2007
  %v2009 = vpop.f32.mrf.mxu0
  %2010 = vmatprep.mubr.f32.mxu0 0.0
  %2011 = vmatmul.mubr.f32.gmra.mxu0 %v1845
  %v2012 = vpop.f32.mrf.mxu0
  %v2013 = vadd.f32 %v1833, %v2012
  %v2014 = vpop.f32.mrf.mxu0
  %2015 = vmatprep.mubr.f32.mxu0 0.0
  %2016 = vmatmul.mubr.f32.gmra.mxu0 %v1848
  %v2017 = vpop.f32.mrf.mxu0
  %v2018 = vadd.f32 %v1833, %v2017
  %v2019 = vpop.f32.mrf.mxu0
  %2020 = vmatprep.mubr.f32.mxu0 0.0
  %2021 = vmatmul.mubr.f32.gmra.mxu0 %v1851
  %v2022 = vpop.f32.mrf.mxu0
  %v2023 = vadd.f32 %v1833, %v2022
  %v2024 = vpop.f32.mrf.mxu0
  %2025 = vmatprep.mubr.f32.mxu0 0.0
  %2026 = vmatmul.mubr.f32.gmra.mxu0 %v1854
  %v2027 = vpop.f32.mrf.mxu0
  %v2028 = vadd.f32 %v1833, %v2027
  %v2029 = vpop.f32.mrf.mxu0
  %2030 = vmatprep.mubr.f32.mxu0 0.0
  %2031 = vmatmul.mubr.f32.gmra.mxu0 %v1857
  %v2032 = vpop.f32.mrf.mxu0
  %v2033 = vadd.f32 %v1833, %v2032
  %v2034 = vpop.f32.mrf.mxu0
  %2035 = vmatprep.mubr.f32.mxu0 0.0
  %2036 = vmatmul.mubr.f32.gmra.mxu0 %v1860
  %v2037 = vpop.f32.mrf.mxu0
  %v2038 = vadd.f32 %v1833, %v2037
  %v2039 = vpop.f32.mrf.mxu0
  %2040 = vmatprep.mubr.f32.mxu0 0.0
  %2041 = vmatmul.mubr.f32.gmra.mxu0 %v1863
  %v2042 = vpop.f32.mrf.mxu0
  %v2043 = vadd.f32 %v1833, %v2042
  %v2044 = vpop.f32.mrf.mxu0
  %2045 = vmatprep.mubr.f32.mxu0 0.0
  %2046 = vmatmul.mubr.f32.gmra.mxu0 %v1866
  %v2047 = vpop.f32.mrf.mxu0
  %v2048 = vadd.f32 %v1833, %v2047
  %v2049 = vpop.f32.mrf.mxu0
  %2050 = vmatprep.mubr.f32.mxu0 0.0
  %2051 = vmatmul.mubr.f32.gmra.mxu0 %v1869
  %v2052 = vpop.f32.mrf.mxu0
  %v2053 = vadd.f32 %v1833, %v2052
  %v2054 = vpop.f32.mrf.mxu0
  %2055 = vmatprep.mubr.f32.mxu0 0.0
  %2056 = vmatmul.mubr.f32.gmra.mxu0 %v1872
  %v2057 = vpop.f32.mrf.mxu0
  %v2058 = vadd.f32 %v1833, %v2057
  %v2059 = vpop.f32.mrf.mxu0
  %2060 = vmatprep.mubr.f32.mxu0 0.0
  %2061 = vmatmul.mubr.f32.gmra.mxu0 %v1875
  %v2062 = vpop.f32.mrf.mxu0
  %v2063 = vadd.f32 %v1833, %v2062
  %v2064 = vpop.f32.mrf.mxu0
  %2065 = vmatprep.mubr.f32.mxu0 0.0
  %2066 = vmatmul.mubr.f32.gmra.mxu0 %v1878
  %v2067 = vpop.f32.mrf.mxu0
  %v2068 = vadd.f32 %v1833, %v2067
  %v2069 = vpop.f32.mrf.mxu0
  %2070 = vmatprep.mubr.f32.mxu0 0.0
  %2071 = vmatmul.mubr.f32.gmra.mxu0 %v1881
  %v2072 = vpop.f32.mrf.mxu0
  %v2073 = vadd.f32 %v1833, %v2072
  %v2074 = vpop.f32.mrf.mxu0
  %2075 = vmatprep.mubr.f32.mxu0 0.0
  %2076 = vmatmul.mubr.f32.gmra.mxu0 %v1884
  %v2077 = vpop.f32.mrf.mxu0
  %v2078 = vadd.f32 %v1833, %v2077
  %v2079 = vpop.f32.mrf.mxu0
  %2080 = vmatprep.mubr.f32.mxu0 0.0
  %2081 = vmatmul.mubr.f32.gmra.mxu0 %v1887
  %v2082 = vpop.f32.mrf.mxu0
  %v2083 = vadd.f32 %v1833, %v2082
  %v2084 = vpop.f32.mrf.mxu0
  %2085 = vmatprep.mubr.f32.mxu0 0.0
  %2086 = vmatmul.mubr.f32.gmra.mxu0 %v1890
  %v2087 = vpop.f32.mrf.mxu0
  %v2088 = vadd.f32 %v1833, %v2087
  %v2089 = vpop.f32.mrf.mxu0
  %2090 = vmatprep.mubr.f32.mxu0 0.0
  %2091 = vmatmul.mubr.f32.gmra.mxu0 %v1893
  %v2092 = vpop.f32.mrf.mxu0
  %v2093 = vadd.f32 %v1833, %v2092
  %v2094 = vpop.f32.mrf.mxu0
  %2095 = vmatprep.mubr.f32.mxu0 0.0
  %2096 = vmatmul.mubr.f32.gmra.mxu0 %v1896
  %v2097 = vpop.f32.mrf.mxu0
  %v2098 = vadd.f32 %v1833, %v2097
  %v2099 = vpop.f32.mrf.mxu0
  %2100 = vmatprep.mubr.f32.mxu0 0.0
  %2101 = vmatmul.mubr.f32.gmra.mxu0 %v1899
  %v2102 = vpop.f32.mrf.mxu0
  %v2103 = vadd.f32 %v1833, %v2102
  %v2104 = vpop.f32.mrf.mxu0
  %2105 = vmatprep.mubr.f32.mxu0 0.0
  %2106 = vmatmul.mubr.f32.gmra.mxu0 %v1902
  %v2107 = vpop.f32.mrf.mxu0
  %v2108 = vadd.f32 %v1833, %v2107
  %v2109 = vpop.f32.mrf.mxu0
  %2110 = vmatprep.mubr.f32.mxu0 0.0
  %2111 = vmatmul.mubr.f32.gmra.mxu0 %v1905
  %v2112 = vpop.f32.mrf.mxu0
  %v2113 = vadd.f32 %v1833, %v2112
  %v2114 = vpop.f32.mrf.mxu0
  %2115 = vmatprep.mubr.f32.mxu0 0.0
  %2116 = vmatmul.mubr.f32.gmra.mxu0 %v1908
  %v2117 = vpop.f32.mrf.mxu0
  %v2118 = vadd.f32 %v1833, %v2117
  %v2119 = vpop.f32.mrf.mxu0
  %2120 = vmatprep.mubr.f32.mxu0 0.0
  %2121 = vmatmul.mubr.f32.gmra.mxu0 %v1911
  %v2122 = vpop.f32.mrf.mxu0
  %v2123 = vadd.f32 %v1833, %v2122
  %v2124 = vpop.f32.mrf.mxu0
  %2125 = vmatprep.mubr.f32.mxu0 0.0
  %2126 = vmatmul.mubr.f32.gmra.mxu0 %v1914
  %v2127 = vpop.f32.mrf.mxu0
  %v2128 = vadd.f32 %v1833, %v2127
  %v2129 = vpop.f32.mrf.mxu0
  %2130 = vmatprep.mubr.f32.mxu0 0.0
  %2131 = vmatmul.mubr.f32.gmra.mxu0 %v1917
  %v2132 = vpop.f32.mrf.mxu0
  %v2133 = vadd.f32 %v1833, %v2132
  %v2134 = vpop.f32.mrf.mxu0
  %2135 = vmatprep.mubr.f32.mxu0 0.0
  %2136 = vmatmul.mubr.f32.gmra.mxu0 %v1920
  %v2137 = vpop.f32.mrf.mxu0
  %v2138 = vadd.f32 %v1833, %v2137
  %v2139 = vpop.f32.mrf.mxu0
  %2140 = vmatprep.mubr.f32.mxu0 0.0
  %2141 = vmatmul.mubr.f32.gmra.mxu0 %v1923
  %v2142 = vpop.f32.mrf.mxu0
  %v2143 = vadd.f32 %v1833, %v2142
  %v2144 = vpop.f32.mrf.mxu0
  %2145 = vmatprep.mubr.f32.mxu0 0.0
  %2146 = vmatmul.mubr.f32.gmra.mxu0 %v1926
  %v2147 = vpop.f32.mrf.mxu0
  %v2148 = vadd.f32 %v1833, %v2147
  %v2149 = vpop.f32.mrf.mxu0
  %2150 = vmatprep.mubr.f32.mxu0 0.0
  %2151 = vmatmul.mubr.f32.gmra.mxu0 %v1929
  %v2152 = vpop.f32.mrf.mxu0
  %v2153 = vadd.f32 %v1833, %v2152
  %v2154 = vpop.f32.mrf.mxu0
  %2155 = vdwg.mxu0
  %2156 = vst [vmem:[#allocation2] sm:$0xff] %v1998
  %2157 = vst [vmem:[#allocation2 + $0x8] sm:$0xff] %v2003
  %2158 = vst [vmem:[#allocation2 + $0x10] sm:$0xff] %v2008
  %2159 = vst [vmem:[#allocation2 + $0x18] sm:$0xff] %v2013
  %2160 = vst [vmem:[#allocation2 + $0x20] sm:$0xff] %v2018
  %2161 = vst [vmem:[#allocation2 + $0x28] sm:$0xff] %v2023
  %2162 = vst [vmem:[#allocation2 + $0x30] sm:$0xff] %v2028
  %2163 = vst [vmem:[#allocation2 + $0x38] sm:$0xff] %v2033
  %2164 = vst [vmem:[#allocation2 + $0x40] sm:$0xff] %v2038
  %2165 = vst [vmem:[#allocation2 + $0x48] sm:$0xff] %v2043
  %2166 = vst [vmem:[#allocation2 + $0x50] sm:$0xff] %v2048
  %2167 = vst [vmem:[#allocation2 + $0x58] sm:$0xff] %v2053
  %2168 = vst [vmem:[#allocation2 + $0x60] sm:$0xff] %v2058
  %2169 = vst [vmem:[#allocation2 + $0x68] sm:$0xff] %v2063
  %2170 = vst [vmem:[#allocation2 + $0x70] sm:$0xff] %v2068
  %2171 = vst [vmem:[#allocation2 + $0x78] sm:$0xff] %v2073
  %2172 = vst [vmem:[#allocation2 + $0x80] sm:$0xff] %v2078
  %2173 = vst [vmem:[#allocation2 + $0x88] sm:$0xff] %v2083
  %2174 = vst [vmem:[#allocation2 + $0x90] sm:$0xff] %v2088
  %2175 = vst [vmem:[#allocation2 + $0x98] sm:$0xff] %v2093
  %2176 = vst [vmem:[#allocation2 + $0xa0] sm:$0xff] %v2098
  %2177 = vst [vmem:[#allocation2 + $0xa8] sm:$0xff] %v2103
  %2178 = vst [vmem:[#allocation2 + $0xb0] sm:$0xff] %v2108
  %2179 = vst [vmem:[#allocation2 + $0xb8] sm:$0xff] %v2113
  %2180 = vst [vmem:[#allocation2 + $0xc0] sm:$0xff] %v2118
  %2181 = vst [vmem:[#allocation2 + $0xc8] sm:$0xff] %v2123
  %2182 = vst [vmem:[#allocation2 + $0xd0] sm:$0xff] %v2128
  %2183 = vst [vmem:[#allocation2 + $0xd8] sm:$0xff] %v2133
  %2184 = vst [vmem:[#allocation2 + $0xe0] sm:$0xff] %v2138
  %2185 = vst [vmem:[#allocation2 + $0xe8] sm:$0xff] %v2143
  %2186 = vst [vmem:[#allocation2 + $0xf0] sm:$0xff] %v2148
  %2187 = vst [vmem:[#allocation2 + $0xf8] sm:$0xff] %v2153
  %v2188 = vld [vmem:[%s3] sm:$0xff]
  %v2189 = vld [vmem:[%s3 + $0x8] sm:$0xff]
  %v2190 = vld [vmem:[%s3 + $0x10] sm:$0xff]
  %v2191 = vld [vmem:[%s3 + $0x18] sm:$0xff]
  %v2192 = vld [vmem:[#allocation2] sm:$0xff]
  %v2193 = vld [vmem:[#allocation2 + $0x8] sm:$0xff]
  %v2194 = vld [vmem:[#allocation2 + $0x10] sm:$0xff]
  %v2195 = vld [vmem:[#allocation2 + $0x18] sm:$0xff]
  %2196 = vmatprep.subr.mxu0 0.0
  %2197 = vmatpush1.msra.mxu0 0.0
  %2198 = vmatprep.subr.mxu0 0.0
  %2199 = vmatpush1.msra.mxu0 0.0
  %2200 = vmatprep.subr.mxu0 0.0
  %2201 = vmatpush1.msra.mxu0 0.0
  %2202 = vmatprep.subr.mxu0 0.0
  %2203 = vmatpush1.msra.mxu0 0.0
  %2204 = vmatprep.subr.mxu0 0.0
  %2205 = vmatpush1.msra.mxu0 0.0
  %2206 = vmatprep.subr.mxu0 0.0
  %2207 = vmatpush1.msra.mxu0 0.0
  %2208 = vmatprep.subr.mxu0 0.0
  %2209 = vmatpush1.msra.mxu0 0.0
  %2210 = vmatprep.subr.mxu0 0.0
  %2211 = vmatpush1.msra.mxu0 0.0
  %2212 = vmatprep.subr.mxu0 0.0
  %2213 = vmatpush1.msra.mxu0 0.0
  %2214 = vmatprep.subr.mxu0 0.0
  %2215 = vmatpush1.msra.mxu0 0.0
  %2216 = vmatprep.subr.mxu0 0.0
  %2217 = vmatpush1.msra.mxu0 0.0
  %2218 = vmatprep.subr.mxu0 0.0
  %2219 = vmatpush1.msra.mxu0 0.0
  %2220 = vmatprep.subr.mxu0 0.0
  %2221 = vmatpush1.msra.mxu0 %v2191
  %2222 = vmatprep.subr.mxu0 0.0
  %2223 = vmatpush1.msra.mxu0 %v2190
  %2224 = vmatprep.subr.mxu0 0.0
  %2225 = vmatpush1.msra.mxu0 %v2189
  %2226 = vmatprep.subr.mxu0 0.0
  %2227 = vmatpush1.msra.mxu0 %v2188
  %2228 = vmatprep.subr.mxu0 0.0
  %2229 = vmatpush2.msra.mxu0 0.0
  %2230 = vmatprep.subr.mxu0 0.0
  %2231 = vmatpush2.msra.mxu0 0.0
  %2232 = vmatprep.subr.mxu0 0.0
  %2233 = vmatpush2.msra.mxu0 0.0
  %2234 = vmatprep.subr.mxu0 0.0
  %2235 = vmatpush2.msra.mxu0 0.0
  %2236 = vmatprep.subr.mxu0 0.0
  %2237 = vmatpush2.msra.mxu0 0.0
  %2238 = vmatprep.subr.mxu0 0.0
  %2239 = vmatpush2.msra.mxu0 0.0
  %2240 = vmatprep.subr.mxu0 0.0
  %2241 = vmatpush2.msra.mxu0 0.0
  %2242 = vmatprep.subr.mxu0 0.0
  %2243 = vmatpush2.msra.mxu0 0.0
  %2244 = vmatprep.subr.mxu0 0.0
  %2245 = vmatpush2.msra.mxu0 0.0
  %2246 = vmatprep.subr.mxu0 0.0
  %2247 = vmatpush2.msra.mxu0 0.0
  %2248 = vmatprep.subr.mxu0 0.0
  %2249 = vmatpush2.msra.mxu0 0.0
  %2250 = vmatprep.subr.mxu0 0.0
  %2251 = vmatpush2.msra.mxu0 0.0
  %2252 = vmatprep.subr.mxu0 0.0
  %2253 = vmatpush2.msra.mxu0 0.0
  %2254 = vmatprep.subr.mxu0 0.0
  %2255 = vmatpush2.msra.mxu0 0.0
  %2256 = vmatprep.subr.mxu0 0.0
  %2257 = vmatpush2.msra.mxu0 0.0
  %2258 = vmatprep.subr.mxu0 0.0
  %2259 = vmatpush2.msra.mxu0 0.0
  %2260 = vmatprep.mubr.f32.mxu0 0.0
  %2261 = vmatmul.mubr.f32.gmra.mxu0 %v32
  %v2262 = vpop.f32.mrf.mxu0
  %v2263 = vadd.f32 0.0, %v2262
  %v2264 = vpop.f32.mrf.mxu0
  %2265 = vmatprep.mubr.f32.mxu0 0.0
  %2266 = vmatmul.mubr.f32.gmra.mxu0 %v32
  %v2267 = vpop.f32.mrf.mxu0
  %v2268 = vadd.f32 0.0, %v2267
  %v2269 = vpop.f32.mrf.mxu0
  %2270 = vmatprep.mubr.f32.mxu0 0.0
  %2271 = vmatmul.mubr.f32.gmra.mxu0 %v32
  %v2272 = vpop.f32.mrf.mxu0
  %v2273 = vadd.f32 0.0, %v2272
  %v2274 = vpop.f32.mrf.mxu0
  %2275 = vmatprep.mubr.f32.mxu0 0.0
  %2276 = vmatmul.mubr.f32.gmra.mxu0 %v32
  %v2277 = vpop.f32.mrf.mxu0
  %v2278 = vadd.f32 0.0, %v2277
  %v2279 = vpop.f32.mrf.mxu0
  %2280 = vdwg.mxu0
  %v2281 = vadd.f32 %v2192, %v2263
  %v2282 = vadd.f32 %v2193, %v2268
  %v2283 = vadd.f32 %v2194, %v2273
  %v2284 = vadd.f32 %v2195, %v2278
  %v2285 = vxor.u32 %v2281, 2147483648
  %v2286 = vxor.u32 %v2282, 2147483648
  %v2287 = vxor.u32 %v2283, 2147483648
  %v2288 = vxor.u32 %v2284, 2147483648
  %v2289 = vmul.f32 %v2285, 1.442695
  %v2290 = vpow.pop %v2289
  %v2291 = vmul.f32 %v2286, 1.442695
  %v2292 = vpow.pop %v2291
  %v2293 = vmul.f32 %v2287, 1.442695
  %v2294 = vpow.pop %v2293
  %v2295 = vmul.f32 %v2288, 1.442695
  %v2296 = vpow.pop %v2295
  %v2297 = vadd.f32 %v2290, 1.0
  %v2298 = vadd.f32 %v2292, 1.0
  %v2299 = vadd.f32 %v2294, 1.0
  %v2300 = vadd.f32 %v2296, 1.0
  %v2301 = vrcp.pop %v2297
  %v2302 = vmul.f32 1.0, %v2301
  %v2303 = vrcp.pop %v2298
  %v2304 = vmul.f32 1.0, %v2303
  %v2305 = vrcp.pop %v2299
  %v2306 = vmul.f32 1.0, %v2305
  %v2307 = vrcp.pop %v2300
  %v2308 = vmul.f32 1.0, %v2307
  %v2309 = vtanh.pop %v2281
  %v2310 = vtanh.pop %v2282
  %v2311 = vtanh.pop %v2283
  %v2312 = vtanh.pop %v2284
  %v2313 = vmul.f32 %v2302, 0.0
  %v2314 = vmul.f32 %v2304, 0.0
  %v2315 = vmul.f32 %v2306, 0.0
  %v2316 = vmul.f32 %v2308, 0.0
  %2321 = vrot.lane.b32.xlu0 %v2309, 64
  %v2322 = vpop.permute.xlu0 %2321
  %2323 = vrot.lane.b32.xlu0 %v2310, 64
  %v2324 = vpop.permute.xlu0 %2323
  %2325 = vrot.lane.b32.xlu0 %v2311, 64
  %v2326 = vpop.permute.xlu0 %2325
  %2327 = vrot.lane.b32.xlu0 %v2312, 64
  %v2328 = vpop.permute.xlu0 %2327
  %v2333 = vmul.f32 %v2302, %v2322
  %v2334 = vmul.f32 %v2304, %v2324
  %v2335 = vmul.f32 %v2306, %v2326
  %v2336 = vmul.f32 %v2308, %v2328
  %2341 = vrot.lane.b32.xlu0 %v2333, 32
  %v2342 = vpop.permute.xlu0 %2341
  %2343 = vrot.lane.b32.xlu0 %v2334, 32
  %v2344 = vpop.permute.xlu0 %2343
  %2345 = vrot.lane.b32.xlu0 %v2335, 32
  %v2346 = vpop.permute.xlu0 %2345
  %2347 = vrot.lane.b32.xlu0 %v2336, 32
  %v2348 = vpop.permute.xlu0 %2347
  %v2353 = vadd.f32 %v2313, %v2342
  %v2354 = vadd.f32 %v2314, %v2344
  %v2355 = vadd.f32 %v2315, %v2346
  %v2356 = vadd.f32 %v2316, %v2348
  %v2357 = vtanh.pop %v2353
  %v2358 = vtanh.pop %v2354
  %v2359 = vtanh.pop %v2355
  %v2360 = vtanh.pop %v2356
  %2365 = vrot.lane.b32.xlu0 %v2357, 64
  %v2366 = vpop.permute.xlu0 %2365
  %2367 = vrot.lane.b32.xlu0 %v2358, 64
  %v2368 = vpop.permute.xlu0 %2367
  %2369 = vrot.lane.b32.xlu0 %v2359, 64
  %v2370 = vpop.permute.xlu0 %2369
  %2371 = vrot.lane.b32.xlu0 %v2360, 64
  %v2372 = vpop.permute.xlu0 %2371
  %v2377 = vmul.f32 %v2302, %v2366
  %v2378 = vmul.f32 %v2304, %v2368
  %v2379 = vmul.f32 %v2306, %v2370
  %v2380 = vmul.f32 %v2308, %v2372
  %2385 = vrot.lane.b32.xlu0 %v2377, 32
  %v2386 = vpop.permute.xlu0 %2385
  %2387 = vrot.lane.b32.xlu0 %v2378, 32
  %v2388 = vpop.permute.xlu0 %2387
  %2389 = vrot.lane.b32.xlu0 %v2379, 32
  %v2390 = vpop.permute.xlu0 %2389
  %2391 = vrot.lane.b32.xlu0 %v2380, 32
  %v2392 = vpop.permute.xlu0 %2391
  %s2397 = scalar_lea.vmem %s5, 256
  %2398 = vst.msk [vmem:[%s2397] sm:$0xff] %vm30, %v2386
  %2399 = vst.msk [vmem:[%s2397 + $0x8] sm:$0xff] %vm30, %v2388
  %2400 = vst.msk [vmem:[%s2397 + $0x10] sm:$0xff] %vm30, %v2390
  %2401 = vst.msk [vmem:[%s2397 + $0x18] sm:$0xff] %vm30, %v2392
  %s2402 = scalar_lea.vmem [#allocation2], 32
  %v2403 = vld [vmem:[%s2402] sm:$0xff]
  %v2404 = vld [vmem:[%s2402 + $0x8] sm:$0xff]
  %v2405 = vld [vmem:[%s2402 + $0x10] sm:$0xff]
  %v2406 = vld [vmem:[%s2402 + $0x18] sm:$0xff]
  %v2407 = vsel %vm30, %v2386, 0
  %v2409 = vsel %vm30, %v2388, 0
  %v2411 = vsel %vm30, %v2390, 0
  %v2413 = vsel %vm30, %v2392, 0
  %2415 = vmatprep.subr.mxu0 0.0
  %2416 = vmatpush1.msra.mxu0 0.0
  %2417 = vmatprep.subr.mxu0 0.0
  %2418 = vmatpush1.msra.mxu0 0.0
  %2419 = vmatprep.subr.mxu0 0.0
  %2420 = vmatpush1.msra.mxu0 0.0
  %2421 = vmatprep.subr.mxu0 0.0
  %2422 = vmatpush1.msra.mxu0 0.0
  %2423 = vmatprep.subr.mxu0 0.0
  %2424 = vmatpush1.msra.mxu0 0.0
  %2425 = vmatprep.subr.mxu0 0.0
  %2426 = vmatpush1.msra.mxu0 0.0
  %2427 = vmatprep.subr.mxu0 0.0
  %2428 = vmatpush1.msra.mxu0 0.0
  %2429 = vmatprep.subr.mxu0 0.0
  %2430 = vmatpush1.msra.mxu0 0.0
  %2431 = vmatprep.subr.mxu0 0.0
  %2432 = vmatpush1.msra.mxu0 0.0
  %2433 = vmatprep.subr.mxu0 0.0
  %2434 = vmatpush1.msra.mxu0 0.0
  %2435 = vmatprep.subr.mxu0 0.0
  %2436 = vmatpush1.msra.mxu0 0.0
  %2437 = vmatprep.subr.mxu0 0.0
  %2438 = vmatpush1.msra.mxu0 0.0
  %2439 = vmatprep.subr.mxu0 0.0
  %2440 = vmatpush1.msra.mxu0 %v2191
  %2441 = vmatprep.subr.mxu0 0.0
  %2442 = vmatpush1.msra.mxu0 %v2190
  %2443 = vmatprep.subr.mxu0 0.0
  %2444 = vmatpush1.msra.mxu0 %v2189
  %2445 = vmatprep.subr.mxu0 0.0
  %2446 = vmatpush1.msra.mxu0 %v2188
  %2447 = vmatprep.subr.mxu0 0.0
  %2448 = vmatpush2.msra.mxu0 0.0
  %2449 = vmatprep.subr.mxu0 0.0
  %2450 = vmatpush2.msra.mxu0 0.0
  %2451 = vmatprep.subr.mxu0 0.0
  %2452 = vmatpush2.msra.mxu0 0.0
  %2453 = vmatprep.subr.mxu0 0.0
  %2454 = vmatpush2.msra.mxu0 0.0
  %2455 = vmatprep.subr.mxu0 0.0
  %2456 = vmatpush2.msra.mxu0 0.0
  %2457 = vmatprep.subr.mxu0 0.0
  %2458 = vmatpush2.msra.mxu0 0.0
  %2459 = vmatprep.subr.mxu0 0.0
  %2460 = vmatpush2.msra.mxu0 0.0
  %2461 = vmatprep.subr.mxu0 0.0
  %2462 = vmatpush2.msra.mxu0 0.0
  %2463 = vmatprep.subr.mxu0 0.0
  %2464 = vmatpush2.msra.mxu0 0.0
  %2465 = vmatprep.subr.mxu0 0.0
  %2466 = vmatpush2.msra.mxu0 0.0
  %2467 = vmatprep.subr.mxu0 0.0
  %2468 = vmatpush2.msra.mxu0 0.0
  %2469 = vmatprep.subr.mxu0 0.0
  %2470 = vmatpush2.msra.mxu0 0.0
  %2471 = vmatprep.subr.mxu0 0.0
  %2472 = vmatpush2.msra.mxu0 0.0
  %2473 = vmatprep.subr.mxu0 0.0
  %2474 = vmatpush2.msra.mxu0 0.0
  %2475 = vmatprep.subr.mxu0 0.0
  %2476 = vmatpush2.msra.mxu0 0.0
  %2477 = vmatprep.subr.mxu0 0.0
  %2478 = vmatpush2.msra.mxu0 0.0
  %2479 = vmatprep.mubr.f32.mxu0 0.0
  %2480 = vmatmul.mubr.f32.gmra.mxu0 %v2407
  %v2481 = vpop.f32.mrf.mxu0
  %v2482 = vadd.f32 0.0, %v2481
  %v2483 = vpop.f32.mrf.mxu0
  %2484 = vmatprep.mubr.f32.mxu0 0.0
  %2485 = vmatmul.mubr.f32.gmra.mxu0 %v2409
  %v2486 = vpop.f32.mrf.mxu0
  %v2487 = vadd.f32 0.0, %v2486
  %v2488 = vpop.f32.mrf.mxu0
  %2489 = vmatprep.mubr.f32.mxu0 0.0
  %2490 = vmatmul.mubr.f32.gmra.mxu0 %v2411
  %v2491 = vpop.f32.mrf.mxu0
  %v2492 = vadd.f32 0.0, %v2491
  %v2493 = vpop.f32.mrf.mxu0
  %2494 = vmatprep.mubr.f32.mxu0 0.0
  %2495 = vmatmul.mubr.f32.gmra.mxu0 %v2413
  %v2496 = vpop.f32.mrf.mxu0
  %v2497 = vadd.f32 0.0, %v2496
  %v2498 = vpop.f32.mrf.mxu0
  %2499 = vdwg.mxu0
  %v2500 = vadd.f32 %v2403, %v2482
  %v2501 = vadd.f32 %v2404, %v2487
  %v2502 = vadd.f32 %v2405, %v2492
  %v2503 = vadd.f32 %v2406, %v2497
  %v2504 = vxor.u32 %v2500, 2147483648
  %v2505 = vxor.u32 %v2501, 2147483648
  %v2506 = vxor.u32 %v2502, 2147483648
  %v2507 = vxor.u32 %v2503, 2147483648
  %v2508 = vmul.f32 %v2504, 1.442695
  %v2509 = vpow.pop %v2508
  %v2510 = vmul.f32 %v2505, 1.442695
  %v2511 = vpow.pop %v2510
  %v2512 = vmul.f32 %v2506, 1.442695
  %v2513 = vpow.pop %v2512
  %v2514 = vmul.f32 %v2507, 1.442695
  %v2515 = vpow.pop %v2514
  %v2516 = vadd.f32 %v2509, 1.0
  %v2517 = vadd.f32 %v2511, 1.0
  %v2518 = vadd.f32 %v2513, 1.0
  %v2519 = vadd.f32 %v2515, 1.0
  %v2520 = vrcp.pop %v2516
  %v2521 = vmul.f32 1.0, %v2520
  %v2522 = vrcp.pop %v2517
  %v2523 = vmul.f32 1.0, %v2522
  %v2524 = vrcp.pop %v2518
  %v2525 = vmul.f32 1.0, %v2524
  %v2526 = vrcp.pop %v2519
  %v2527 = vmul.f32 1.0, %v2526
  %v2528 = vtanh.pop %v2500
  %v2529 = vtanh.pop %v2501
  %v2530 = vtanh.pop %v2502
  %v2531 = vtanh.pop %v2503
  %v2532 = vmul.f32 %v2521, %v2353
  %v2533 = vmul.f32 %v2523, %v2354
  %v2534 = vmul.f32 %v2525, %v2355
  %v2535 = vmul.f32 %v2527, %v2356
  %2540 = vrot.lane.b32.xlu0 %v2528, 64
  %v2541 = vpop.permute.xlu0 %2540
  %2542 = vrot.lane.b32.xlu0 %v2529, 64
  %v2543 = vpop.permute.xlu0 %2542
  %2544 = vrot.lane.b32.xlu0 %v2530, 64
  %v2545 = vpop.permute.xlu0 %2544
  %2546 = vrot.lane.b32.xlu0 %v2531, 64
  %v2547 = vpop.permute.xlu0 %2546
  %v2552 = vmul.f32 %v2521, %v2541
  %v2553 = vmul.f32 %v2523, %v2543
  %v2554 = vmul.f32 %v2525, %v2545
  %v2555 = vmul.f32 %v2527, %v2547
  %2560 = vrot.lane.b32.xlu0 %v2552, 32
  %v2561 = vpop.permute.xlu0 %2560
  %2562 = vrot.lane.b32.xlu0 %v2553, 32
  %v2563 = vpop.permute.xlu0 %2562
  %2564 = vrot.lane.b32.xlu0 %v2554, 32
  %v2565 = vpop.permute.xlu0 %2564
  %2566 = vrot.lane.b32.xlu0 %v2555, 32
  %v2567 = vpop.permute.xlu0 %2566
  %v2572 = vadd.f32 %v2532, %v2561
  %v2573 = vadd.f32 %v2533, %v2563
  %v2574 = vadd.f32 %v2534, %v2565
  %v2575 = vadd.f32 %v2535, %v2567
  %v2576 = vtanh.pop %v2572
  %v2577 = vtanh.pop %v2573
  %v2578 = vtanh.pop %v2574
  %v2579 = vtanh.pop %v2575
  %2584 = vrot.lane.b32.xlu0 %v2576, 64
  %v2585 = vpop.permute.xlu0 %2584
  %2586 = vrot.lane.b32.xlu0 %v2577, 64
  %v2587 = vpop.permute.xlu0 %2586
  %2588 = vrot.lane.b32.xlu0 %v2578, 64
  %v2589 = vpop.permute.xlu0 %2588
  %2590 = vrot.lane.b32.xlu0 %v2579, 64
  %v2591 = vpop.permute.xlu0 %2590
  %v2596 = vmul.f32 %v2521, %v2585
  %v2597 = vmul.f32 %v2523, %v2587
  %v2598 = vmul.f32 %v2525, %v2589
  %v2599 = vmul.f32 %v2527, %v2591
  %2604 = vrot.lane.b32.xlu0 %v2596, 32
  %v2605 = vpop.permute.xlu0 %2604
  %2606 = vrot.lane.b32.xlu0 %v2597, 32
  %v2607 = vpop.permute.xlu0 %2606
  %2608 = vrot.lane.b32.xlu0 %v2598, 32
  %v2609 = vpop.permute.xlu0 %2608
  %2610 = vrot.lane.b32.xlu0 %v2599, 32
  %v2611 = vpop.permute.xlu0 %2610
  %s2616 = scalar_lea.vmem %s5, 288
  %2617 = vst.msk [vmem:[%s2616] sm:$0xff] %vm30, %v2605
  %2618 = vst.msk [vmem:[%s2616 + $0x8] sm:$0xff] %vm30, %v2607
  %2619 = vst.msk [vmem:[%s2616 + $0x10] sm:$0xff] %vm30, %v2609
  %2620 = vst.msk [vmem:[%s2616 + $0x18] sm:$0xff] %vm30, %v2611
  %s2621 = scalar_lea.vmem [#allocation2], 64
  %v2622 = vld [vmem:[%s2621] sm:$0xff]
  %v2623 = vld [vmem:[%s2621 + $0x8] sm:$0xff]
  %v2624 = vld [vmem:[%s2621 + $0x10] sm:$0xff]
  %v2625 = vld [vmem:[%s2621 + $0x18] sm:$0xff]
  %v2626 = vsel %vm30, %v2605, 0
  %v2628 = vsel %vm30, %v2607, 0
  %v2630 = vsel %vm30, %v2609, 0
  %v2632 = vsel %vm30, %v2611, 0
  %2634 = vmatprep.subr.mxu0 0.0
  %2635 = vmatpush1.msra.mxu0 0.0
  %2636 = vmatprep.subr.mxu0 0.0
  %2637 = vmatpush1.msra.mxu0 0.0
  %2638 = vmatprep.subr.mxu0 0.0
  %2639 = vmatpush1.msra.mxu0 0.0
  %2640 = vmatprep.subr.mxu0 0.0
  %2641 = vmatpush1.msra.mxu0 0.0
  %2642 = vmatprep.subr.mxu0 0.0
  %2643 = vmatpush1.msra.mxu0 0.0
  %2644 = vmatprep.subr.mxu0 0.0
  %2645 = vmatpush1.msra.mxu0 0.0
  %2646 = vmatprep.subr.mxu0 0.0
  %2647 = vmatpush1.msra.mxu0 0.0
  %2648 = vmatprep.subr.mxu0 0.0
  %2649 = vmatpush1.msra.mxu0 0.0
  %2650 = vmatprep.subr.mxu0 0.0
  %2651 = vmatpush1.msra.mxu0 0.0
  %2652 = vmatprep.subr.mxu0 0.0
  %2653 = vmatpush1.msra.mxu0 0.0
  %2654 = vmatprep.subr.mxu0 0.0
  %2655 = vmatpush1.msra.mxu0 0.0
  %2656 = vmatprep.subr.mxu0 0.0
  %2657 = vmatpush1.msra.mxu0 0.0
  %2658 = vmatprep.subr.mxu0 0.0
  %2659 = vmatpush1.msra.mxu0 %v2191
  %2660 = vmatprep.subr.mxu0 0.0
  %2661 = vmatpush1.msra.mxu0 %v2190
  %2662 = vmatprep.subr.mxu0 0.0
  %2663 = vmatpush1.msra.mxu0 %v2189
  %2664 = vmatprep.subr.mxu0 0.0
  %2665 = vmatpush1.msra.mxu0 %v2188
  %2666 = vmatprep.subr.mxu0 0.0
  %2667 = vmatpush2.msra.mxu0 0.0
  %2668 = vmatprep.subr.mxu0 0.0
  %2669 = vmatpush2.msra.mxu0 0.0
  %2670 = vmatprep.subr.mxu0 0.0
  %2671 = vmatpush2.msra.mxu0 0.0
  %2672 = vmatprep.subr.mxu0 0.0
  %2673 = vmatpush2.msra.mxu0 0.0
  %2674 = vmatprep.subr.mxu0 0.0
  %2675 = vmatpush2.msra.mxu0 0.0
  %2676 = vmatprep.subr.mxu0 0.0
  %2677 = vmatpush2.msra.mxu0 0.0
  %2678 = vmatprep.subr.mxu0 0.0
  %2679 = vmatpush2.msra.mxu0 0.0
  %2680 = vmatprep.subr.mxu0 0.0
  %2681 = vmatpush2.msra.mxu0 0.0
  %2682 = vmatprep.subr.mxu0 0.0
  %2683 = vmatpush2.msra.mxu0 0.0
  %2684 = vmatprep.subr.mxu0 0.0
  %2685 = vmatpush2.msra.mxu0 0.0
  %2686 = vmatprep.subr.mxu0 0.0
  %2687 = vmatpush2.msra.mxu0 0.0
  %2688 = vmatprep.subr.mxu0 0.0
  %2689 = vmatpush2.msra.mxu0 0.0
  %2690 = vmatprep.subr.mxu0 0.0
  %2691 = vmatpush2.msra.mxu0 0.0
  %2692 = vmatprep.subr.mxu0 0.0
  %2693 = vmatpush2.msra.mxu0 0.0
  %2694 = vmatprep.subr.mxu0 0.0
  %2695 = vmatpush2.msra.mxu0 0.0
  %2696 = vmatprep.subr.mxu0 0.0
  %2697 = vmatpush2.msra.mxu0 0.0
  %2698 = vmatprep.mubr.f32.mxu0 0.0
  %2699 = vmatmul.mubr.f32.gmra.mxu0 %v2626
  %v2700 = vpop.f32.mrf.mxu0
  %v2701 = vadd.f32 0.0, %v2700
  %v2702 = vpop.f32.mrf.mxu0
  %2703 = vmatprep.mubr.f32.mxu0 0.0
  %2704 = vmatmul.mubr.f32.gmra.mxu0 %v2628
  %v2705 = vpop.f32.mrf.mxu0
  %v2706 = vadd.f32 0.0, %v2705
  %v2707 = vpop.f32.mrf.mxu0
  %2708 = vmatprep.mubr.f32.mxu0 0.0
  %2709 = vmatmul.mubr.f32.gmra.mxu0 %v2630
  %v2710 = vpop.f32.mrf.mxu0
  %v2711 = vadd.f32 0.0, %v2710
  %v2712 = vpop.f32.mrf.mxu0
  %2713 = vmatprep.mubr.f32.mxu0 0.0
  %2714 = vmatmul.mubr.f32.gmra.mxu0 %v2632
  %v2715 = vpop.f32.mrf.mxu0
  %v2716 = vadd.f32 0.0, %v2715
  %v2717 = vpop.f32.mrf.mxu0
  %2718 = vdwg.mxu0
  %v2719 = vadd.f32 %v2622, %v2701
  %v2720 = vadd.f32 %v2623, %v2706
  %v2721 = vadd.f32 %v2624, %v2711
  %v2722 = vadd.f32 %v2625, %v2716
  %v2723 = vxor.u32 %v2719, 2147483648
  %v2724 = vxor.u32 %v2720, 2147483648
  %v2725 = vxor.u32 %v2721, 2147483648
  %v2726 = vxor.u32 %v2722, 2147483648
  %v2727 = vmul.f32 %v2723, 1.442695
  %v2728 = vpow.pop %v2727
  %v2729 = vmul.f32 %v2724, 1.442695
  %v2730 = vpow.pop %v2729
  %v2731 = vmul.f32 %v2725, 1.442695
  %v2732 = vpow.pop %v2731
  %v2733 = vmul.f32 %v2726, 1.442695
  %v2734 = vpow.pop %v2733
  %v2735 = vadd.f32 %v2728, 1.0
  %v2736 = vadd.f32 %v2730, 1.0
  %v2737 = vadd.f32 %v2732, 1.0
  %v2738 = vadd.f32 %v2734, 1.0
  %v2739 = vrcp.pop %v2735
  %v2740 = vmul.f32 1.0, %v2739
  %v2741 = vrcp.pop %v2736
  %v2742 = vmul.f32 1.0, %v2741
  %v2743 = vrcp.pop %v2737
  %v2744 = vmul.f32 1.0, %v2743
  %v2745 = vrcp.pop %v2738
  %v2746 = vmul.f32 1.0, %v2745
  %v2747 = vtanh.pop %v2719
  %v2748 = vtanh.pop %v2720
  %v2749 = vtanh.pop %v2721
  %v2750 = vtanh.pop %v2722
  %v2751 = vmul.f32 %v2740, %v2572
  %v2752 = vmul.f32 %v2742, %v2573
  %v2753 = vmul.f32 %v2744, %v2574
  %v2754 = vmul.f32 %v2746, %v2575
  %2759 = vrot.lane.b32.xlu0 %v2747, 64
  %v2760 = vpop.permute.xlu0 %2759
  %2761 = vrot.lane.b32.xlu0 %v2748, 64
  %v2762 = vpop.permute.xlu0 %2761
  %2763 = vrot.lane.b32.xlu0 %v2749, 64
  %v2764 = vpop.permute.xlu0 %2763
  %2765 = vrot.lane.b32.xlu0 %v2750, 64
  %v2766 = vpop.permute.xlu0 %2765
  %v2771 = vmul.f32 %v2740, %v2760
  %v2772 = vmul.f32 %v2742, %v2762
  %v2773 = vmul.f32 %v2744, %v2764
  %v2774 = vmul.f32 %v2746, %v2766
  %2779 = vrot.lane.b32.xlu0 %v2771, 32
  %v2780 = vpop.permute.xlu0 %2779
  %2781 = vrot.lane.b32.xlu0 %v2772, 32
  %v2782 = vpop.permute.xlu0 %2781
  %2783 = vrot.lane.b32.xlu0 %v2773, 32
  %v2784 = vpop.permute.xlu0 %2783
  %2785 = vrot.lane.b32.xlu0 %v2774, 32
  %v2786 = vpop.permute.xlu0 %2785
  %v2791 = vadd.f32 %v2751, %v2780
  %v2792 = vadd.f32 %v2752, %v2782
  %v2793 = vadd.f32 %v2753, %v2784
  %v2794 = vadd.f32 %v2754, %v2786
  %v2795 = vtanh.pop %v2791
  %v2796 = vtanh.pop %v2792
  %v2797 = vtanh.pop %v2793
  %v2798 = vtanh.pop %v2794
  %2803 = vrot.lane.b32.xlu0 %v2795, 64
  %v2804 = vpop.permute.xlu0 %2803
  %2805 = vrot.lane.b32.xlu0 %v2796, 64
  %v2806 = vpop.permute.xlu0 %2805
  %2807 = vrot.lane.b32.xlu0 %v2797, 64
  %v2808 = vpop.permute.xlu0 %2807
  %2809 = vrot.lane.b32.xlu0 %v2798, 64
  %v2810 = vpop.permute.xlu0 %2809
  %v2815 = vmul.f32 %v2740, %v2804
  %v2816 = vmul.f32 %v2742, %v2806
  %v2817 = vmul.f32 %v2744, %v2808
  %v2818 = vmul.f32 %v2746, %v2810
  %2823 = vrot.lane.b32.xlu0 %v2815, 32
  %v2824 = vpop.permute.xlu0 %2823
  %2825 = vrot.lane.b32.xlu0 %v2816, 32
  %v2826 = vpop.permute.xlu0 %2825
  %2827 = vrot.lane.b32.xlu0 %v2817, 32
  %v2828 = vpop.permute.xlu0 %2827
  %2829 = vrot.lane.b32.xlu0 %v2818, 32
  %v2830 = vpop.permute.xlu0 %2829
  %s2835 = scalar_lea.vmem %s5, 320
  %2836 = vst.msk [vmem:[%s2835] sm:$0xff] %vm30, %v2824
  %2837 = vst.msk [vmem:[%s2835 + $0x8] sm:$0xff] %vm30, %v2826
  %2838 = vst.msk [vmem:[%s2835 + $0x10] sm:$0xff] %vm30, %v2828
  %2839 = vst.msk [vmem:[%s2835 + $0x18] sm:$0xff] %vm30, %v2830
  %s2840 = scalar_lea.vmem [#allocation2], 96
  %v2841 = vld [vmem:[%s2840] sm:$0xff]
  %v2842 = vld [vmem:[%s2840 + $0x8] sm:$0xff]
  %v2843 = vld [vmem:[%s2840 + $0x10] sm:$0xff]
  %v2844 = vld [vmem:[%s2840 + $0x18] sm:$0xff]
  %v2845 = vsel %vm30, %v2824, 0
  %v2847 = vsel %vm30, %v2826, 0
  %v2849 = vsel %vm30, %v2828, 0
  %v2851 = vsel %vm30, %v2830, 0
  %2853 = vmatprep.subr.mxu0 0.0
  %2854 = vmatpush1.msra.mxu0 0.0
  %2855 = vmatprep.subr.mxu0 0.0
  %2856 = vmatpush1.msra.mxu0 0.0
  %2857 = vmatprep.subr.mxu0 0.0
  %2858 = vmatpush1.msra.mxu0 0.0
  %2859 = vmatprep.subr.mxu0 0.0
  %2860 = vmatpush1.msra.mxu0 0.0
  %2861 = vmatprep.subr.mxu0 0.0
  %2862 = vmatpush1.msra.mxu0 0.0
  %2863 = vmatprep.subr.mxu0 0.0
  %2864 = vmatpush1.msra.mxu0 0.0
  %2865 = vmatprep.subr.mxu0 0.0
  %2866 = vmatpush1.msra.mxu0 0.0
  %2867 = vmatprep.subr.mxu0 0.0
  %2868 = vmatpush1.msra.mxu0 0.0
  %2869 = vmatprep.subr.mxu0 0.0
  %2870 = vmatpush1.msra.mxu0 0.0
  %2871 = vmatprep.subr.mxu0 0.0
  %2872 = vmatpush1.msra.mxu0 0.0
  %2873 = vmatprep.subr.mxu0 0.0
  %2874 = vmatpush1.msra.mxu0 0.0
  %2875 = vmatprep.subr.mxu0 0.0
  %2876 = vmatpush1.msra.mxu0 0.0
  %2877 = vmatprep.subr.mxu0 0.0
  %2878 = vmatpush1.msra.mxu0 %v2191
  %2879 = vmatprep.subr.mxu0 0.0
  %2880 = vmatpush1.msra.mxu0 %v2190
  %2881 = vmatprep.subr.mxu0 0.0
  %2882 = vmatpush1.msra.mxu0 %v2189
  %2883 = vmatprep.subr.mxu0 0.0
  %2884 = vmatpush1.msra.mxu0 %v2188
  %2885 = vmatprep.subr.mxu0 0.0
  %2886 = vmatpush2.msra.mxu0 0.0
  %2887 = vmatprep.subr.mxu0 0.0
  %2888 = vmatpush2.msra.mxu0 0.0
  %2889 = vmatprep.subr.mxu0 0.0
  %2890 = vmatpush2.msra.mxu0 0.0
  %2891 = vmatprep.subr.mxu0 0.0
  %2892 = vmatpush2.msra.mxu0 0.0
  %2893 = vmatprep.subr.mxu0 0.0
  %2894 = vmatpush2.msra.mxu0 0.0
  %2895 = vmatprep.subr.mxu0 0.0
  %2896 = vmatpush2.msra.mxu0 0.0
  %2897 = vmatprep.subr.mxu0 0.0
  %2898 = vmatpush2.msra.mxu0 0.0
  %2899 = vmatprep.subr.mxu0 0.0
  %2900 = vmatpush2.msra.mxu0 0.0
  %2901 = vmatprep.subr.mxu0 0.0
  %2902 = vmatpush2.msra.mxu0 0.0
  %2903 = vmatprep.subr.mxu0 0.0
  %2904 = vmatpush2.msra.mxu0 0.0
  %2905 = vmatprep.subr.mxu0 0.0
  %2906 = vmatpush2.msra.mxu0 0.0
  %2907 = vmatprep.subr.mxu0 0.0
  %2908 = vmatpush2.msra.mxu0 0.0
  %2909 = vmatprep.subr.mxu0 0.0
  %2910 = vmatpush2.msra.mxu0 0.0
  %2911 = vmatprep.subr.mxu0 0.0
  %2912 = vmatpush2.msra.mxu0 0.0
  %2913 = vmatprep.subr.mxu0 0.0
  %2914 = vmatpush2.msra.mxu0 0.0
  %2915 = vmatprep.subr.mxu0 0.0
  %2916 = vmatpush2.msra.mxu0 0.0
  %2917 = vmatprep.mubr.f32.mxu0 0.0
  %2918 = vmatmul.mubr.f32.gmra.mxu0 %v2845
  %v2919 = vpop.f32.mrf.mxu0
  %v2920 = vadd.f32 0.0, %v2919
  %v2921 = vpop.f32.mrf.mxu0
  %2922 = vmatprep.mubr.f32.mxu0 0.0
  %2923 = vmatmul.mubr.f32.gmra.mxu0 %v2847
  %v2924 = vpop.f32.mrf.mxu0
  %v2925 = vadd.f32 0.0, %v2924
  %v2926 = vpop.f32.mrf.mxu0
  %2927 = vmatprep.mubr.f32.mxu0 0.0
  %2928 = vmatmul.mubr.f32.gmra.mxu0 %v2849
  %v2929 = vpop.f32.mrf.mxu0
  %v2930 = vadd.f32 0.0, %v2929
  %v2931 = vpop.f32.mrf.mxu0
  %2932 = vmatprep.mubr.f32.mxu0 0.0
  %2933 = vmatmul.mubr.f32.gmra.mxu0 %v2851
  %v2934 = vpop.f32.mrf.mxu0
  %v2935 = vadd.f32 0.0, %v2934
  %v2936 = vpop.f32.mrf.mxu0
  %2937 = vdwg.mxu0
  %v2938 = vadd.f32 %v2841, %v2920
  %v2939 = vadd.f32 %v2842, %v2925
  %v2940 = vadd.f32 %v2843, %v2930
  %v2941 = vadd.f32 %v2844, %v2935
  %v2942 = vxor.u32 %v2938, 2147483648
  %v2943 = vxor.u32 %v2939, 2147483648
  %v2944 = vxor.u32 %v2940, 2147483648
  %v2945 = vxor.u32 %v2941, 2147483648
  %v2946 = vmul.f32 %v2942, 1.442695
  %v2947 = vpow.pop %v2946
  %v2948 = vmul.f32 %v2943, 1.442695
  %v2949 = vpow.pop %v2948
  %v2950 = vmul.f32 %v2944, 1.442695
  %v2951 = vpow.pop %v2950
  %v2952 = vmul.f32 %v2945, 1.442695
  %v2953 = vpow.pop %v2952
  %v2954 = vadd.f32 %v2947, 1.0
  %v2955 = vadd.f32 %v2949, 1.0
  %v2956 = vadd.f32 %v2951, 1.0
  %v2957 = vadd.f32 %v2953, 1.0
  %v2958 = vrcp.pop %v2954
  %v2959 = vmul.f32 1.0, %v2958
  %v2960 = vrcp.pop %v2955
  %v2961 = vmul.f32 1.0, %v2960
  %v2962 = vrcp.pop %v2956
  %v2963 = vmul.f32 1.0, %v2962
  %v2964 = vrcp.pop %v2957
  %v2965 = vmul.f32 1.0, %v2964
  %v2966 = vtanh.pop %v2938
  %v2967 = vtanh.pop %v2939
  %v2968 = vtanh.pop %v2940
  %v2969 = vtanh.pop %v2941
  %v2970 = vmul.f32 %v2959, %v2791
  %v2971 = vmul.f32 %v2961, %v2792
  %v2972 = vmul.f32 %v2963, %v2793
  %v2973 = vmul.f32 %v2965, %v2794
  %2978 = vrot.lane.b32.xlu0 %v2966, 64
  %v2979 = vpop.permute.xlu0 %2978
  %2980 = vrot.lane.b32.xlu0 %v2967, 64
  %v2981 = vpop.permute.xlu0 %2980
  %2982 = vrot.lane.b32.xlu0 %v2968, 64
  %v2983 = vpop.permute.xlu0 %2982
  %2984 = vrot.lane.b32.xlu0 %v2969, 64
  %v2985 = vpop.permute.xlu0 %2984
  %v2990 = vmul.f32 %v2959, %v2979
  %v2991 = vmul.f32 %v2961, %v2981
  %v2992 = vmul.f32 %v2963, %v2983
  %v2993 = vmul.f32 %v2965, %v2985
  %2998 = vrot.lane.b32.xlu0 %v2990, 32
  %v2999 = vpop.permute.xlu0 %2998
  %3000 = vrot.lane.b32.xlu0 %v2991, 32
  %v3001 = vpop.permute.xlu0 %3000
  %3002 = vrot.lane.b32.xlu0 %v2992, 32
  %v3003 = vpop.permute.xlu0 %3002
  %3004 = vrot.lane.b32.xlu0 %v2993, 32
  %v3005 = vpop.permute.xlu0 %3004
  %v3010 = vadd.f32 %v2970, %v2999
  %v3011 = vadd.f32 %v2971, %v3001
  %v3012 = vadd.f32 %v2972, %v3003
  %v3013 = vadd.f32 %v2973, %v3005
  %v3014 = vtanh.pop %v3010
  %v3015 = vtanh.pop %v3011
  %v3016 = vtanh.pop %v3012
  %v3017 = vtanh.pop %v3013
  %3022 = vrot.lane.b32.xlu0 %v3014, 64
  %v3023 = vpop.permute.xlu0 %3022
  %3024 = vrot.lane.b32.xlu0 %v3015, 64
  %v3025 = vpop.permute.xlu0 %3024
  %3026 = vrot.lane.b32.xlu0 %v3016, 64
  %v3027 = vpop.permute.xlu0 %3026
  %3028 = vrot.lane.b32.xlu0 %v3017, 64
  %v3029 = vpop.permute.xlu0 %3028
  %v3034 = vmul.f32 %v2959, %v3023
  %v3035 = vmul.f32 %v2961, %v3025
  %v3036 = vmul.f32 %v2963, %v3027
  %v3037 = vmul.f32 %v2965, %v3029
  %3042 = vrot.lane.b32.xlu0 %v3034, 32
  %v3043 = vpop.permute.xlu0 %3042
  %3044 = vrot.lane.b32.xlu0 %v3035, 32
  %v3045 = vpop.permute.xlu0 %3044
  %3046 = vrot.lane.b32.xlu0 %v3036, 32
  %v3047 = vpop.permute.xlu0 %3046
  %3048 = vrot.lane.b32.xlu0 %v3037, 32
  %v3049 = vpop.permute.xlu0 %3048
  %s3054 = scalar_lea.vmem %s5, 352
  %3055 = vst.msk [vmem:[%s3054] sm:$0xff] %vm30, %v3043
  %3056 = vst.msk [vmem:[%s3054 + $0x8] sm:$0xff] %vm30, %v3045
  %3057 = vst.msk [vmem:[%s3054 + $0x10] sm:$0xff] %vm30, %v3047
  %3058 = vst.msk [vmem:[%s3054 + $0x18] sm:$0xff] %vm30, %v3049
  %s3059 = scalar_lea.vmem [#allocation2], 128
  %v3060 = vld [vmem:[%s3059] sm:$0xff]
  %v3061 = vld [vmem:[%s3059 + $0x8] sm:$0xff]
  %v3062 = vld [vmem:[%s3059 + $0x10] sm:$0xff]
  %v3063 = vld [vmem:[%s3059 + $0x18] sm:$0xff]
  %v3064 = vsel %vm30, %v3043, 0
  %v3066 = vsel %vm30, %v3045, 0
  %v3068 = vsel %vm30, %v3047, 0
  %v3070 = vsel %vm30, %v3049, 0
  %3072 = vmatprep.subr.mxu0 0.0
  %3073 = vmatpush1.msra.mxu0 0.0
  %3074 = vmatprep.subr.mxu0 0.0
  %3075 = vmatpush1.msra.mxu0 0.0
  %3076 = vmatprep.subr.mxu0 0.0
  %3077 = vmatpush1.msra.mxu0 0.0
  %3078 = vmatprep.subr.mxu0 0.0
  %3079 = vmatpush1.msra.mxu0 0.0
  %3080 = vmatprep.subr.mxu0 0.0
  %3081 = vmatpush1.msra.mxu0 0.0
  %3082 = vmatprep.subr.mxu0 0.0
  %3083 = vmatpush1.msra.mxu0 0.0
  %3084 = vmatprep.subr.mxu0 0.0
  %3085 = vmatpush1.msra.mxu0 0.0
  %3086 = vmatprep.subr.mxu0 0.0
  %3087 = vmatpush1.msra.mxu0 0.0
  %3088 = vmatprep.subr.mxu0 0.0
  %3089 = vmatpush1.msra.mxu0 0.0
  %3090 = vmatprep.subr.mxu0 0.0
  %3091 = vmatpush1.msra.mxu0 0.0
  %3092 = vmatprep.subr.mxu0 0.0
  %3093 = vmatpush1.msra.mxu0 0.0
  %3094 = vmatprep.subr.mxu0 0.0
  %3095 = vmatpush1.msra.mxu0 0.0
  %3096 = vmatprep.subr.mxu0 0.0
  %3097 = vmatpush1.msra.mxu0 %v2191
  %3098 = vmatprep.subr.mxu0 0.0
  %3099 = vmatpush1.msra.mxu0 %v2190
  %3100 = vmatprep.subr.mxu0 0.0
  %3101 = vmatpush1.msra.mxu0 %v2189
  %3102 = vmatprep.subr.mxu0 0.0
  %3103 = vmatpush1.msra.mxu0 %v2188
  %3104 = vmatprep.subr.mxu0 0.0
  %3105 = vmatpush2.msra.mxu0 0.0
  %3106 = vmatprep.subr.mxu0 0.0
  %3107 = vmatpush2.msra.mxu0 0.0
  %3108 = vmatprep.subr.mxu0 0.0
  %3109 = vmatpush2.msra.mxu0 0.0
  %3110 = vmatprep.subr.mxu0 0.0
  %3111 = vmatpush2.msra.mxu0 0.0
  %3112 = vmatprep.subr.mxu0 0.0
  %3113 = vmatpush2.msra.mxu0 0.0
  %3114 = vmatprep.subr.mxu0 0.0
  %3115 = vmatpush2.msra.mxu0 0.0
  %3116 = vmatprep.subr.mxu0 0.0
  %3117 = vmatpush2.msra.mxu0 0.0
  %3118 = vmatprep.subr.mxu0 0.0
  %3119 = vmatpush2.msra.mxu0 0.0
  %3120 = vmatprep.subr.mxu0 0.0
  %3121 = vmatpush2.msra.mxu0 0.0
  %3122 = vmatprep.subr.mxu0 0.0
  %3123 = vmatpush2.msra.mxu0 0.0
  %3124 = vmatprep.subr.mxu0 0.0
  %3125 = vmatpush2.msra.mxu0 0.0
  %3126 = vmatprep.subr.mxu0 0.0
  %3127 = vmatpush2.msra.mxu0 0.0
  %3128 = vmatprep.subr.mxu0 0.0
  %3129 = vmatpush2.msra.mxu0 0.0
  %3130 = vmatprep.subr.mxu0 0.0
  %3131 = vmatpush2.msra.mxu0 0.0
  %3132 = vmatprep.subr.mxu0 0.0
  %3133 = vmatpush2.msra.mxu0 0.0
  %3134 = vmatprep.subr.mxu0 0.0
  %3135 = vmatpush2.msra.mxu0 0.0
  %3136 = vmatprep.mubr.f32.mxu0 0.0
  %3137 = vmatmul.mubr.f32.gmra.mxu0 %v3064
  %v3138 = vpop.f32.mrf.mxu0
  %v3139 = vadd.f32 0.0, %v3138
  %v3140 = vpop.f32.mrf.mxu0
  %3141 = vmatprep.mubr.f32.mxu0 0.0
  %3142 = vmatmul.mubr.f32.gmra.mxu0 %v3066
  %v3143 = vpop.f32.mrf.mxu0
  %v3144 = vadd.f32 0.0, %v3143
  %v3145 = vpop.f32.mrf.mxu0
  %3146 = vmatprep.mubr.f32.mxu0 0.0
  %3147 = vmatmul.mubr.f32.gmra.mxu0 %v3068
  %v3148 = vpop.f32.mrf.mxu0
  %v3149 = vadd.f32 0.0, %v3148
  %v3150 = vpop.f32.mrf.mxu0
  %3151 = vmatprep.mubr.f32.mxu0 0.0
  %3152 = vmatmul.mubr.f32.gmra.mxu0 %v3070
  %v3153 = vpop.f32.mrf.mxu0
  %v3154 = vadd.f32 0.0, %v3153
  %v3155 = vpop.f32.mrf.mxu0
  %3156 = vdwg.mxu0
  %v3157 = vadd.f32 %v3060, %v3139
  %v3158 = vadd.f32 %v3061, %v3144
  %v3159 = vadd.f32 %v3062, %v3149
  %v3160 = vadd.f32 %v3063, %v3154
  %v3161 = vxor.u32 %v3157, 2147483648
  %v3162 = vxor.u32 %v3158, 2147483648
  %v3163 = vxor.u32 %v3159, 2147483648
  %v3164 = vxor.u32 %v3160, 2147483648
  %v3165 = vmul.f32 %v3161, 1.442695
  %v3166 = vpow.pop %v3165
  %v3167 = vmul.f32 %v3162, 1.442695
  %v3168 = vpow.pop %v3167
  %v3169 = vmul.f32 %v3163, 1.442695
  %v3170 = vpow.pop %v3169
  %v3171 = vmul.f32 %v3164, 1.442695
  %v3172 = vpow.pop %v3171
  %v3173 = vadd.f32 %v3166, 1.0
  %v3174 = vadd.f32 %v3168, 1.0
  %v3175 = vadd.f32 %v3170, 1.0
  %v3176 = vadd.f32 %v3172, 1.0
  %v3177 = vrcp.pop %v3173
  %v3178 = vmul.f32 1.0, %v3177
  %v3179 = vrcp.pop %v3174
  %v3180 = vmul.f32 1.0, %v3179
  %v3181 = vrcp.pop %v3175
  %v3182 = vmul.f32 1.0, %v3181
  %v3183 = vrcp.pop %v3176
  %v3184 = vmul.f32 1.0, %v3183
  %v3185 = vtanh.pop %v3157
  %v3186 = vtanh.pop %v3158
  %v3187 = vtanh.pop %v3159
  %v3188 = vtanh.pop %v3160
  %v3189 = vmul.f32 %v3178, %v3010
  %v3190 = vmul.f32 %v3180, %v3011
  %v3191 = vmul.f32 %v3182, %v3012
  %v3192 = vmul.f32 %v3184, %v3013
  %3197 = vrot.lane.b32.xlu0 %v3185, 64
  %v3198 = vpop.permute.xlu0 %3197
  %3199 = vrot.lane.b32.xlu0 %v3186, 64
  %v3200 = vpop.permute.xlu0 %3199
  %3201 = vrot.lane.b32.xlu0 %v3187, 64
  %v3202 = vpop.permute.xlu0 %3201
  %3203 = vrot.lane.b32.xlu0 %v3188, 64
  %v3204 = vpop.permute.xlu0 %3203
  %v3209 = vmul.f32 %v3178, %v3198
  %v3210 = vmul.f32 %v3180, %v3200
  %v3211 = vmul.f32 %v3182, %v3202
  %v3212 = vmul.f32 %v3184, %v3204
  %3217 = vrot.lane.b32.xlu0 %v3209, 32
  %v3218 = vpop.permute.xlu0 %3217
  %3219 = vrot.lane.b32.xlu0 %v3210, 32
  %v3220 = vpop.permute.xlu0 %3219
  %3221 = vrot.lane.b32.xlu0 %v3211, 32
  %v3222 = vpop.permute.xlu0 %3221
  %3223 = vrot.lane.b32.xlu0 %v3212, 32
  %v3224 = vpop.permute.xlu0 %3223
  %v3229 = vadd.f32 %v3189, %v3218
  %v3230 = vadd.f32 %v3190, %v3220
  %v3231 = vadd.f32 %v3191, %v3222
  %v3232 = vadd.f32 %v3192, %v3224
  %v3233 = vtanh.pop %v3229
  %v3234 = vtanh.pop %v3230
  %v3235 = vtanh.pop %v3231
  %v3236 = vtanh.pop %v3232
  %3241 = vrot.lane.b32.xlu0 %v3233, 64
  %v3242 = vpop.permute.xlu0 %3241
  %3243 = vrot.lane.b32.xlu0 %v3234, 64
  %v3244 = vpop.permute.xlu0 %3243
  %3245 = vrot.lane.b32.xlu0 %v3235, 64
  %v3246 = vpop.permute.xlu0 %3245
  %3247 = vrot.lane.b32.xlu0 %v3236, 64
  %v3248 = vpop.permute.xlu0 %3247
  %v3253 = vmul.f32 %v3178, %v3242
  %v3254 = vmul.f32 %v3180, %v3244
  %v3255 = vmul.f32 %v3182, %v3246
  %v3256 = vmul.f32 %v3184, %v3248
  %3261 = vrot.lane.b32.xlu0 %v3253, 32
  %v3262 = vpop.permute.xlu0 %3261
  %3263 = vrot.lane.b32.xlu0 %v3254, 32
  %v3264 = vpop.permute.xlu0 %3263
  %3265 = vrot.lane.b32.xlu0 %v3255, 32
  %v3266 = vpop.permute.xlu0 %3265
  %3267 = vrot.lane.b32.xlu0 %v3256, 32
  %v3268 = vpop.permute.xlu0 %3267
  %s3273 = scalar_lea.vmem %s5, 384
  %3274 = vst.msk [vmem:[%s3273] sm:$0xff] %vm30, %v3262
  %3275 = vst.msk [vmem:[%s3273 + $0x8] sm:$0xff] %vm30, %v3264
  %3276 = vst.msk [vmem:[%s3273 + $0x10] sm:$0xff] %vm30, %v3266
  %3277 = vst.msk [vmem:[%s3273 + $0x18] sm:$0xff] %vm30, %v3268
  %s3278 = scalar_lea.vmem [#allocation2], 160
  %v3279 = vld [vmem:[%s3278] sm:$0xff]
  %v3280 = vld [vmem:[%s3278 + $0x8] sm:$0xff]
  %v3281 = vld [vmem:[%s3278 + $0x10] sm:$0xff]
  %v3282 = vld [vmem:[%s3278 + $0x18] sm:$0xff]
  %v3283 = vsel %vm30, %v3262, 0
  %v3285 = vsel %vm30, %v3264, 0
  %v3287 = vsel %vm30, %v3266, 0
  %v3289 = vsel %vm30, %v3268, 0
  %3291 = vmatprep.subr.mxu0 0.0
  %3292 = vmatpush1.msra.mxu0 0.0
  %3293 = vmatprep.subr.mxu0 0.0
  %3294 = vmatpush1.msra.mxu0 0.0
  %3295 = vmatprep.subr.mxu0 0.0
  %3296 = vmatpush1.msra.mxu0 0.0
  %3297 = vmatprep.subr.mxu0 0.0
  %3298 = vmatpush1.msra.mxu0 0.0
  %3299 = vmatprep.subr.mxu0 0.0
  %3300 = vmatpush1.msra.mxu0 0.0
  %3301 = vmatprep.subr.mxu0 0.0
  %3302 = vmatpush1.msra.mxu0 0.0
  %3303 = vmatprep.subr.mxu0 0.0
  %3304 = vmatpush1.msra.mxu0 0.0
  %3305 = vmatprep.subr.mxu0 0.0
  %3306 = vmatpush1.msra.mxu0 0.0
  %3307 = vmatprep.subr.mxu0 0.0
  %3308 = vmatpush1.msra.mxu0 0.0
  %3309 = vmatprep.subr.mxu0 0.0
  %3310 = vmatpush1.msra.mxu0 0.0
  %3311 = vmatprep.subr.mxu0 0.0
  %3312 = vmatpush1.msra.mxu0 0.0
  %3313 = vmatprep.subr.mxu0 0.0
  %3314 = vmatpush1.msra.mxu0 0.0
  %3315 = vmatprep.subr.mxu0 0.0
  %3316 = vmatpush1.msra.mxu0 %v2191
  %3317 = vmatprep.subr.mxu0 0.0
  %3318 = vmatpush1.msra.mxu0 %v2190
  %3319 = vmatprep.subr.mxu0 0.0
  %3320 = vmatpush1.msra.mxu0 %v2189
  %3321 = vmatprep.subr.mxu0 0.0
  %3322 = vmatpush1.msra.mxu0 %v2188
  %3323 = vmatprep.subr.mxu0 0.0
  %3324 = vmatpush2.msra.mxu0 0.0
  %3325 = vmatprep.subr.mxu0 0.0
  %3326 = vmatpush2.msra.mxu0 0.0
  %3327 = vmatprep.subr.mxu0 0.0
  %3328 = vmatpush2.msra.mxu0 0.0
  %3329 = vmatprep.subr.mxu0 0.0
  %3330 = vmatpush2.msra.mxu0 0.0
  %3331 = vmatprep.subr.mxu0 0.0
  %3332 = vmatpush2.msra.mxu0 0.0
  %3333 = vmatprep.subr.mxu0 0.0
  %3334 = vmatpush2.msra.mxu0 0.0
  %3335 = vmatprep.subr.mxu0 0.0
  %3336 = vmatpush2.msra.mxu0 0.0
  %3337 = vmatprep.subr.mxu0 0.0
  %3338 = vmatpush2.msra.mxu0 0.0
  %3339 = vmatprep.subr.mxu0 0.0
  %3340 = vmatpush2.msra.mxu0 0.0
  %3341 = vmatprep.subr.mxu0 0.0
  %3342 = vmatpush2.msra.mxu0 0.0
  %3343 = vmatprep.subr.mxu0 0.0
  %3344 = vmatpush2.msra.mxu0 0.0
  %3345 = vmatprep.subr.mxu0 0.0
  %3346 = vmatpush2.msra.mxu0 0.0
  %3347 = vmatprep.subr.mxu0 0.0
  %3348 = vmatpush2.msra.mxu0 0.0
  %3349 = vmatprep.subr.mxu0 0.0
  %3350 = vmatpush2.msra.mxu0 0.0
  %3351 = vmatprep.subr.mxu0 0.0
  %3352 = vmatpush2.msra.mxu0 0.0
  %3353 = vmatprep.subr.mxu0 0.0
  %3354 = vmatpush2.msra.mxu0 0.0
  %3355 = vmatprep.mubr.f32.mxu0 0.0
  %3356 = vmatmul.mubr.f32.gmra.mxu0 %v3283
  %v3357 = vpop.f32.mrf.mxu0
  %v3358 = vadd.f32 0.0, %v3357
  %v3359 = vpop.f32.mrf.mxu0
  %3360 = vmatprep.mubr.f32.mxu0 0.0
  %3361 = vmatmul.mubr.f32.gmra.mxu0 %v3285
  %v3362 = vpop.f32.mrf.mxu0
  %v3363 = vadd.f32 0.0, %v3362
  %v3364 = vpop.f32.mrf.mxu0
  %3365 = vmatprep.mubr.f32.mxu0 0.0
  %3366 = vmatmul.mubr.f32.gmra.mxu0 %v3287
  %v3367 = vpop.f32.mrf.mxu0
  %v3368 = vadd.f32 0.0, %v3367
  %v3369 = vpop.f32.mrf.mxu0
  %3370 = vmatprep.mubr.f32.mxu0 0.0
  %3371 = vmatmul.mubr.f32.gmra.mxu0 %v3289
  %v3372 = vpop.f32.mrf.mxu0
  %v3373 = vadd.f32 0.0, %v3372
  %v3374 = vpop.f32.mrf.mxu0
  %3375 = vdwg.mxu0
  %v3376 = vadd.f32 %v3279, %v3358
  %v3377 = vadd.f32 %v3280, %v3363
  %v3378 = vadd.f32 %v3281, %v3368
  %v3379 = vadd.f32 %v3282, %v3373
  %v3380 = vxor.u32 %v3376, 2147483648
  %v3381 = vxor.u32 %v3377, 2147483648
  %v3382 = vxor.u32 %v3378, 2147483648
  %v3383 = vxor.u32 %v3379, 2147483648
  %v3384 = vmul.f32 %v3380, 1.442695
  %v3385 = vpow.pop %v3384
  %v3386 = vmul.f32 %v3381, 1.442695
  %v3387 = vpow.pop %v3386
  %v3388 = vmul.f32 %v3382, 1.442695
  %v3389 = vpow.pop %v3388
  %v3390 = vmul.f32 %v3383, 1.442695
  %v3391 = vpow.pop %v3390
  %v3392 = vadd.f32 %v3385, 1.0
  %v3393 = vadd.f32 %v3387, 1.0
  %v3394 = vadd.f32 %v3389, 1.0
  %v3395 = vadd.f32 %v3391, 1.0
  %v3396 = vrcp.pop %v3392
  %v3397 = vmul.f32 1.0, %v3396
  %v3398 = vrcp.pop %v3393
  %v3399 = vmul.f32 1.0, %v3398
  %v3400 = vrcp.pop %v3394
  %v3401 = vmul.f32 1.0, %v3400
  %v3402 = vrcp.pop %v3395
  %v3403 = vmul.f32 1.0, %v3402
  %v3404 = vtanh.pop %v3376
  %v3405 = vtanh.pop %v3377
  %v3406 = vtanh.pop %v3378
  %v3407 = vtanh.pop %v3379
  %v3408 = vmul.f32 %v3397, %v3229
  %v3409 = vmul.f32 %v3399, %v3230
  %v3410 = vmul.f32 %v3401, %v3231
  %v3411 = vmul.f32 %v3403, %v3232
  %3416 = vrot.lane.b32.xlu0 %v3404, 64
  %v3417 = vpop.permute.xlu0 %3416
  %3418 = vrot.lane.b32.xlu0 %v3405, 64
  %v3419 = vpop.permute.xlu0 %3418
  %3420 = vrot.lane.b32.xlu0 %v3406, 64
  %v3421 = vpop.permute.xlu0 %3420
  %3422 = vrot.lane.b32.xlu0 %v3407, 64
  %v3423 = vpop.permute.xlu0 %3422
  %v3428 = vmul.f32 %v3397, %v3417
  %v3429 = vmul.f32 %v3399, %v3419
  %v3430 = vmul.f32 %v3401, %v3421
  %v3431 = vmul.f32 %v3403, %v3423
  %3436 = vrot.lane.b32.xlu0 %v3428, 32
  %v3437 = vpop.permute.xlu0 %3436
  %3438 = vrot.lane.b32.xlu0 %v3429, 32
  %v3439 = vpop.permute.xlu0 %3438
  %3440 = vrot.lane.b32.xlu0 %v3430, 32
  %v3441 = vpop.permute.xlu0 %3440
  %3442 = vrot.lane.b32.xlu0 %v3431, 32
  %v3443 = vpop.permute.xlu0 %3442
  %v3448 = vadd.f32 %v3408, %v3437
  %v3449 = vadd.f32 %v3409, %v3439
  %v3450 = vadd.f32 %v3410, %v3441
  %v3451 = vadd.f32 %v3411, %v3443
  %v3452 = vtanh.pop %v3448
  %v3453 = vtanh.pop %v3449
  %v3454 = vtanh.pop %v3450
  %v3455 = vtanh.pop %v3451
  %3460 = vrot.lane.b32.xlu0 %v3452, 64
  %v3461 = vpop.permute.xlu0 %3460
  %3462 = vrot.lane.b32.xlu0 %v3453, 64
  %v3463 = vpop.permute.xlu0 %3462
  %3464 = vrot.lane.b32.xlu0 %v3454, 64
  %v3465 = vpop.permute.xlu0 %3464
  %3466 = vrot.lane.b32.xlu0 %v3455, 64
  %v3467 = vpop.permute.xlu0 %3466
  %v3472 = vmul.f32 %v3397, %v3461
  %v3473 = vmul.f32 %v3399, %v3463
  %v3474 = vmul.f32 %v3401, %v3465
  %v3475 = vmul.f32 %v3403, %v3467
  %3480 = vrot.lane.b32.xlu0 %v3472, 32
  %v3481 = vpop.permute.xlu0 %3480
  %3482 = vrot.lane.b32.xlu0 %v3473, 32
  %v3483 = vpop.permute.xlu0 %3482
  %3484 = vrot.lane.b32.xlu0 %v3474, 32
  %v3485 = vpop.permute.xlu0 %3484
  %3486 = vrot.lane.b32.xlu0 %v3475, 32
  %v3487 = vpop.permute.xlu0 %3486
  %s3492 = scalar_lea.vmem %s5, 416
  %3493 = vst.msk [vmem:[%s3492] sm:$0xff] %vm30, %v3481
  %3494 = vst.msk [vmem:[%s3492 + $0x8] sm:$0xff] %vm30, %v3483
  %3495 = vst.msk [vmem:[%s3492 + $0x10] sm:$0xff] %vm30, %v3485
  %3496 = vst.msk [vmem:[%s3492 + $0x18] sm:$0xff] %vm30, %v3487
  %s3497 = scalar_lea.vmem [#allocation2], 192
  %v3498 = vld [vmem:[%s3497] sm:$0xff]
  %v3499 = vld [vmem:[%s3497 + $0x8] sm:$0xff]
  %v3500 = vld [vmem:[%s3497 + $0x10] sm:$0xff]
  %v3501 = vld [vmem:[%s3497 + $0x18] sm:$0xff]
  %v3502 = vsel %vm30, %v3481, 0
  %v3504 = vsel %vm30, %v3483, 0
  %v3506 = vsel %vm30, %v3485, 0
  %v3508 = vsel %vm30, %v3487, 0
  %3510 = vmatprep.subr.mxu0 0.0
  %3511 = vmatpush1.msra.mxu0 0.0
  %3512 = vmatprep.subr.mxu0 0.0
  %3513 = vmatpush1.msra.mxu0 0.0
  %3514 = vmatprep.subr.mxu0 0.0
  %3515 = vmatpush1.msra.mxu0 0.0
  %3516 = vmatprep.subr.mxu0 0.0
  %3517 = vmatpush1.msra.mxu0 0.0
  %3518 = vmatprep.subr.mxu0 0.0
  %3519 = vmatpush1.msra.mxu0 0.0
  %3520 = vmatprep.subr.mxu0 0.0
  %3521 = vmatpush1.msra.mxu0 0.0
  %3522 = vmatprep.subr.mxu0 0.0
  %3523 = vmatpush1.msra.mxu0 0.0
  %3524 = vmatprep.subr.mxu0 0.0
  %3525 = vmatpush1.msra.mxu0 0.0
  %3526 = vmatprep.subr.mxu0 0.0
  %3527 = vmatpush1.msra.mxu0 0.0
  %3528 = vmatprep.subr.mxu0 0.0
  %3529 = vmatpush1.msra.mxu0 0.0
  %3530 = vmatprep.subr.mxu0 0.0
  %3531 = vmatpush1.msra.mxu0 0.0
  %3532 = vmatprep.subr.mxu0 0.0
  %3533 = vmatpush1.msra.mxu0 0.0
  %3534 = vmatprep.subr.mxu0 0.0
  %3535 = vmatpush1.msra.mxu0 %v2191
  %3536 = vmatprep.subr.mxu0 0.0
  %3537 = vmatpush1.msra.mxu0 %v2190
  %3538 = vmatprep.subr.mxu0 0.0
  %3539 = vmatpush1.msra.mxu0 %v2189
  %3540 = vmatprep.subr.mxu0 0.0
  %3541 = vmatpush1.msra.mxu0 %v2188
  %3542 = vmatprep.subr.mxu0 0.0
  %3543 = vmatpush2.msra.mxu0 0.0
  %3544 = vmatprep.subr.mxu0 0.0
  %3545 = vmatpush2.msra.mxu0 0.0
  %3546 = vmatprep.subr.mxu0 0.0
  %3547 = vmatpush2.msra.mxu0 0.0
  %3548 = vmatprep.subr.mxu0 0.0
  %3549 = vmatpush2.msra.mxu0 0.0
  %3550 = vmatprep.subr.mxu0 0.0
  %3551 = vmatpush2.msra.mxu0 0.0
  %3552 = vmatprep.subr.mxu0 0.0
  %3553 = vmatpush2.msra.mxu0 0.0
  %3554 = vmatprep.subr.mxu0 0.0
  %3555 = vmatpush2.msra.mxu0 0.0
  %3556 = vmatprep.subr.mxu0 0.0
  %3557 = vmatpush2.msra.mxu0 0.0
  %3558 = vmatprep.subr.mxu0 0.0
  %3559 = vmatpush2.msra.mxu0 0.0
  %3560 = vmatprep.subr.mxu0 0.0
  %3561 = vmatpush2.msra.mxu0 0.0
  %3562 = vmatprep.subr.mxu0 0.0
  %3563 = vmatpush2.msra.mxu0 0.0
  %3564 = vmatprep.subr.mxu0 0.0
  %3565 = vmatpush2.msra.mxu0 0.0
  %3566 = vmatprep.subr.mxu0 0.0
  %3567 = vmatpush2.msra.mxu0 0.0
  %3568 = vmatprep.subr.mxu0 0.0
  %3569 = vmatpush2.msra.mxu0 0.0
  %3570 = vmatprep.subr.mxu0 0.0
  %3571 = vmatpush2.msra.mxu0 0.0
  %3572 = vmatprep.subr.mxu0 0.0
  %3573 = vmatpush2.msra.mxu0 0.0
  %3574 = vmatprep.mubr.f32.mxu0 0.0
  %3575 = vmatmul.mubr.f32.gmra.mxu0 %v3502
  %v3576 = vpop.f32.mrf.mxu0
  %v3577 = vadd.f32 0.0, %v3576
  %v3578 = vpop.f32.mrf.mxu0
  %3579 = vmatprep.mubr.f32.mxu0 0.0
  %3580 = vmatmul.mubr.f32.gmra.mxu0 %v3504
  %v3581 = vpop.f32.mrf.mxu0
  %v3582 = vadd.f32 0.0, %v3581
  %v3583 = vpop.f32.mrf.mxu0
  %3584 = vmatprep.mubr.f32.mxu0 0.0
  %3585 = vmatmul.mubr.f32.gmra.mxu0 %v3506
  %v3586 = vpop.f32.mrf.mxu0
  %v3587 = vadd.f32 0.0, %v3586
  %v3588 = vpop.f32.mrf.mxu0
  %3589 = vmatprep.mubr.f32.mxu0 0.0
  %3590 = vmatmul.mubr.f32.gmra.mxu0 %v3508
  %v3591 = vpop.f32.mrf.mxu0
  %v3592 = vadd.f32 0.0, %v3591
  %v3593 = vpop.f32.mrf.mxu0
  %3594 = vdwg.mxu0
  %v3595 = vadd.f32 %v3498, %v3577
  %v3596 = vadd.f32 %v3499, %v3582
  %v3597 = vadd.f32 %v3500, %v3587
  %v3598 = vadd.f32 %v3501, %v3592
  %v3599 = vxor.u32 %v3595, 2147483648
  %v3600 = vxor.u32 %v3596, 2147483648
  %v3601 = vxor.u32 %v3597, 2147483648
  %v3602 = vxor.u32 %v3598, 2147483648
  %v3603 = vmul.f32 %v3599, 1.442695
  %v3604 = vpow.pop %v3603
  %v3605 = vmul.f32 %v3600, 1.442695
  %v3606 = vpow.pop %v3605
  %v3607 = vmul.f32 %v3601, 1.442695
  %v3608 = vpow.pop %v3607
  %v3609 = vmul.f32 %v3602, 1.442695
  %v3610 = vpow.pop %v3609
  %v3611 = vadd.f32 %v3604, 1.0
  %v3612 = vadd.f32 %v3606, 1.0
  %v3613 = vadd.f32 %v3608, 1.0
  %v3614 = vadd.f32 %v3610, 1.0
  %v3615 = vrcp.pop %v3611
  %v3616 = vmul.f32 1.0, %v3615
  %v3617 = vrcp.pop %v3612
  %v3618 = vmul.f32 1.0, %v3617
  %v3619 = vrcp.pop %v3613
  %v3620 = vmul.f32 1.0, %v3619
  %v3621 = vrcp.pop %v3614
  %v3622 = vmul.f32 1.0, %v3621
  %v3623 = vtanh.pop %v3595
  %v3624 = vtanh.pop %v3596
  %v3625 = vtanh.pop %v3597
  %v3626 = vtanh.pop %v3598
  %v3627 = vmul.f32 %v3616, %v3448
  %v3628 = vmul.f32 %v3618, %v3449
  %v3629 = vmul.f32 %v3620, %v3450
  %v3630 = vmul.f32 %v3622, %v3451
  %3635 = vrot.lane.b32.xlu0 %v3623, 64
  %v3636 = vpop.permute.xlu0 %3635
  %3637 = vrot.lane.b32.xlu0 %v3624, 64
  %v3638 = vpop.permute.xlu0 %3637
  %3639 = vrot.lane.b32.xlu0 %v3625, 64
  %v3640 = vpop.permute.xlu0 %3639
  %3641 = vrot.lane.b32.xlu0 %v3626, 64
  %v3642 = vpop.permute.xlu0 %3641
  %v3647 = vmul.f32 %v3616, %v3636
  %v3648 = vmul.f32 %v3618, %v3638
  %v3649 = vmul.f32 %v3620, %v3640
  %v3650 = vmul.f32 %v3622, %v3642
  %3655 = vrot.lane.b32.xlu0 %v3647, 32
  %v3656 = vpop.permute.xlu0 %3655
  %3657 = vrot.lane.b32.xlu0 %v3648, 32
  %v3658 = vpop.permute.xlu0 %3657
  %3659 = vrot.lane.b32.xlu0 %v3649, 32
  %v3660 = vpop.permute.xlu0 %3659
  %3661 = vrot.lane.b32.xlu0 %v3650, 32
  %v3662 = vpop.permute.xlu0 %3661
  %v3667 = vadd.f32 %v3627, %v3656
  %v3668 = vadd.f32 %v3628, %v3658
  %v3669 = vadd.f32 %v3629, %v3660
  %v3670 = vadd.f32 %v3630, %v3662
  %v3671 = vtanh.pop %v3667
  %v3672 = vtanh.pop %v3668
  %v3673 = vtanh.pop %v3669
  %v3674 = vtanh.pop %v3670
  %3679 = vrot.lane.b32.xlu0 %v3671, 64
  %v3680 = vpop.permute.xlu0 %3679
  %3681 = vrot.lane.b32.xlu0 %v3672, 64
  %v3682 = vpop.permute.xlu0 %3681
  %3683 = vrot.lane.b32.xlu0 %v3673, 64
  %v3684 = vpop.permute.xlu0 %3683
  %3685 = vrot.lane.b32.xlu0 %v3674, 64
  %v3686 = vpop.permute.xlu0 %3685
  %v3691 = vmul.f32 %v3616, %v3680
  %v3692 = vmul.f32 %v3618, %v3682
  %v3693 = vmul.f32 %v3620, %v3684
  %v3694 = vmul.f32 %v3622, %v3686
  %3699 = vrot.lane.b32.xlu0 %v3691, 32
  %v3700 = vpop.permute.xlu0 %3699
  %3701 = vrot.lane.b32.xlu0 %v3692, 32
  %v3702 = vpop.permute.xlu0 %3701
  %3703 = vrot.lane.b32.xlu0 %v3693, 32
  %v3704 = vpop.permute.xlu0 %3703
  %3705 = vrot.lane.b32.xlu0 %v3694, 32
  %v3706 = vpop.permute.xlu0 %3705
  %s3711 = scalar_lea.vmem %s5, 448
  %3712 = vst.msk [vmem:[%s3711] sm:$0xff] %vm30, %v3700
  %3713 = vst.msk [vmem:[%s3711 + $0x8] sm:$0xff] %vm30, %v3702
  %3714 = vst.msk [vmem:[%s3711 + $0x10] sm:$0xff] %vm30, %v3704
  %3715 = vst.msk [vmem:[%s3711 + $0x18] sm:$0xff] %vm30, %v3706
  %s3716 = scalar_lea.vmem [#allocation2], 224
  %v3717 = vld [vmem:[%s3716] sm:$0xff]
  %v3718 = vld [vmem:[%s3716 + $0x8] sm:$0xff]
  %v3719 = vld [vmem:[%s3716 + $0x10] sm:$0xff]
  %v3720 = vld [vmem:[%s3716 + $0x18] sm:$0xff]
  %v3721 = vsel %vm30, %v3700, 0
  %v3723 = vsel %vm30, %v3702, 0
  %v3725 = vsel %vm30, %v3704, 0
  %v3727 = vsel %vm30, %v3706, 0
  %3729 = vmatprep.subr.mxu0 0.0
  %3730 = vmatpush1.msra.mxu0 0.0
  %3731 = vmatprep.subr.mxu0 0.0
  %3732 = vmatpush1.msra.mxu0 0.0
  %3733 = vmatprep.subr.mxu0 0.0
  %3734 = vmatpush1.msra.mxu0 0.0
  %3735 = vmatprep.subr.mxu0 0.0
  %3736 = vmatpush1.msra.mxu0 0.0
  %3737 = vmatprep.subr.mxu0 0.0
  %3738 = vmatpush1.msra.mxu0 0.0
  %3739 = vmatprep.subr.mxu0 0.0
  %3740 = vmatpush1.msra.mxu0 0.0
  %3741 = vmatprep.subr.mxu0 0.0
  %3742 = vmatpush1.msra.mxu0 0.0
  %3743 = vmatprep.subr.mxu0 0.0
  %3744 = vmatpush1.msra.mxu0 0.0
  %3745 = vmatprep.subr.mxu0 0.0
  %3746 = vmatpush1.msra.mxu0 0.0
  %3747 = vmatprep.subr.mxu0 0.0
  %3748 = vmatpush1.msra.mxu0 0.0
  %3749 = vmatprep.subr.mxu0 0.0
  %3750 = vmatpush1.msra.mxu0 0.0
  %3751 = vmatprep.subr.mxu0 0.0
  %3752 = vmatpush1.msra.mxu0 0.0
  %3753 = vmatprep.subr.mxu0 0.0
  %3754 = vmatpush1.msra.mxu0 %v2191
  %3755 = vmatprep.subr.mxu0 0.0
  %3756 = vmatpush1.msra.mxu0 %v2190
  %3757 = vmatprep.subr.mxu0 0.0
  %3758 = vmatpush1.msra.mxu0 %v2189
  %3759 = vmatprep.subr.mxu0 0.0
  %3760 = vmatpush1.msra.mxu0 %v2188
  %3761 = vmatprep.subr.mxu0 0.0
  %3762 = vmatpush2.msra.mxu0 0.0
  %3763 = vmatprep.subr.mxu0 0.0
  %3764 = vmatpush2.msra.mxu0 0.0
  %3765 = vmatprep.subr.mxu0 0.0
  %3766 = vmatpush2.msra.mxu0 0.0
  %3767 = vmatprep.subr.mxu0 0.0
  %3768 = vmatpush2.msra.mxu0 0.0
  %3769 = vmatprep.subr.mxu0 0.0
  %3770 = vmatpush2.msra.mxu0 0.0
  %3771 = vmatprep.subr.mxu0 0.0
  %3772 = vmatpush2.msra.mxu0 0.0
  %3773 = vmatprep.subr.mxu0 0.0
  %3774 = vmatpush2.msra.mxu0 0.0
  %3775 = vmatprep.subr.mxu0 0.0
  %3776 = vmatpush2.msra.mxu0 0.0
  %3777 = vmatprep.subr.mxu0 0.0
  %3778 = vmatpush2.msra.mxu0 0.0
  %3779 = vmatprep.subr.mxu0 0.0
  %3780 = vmatpush2.msra.mxu0 0.0
  %3781 = vmatprep.subr.mxu0 0.0
  %3782 = vmatpush2.msra.mxu0 0.0
  %3783 = vmatprep.subr.mxu0 0.0
  %3784 = vmatpush2.msra.mxu0 0.0
  %3785 = vmatprep.subr.mxu0 0.0
  %3786 = vmatpush2.msra.mxu0 0.0
  %3787 = vmatprep.subr.mxu0 0.0
  %3788 = vmatpush2.msra.mxu0 0.0
  %3789 = vmatprep.subr.mxu0 0.0
  %3790 = vmatpush2.msra.mxu0 0.0
  %3791 = vmatprep.subr.mxu0 0.0
  %3792 = vmatpush2.msra.mxu0 0.0
  %3793 = vmatprep.mubr.f32.mxu0 0.0
  %3794 = vmatmul.mubr.f32.gmra.mxu0 %v3721
  %v3795 = vpop.f32.mrf.mxu0
  %v3796 = vadd.f32 0.0, %v3795
  %v3797 = vpop.f32.mrf.mxu0
  %3798 = vmatprep.mubr.f32.mxu0 0.0
  %3799 = vmatmul.mubr.f32.gmra.mxu0 %v3723
  %v3800 = vpop.f32.mrf.mxu0
  %v3801 = vadd.f32 0.0, %v3800
  %v3802 = vpop.f32.mrf.mxu0
  %3803 = vmatprep.mubr.f32.mxu0 0.0
  %3804 = vmatmul.mubr.f32.gmra.mxu0 %v3725
  %v3805 = vpop.f32.mrf.mxu0
  %v3806 = vadd.f32 0.0, %v3805
  %v3807 = vpop.f32.mrf.mxu0
  %3808 = vmatprep.mubr.f32.mxu0 0.0
  %3809 = vmatmul.mubr.f32.gmra.mxu0 %v3727
  %v3810 = vpop.f32.mrf.mxu0
  %v3811 = vadd.f32 0.0, %v3810
  %v3812 = vpop.f32.mrf.mxu0
  %3813 = vdwg.mxu0
  %v3814 = vadd.f32 %v3717, %v3796
  %v3815 = vadd.f32 %v3718, %v3801
  %v3816 = vadd.f32 %v3719, %v3806
  %v3817 = vadd.f32 %v3720, %v3811
  %v3818 = vxor.u32 %v3814, 2147483648
  %v3819 = vxor.u32 %v3815, 2147483648
  %v3820 = vxor.u32 %v3816, 2147483648
  %v3821 = vxor.u32 %v3817, 2147483648
  %v3822 = vmul.f32 %v3818, 1.442695
  %v3823 = vpow.pop %v3822
  %v3824 = vmul.f32 %v3819, 1.442695
  %v3825 = vpow.pop %v3824
  %v3826 = vmul.f32 %v3820, 1.442695
  %v3827 = vpow.pop %v3826
  %v3828 = vmul.f32 %v3821, 1.442695
  %v3829 = vpow.pop %v3828
  %v3830 = vadd.f32 %v3823, 1.0
  %v3831 = vadd.f32 %v3825, 1.0
  %v3832 = vadd.f32 %v3827, 1.0
  %v3833 = vadd.f32 %v3829, 1.0
  %v3834 = vrcp.pop %v3830
  %v3835 = vmul.f32 1.0, %v3834
  %v3836 = vrcp.pop %v3831
  %v3837 = vmul.f32 1.0, %v3836
  %v3838 = vrcp.pop %v3832
  %v3839 = vmul.f32 1.0, %v3838
  %v3840 = vrcp.pop %v3833
  %v3841 = vmul.f32 1.0, %v3840
  %v3842 = vtanh.pop %v3814
  %v3843 = vtanh.pop %v3815
  %v3844 = vtanh.pop %v3816
  %v3845 = vtanh.pop %v3817
  %v3846 = vmul.f32 %v3835, %v3667
  %v3847 = vmul.f32 %v3837, %v3668
  %v3848 = vmul.f32 %v3839, %v3669
  %v3849 = vmul.f32 %v3841, %v3670
  %3854 = vrot.lane.b32.xlu0 %v3842, 64
  %v3855 = vpop.permute.xlu0 %3854
  %3856 = vrot.lane.b32.xlu0 %v3843, 64
  %v3857 = vpop.permute.xlu0 %3856
  %3858 = vrot.lane.b32.xlu0 %v3844, 64
  %v3859 = vpop.permute.xlu0 %3858
  %3860 = vrot.lane.b32.xlu0 %v3845, 64
  %v3861 = vpop.permute.xlu0 %3860
  %v3866 = vmul.f32 %v3835, %v3855
  %v3867 = vmul.f32 %v3837, %v3857
  %v3868 = vmul.f32 %v3839, %v3859
  %v3869 = vmul.f32 %v3841, %v3861
  %3874 = vrot.lane.b32.xlu0 %v3866, 32
  %v3875 = vpop.permute.xlu0 %3874
  %3876 = vrot.lane.b32.xlu0 %v3867, 32
  %v3877 = vpop.permute.xlu0 %3876
  %3878 = vrot.lane.b32.xlu0 %v3868, 32
  %v3879 = vpop.permute.xlu0 %3878
  %3880 = vrot.lane.b32.xlu0 %v3869, 32
  %v3881 = vpop.permute.xlu0 %3880
  %v3886 = vadd.f32 %v3846, %v3875
  %v3887 = vadd.f32 %v3847, %v3877
  %v3888 = vadd.f32 %v3848, %v3879
  %v3889 = vadd.f32 %v3849, %v3881
  %v3890 = vtanh.pop %v3886
  %v3891 = vtanh.pop %v3887
  %v3892 = vtanh.pop %v3888
  %v3893 = vtanh.pop %v3889
  %3898 = vrot.lane.b32.xlu0 %v3890, 64
  %v3899 = vpop.permute.xlu0 %3898
  %3900 = vrot.lane.b32.xlu0 %v3891, 64
  %v3901 = vpop.permute.xlu0 %3900
  %3902 = vrot.lane.b32.xlu0 %v3892, 64
  %v3903 = vpop.permute.xlu0 %3902
  %3904 = vrot.lane.b32.xlu0 %v3893, 64
  %v3905 = vpop.permute.xlu0 %3904
  %v3910 = vmul.f32 %v3835, %v3899
  %v3911 = vmul.f32 %v3837, %v3901
  %v3912 = vmul.f32 %v3839, %v3903
  %v3913 = vmul.f32 %v3841, %v3905
  %3918 = vrot.lane.b32.xlu0 %v3910, 32
  %v3919 = vpop.permute.xlu0 %3918
  %3920 = vrot.lane.b32.xlu0 %v3911, 32
  %v3921 = vpop.permute.xlu0 %3920
  %3922 = vrot.lane.b32.xlu0 %v3912, 32
  %v3923 = vpop.permute.xlu0 %3922
  %3924 = vrot.lane.b32.xlu0 %v3913, 32
  %v3925 = vpop.permute.xlu0 %3924
  %s3930 = scalar_lea.vmem %s5, 480
  %3931 = vst.msk [vmem:[%s3930] sm:$0xff] %vm30, %v3919
  %3932 = vst.msk [vmem:[%s3930 + $0x8] sm:$0xff] %vm30, %v3921
  %3933 = vst.msk [vmem:[%s3930 + $0x10] sm:$0xff] %vm30, %v3923
  %3934 = vst.msk [vmem:[%s3930 + $0x18] sm:$0xff] %vm30, %v3925
  %3939 = vrot.lane.b32.xlu0 %v3886, 96
  %v3940 = vpop.permute.xlu0 %3939
  %3941 = vrot.lane.b32.xlu0 %v3887, 96
  %v3942 = vpop.permute.xlu0 %3941
  %3943 = vrot.lane.b32.xlu0 %v3888, 96
  %v3944 = vpop.permute.xlu0 %3943
  %3945 = vrot.lane.b32.xlu0 %v3889, 96
  %v3946 = vpop.permute.xlu0 %3945
  %s3951 = scalar_lea.vmem %s6, 32
  %3952 = vst.msk [vmem:[%s3951] sm:$0xff] %vm30, %v3940
  %3953 = vst.msk [vmem:[%s3951 + $0x8] sm:$0xff] %vm30, %v3942
  %3954 = vst.msk [vmem:[%s3951 + $0x10] sm:$0xff] %vm30, %v3944
  %3955 = vst.msk [vmem:[%s3951 + $0x18] sm:$0xff] %vm30, %v3946
  // Predicated region
  $region22: #{_lambda_.1} parent=0 // pred_check
    _
  $region23: #{_lambda_.1} parent=0 // pred_check_branch
    %3957 = sbr.rel (0) target = $region25
  $region24: #{_lambda_.1} parent=0 // pred_region
    _
  $region25: #{_lambda_.1} parent=0 // pred_fallthru
    _
  // Predicated region
  $region26: #{_lambda_.1} parent=0 // pred_check
    _
  $region27: #{_lambda_.1} parent=0 // pred_check_branch
    %3959 = sbr.rel (0) target = $region29
  $region28: #{_lambda_.1} parent=0 // pred_region
    _
  $region29: #{_lambda_.1} parent=0 // pred_fallthru
    _
  // Predicated region
  $region30: #{_lambda_.1} parent=0 // pred_check
    _
  $region31: #{_lambda_.1} parent=0 // pred_check_branch
    %3961 = sbr.rel (0) target = $region33
  $region32: #{_lambda_.1} parent=0 // pred_region
    _
  $region33: #{_lambda_.1} parent=0 // pred_fallthru
    _
  // Predicated region
  $region34: #{_lambda_.1} parent=0 // pred_check
    _
  $region35: #{_lambda_.1} parent=0 // pred_check_branch
    %3963 = sbr.rel (0) target = $region37
  $region36: #{_lambda_.1} parent=0 // pred_region
    _
  $region37: #{_lambda_.1} parent=0 // pred_fallthru
    _

</llo_original>
